<compile_context>
chip_gen: v5e
topology: v5e:2x2
jax: 0.10.0
libtpu: 0.0.40
codegen_flags: <defaults>
</compile_context>

<pallas_src>
import functools

import numpy as np
import jax
import jax.numpy as jnp
from jax.experimental import pallas as pl
from jax.experimental.pallas import tpu as pltpu


def _gelu(x):
    # TODO(synk): PyTorch nn.GELU defaults to the exact erf form; we use the
    # tanh approximation, which lowers cleanly on the TPU EUP.
    return jax.nn.gelu(x, approximate=True)


def _conv_taps(k):
    r = k // 2
    return [(di, dj) for di in range(-r, r + 1) for dj in range(-r, r + 1)]


def _tap_masks(H, W, k):
    """(k*k, H*W) f32 validity masks for a zero-padded k x k depthwise conv."""
    hh, ww = np.meshgrid(np.arange(H), np.arange(W), indexing="ij")
    hh, ww = hh.reshape(-1), ww.reshape(-1)
    m = np.zeros((k * k, H * W), np.float32)
    for t, (di, dj) in enumerate(_conv_taps(k)):
        ok = (hh + di >= 0) & (hh + di < H) & (ww + dj >= 0) & (ww + dj < W)
        m[t] = ok.astype(np.float32)
    return m


def _adaptive_pool_matrix(n, out):
    P = np.zeros((out, n), np.float32)
    for i in range(out):
        s = (i * n) // out
        e = -((-(i + 1) * n) // out)
        P[i, s:e] = 1.0 / (e - s)
    return P


# ---------------------------------------------------------------------------
# Fused Luky kernel: one grid step == one batch image, everything in VMEM.
# ---------------------------------------------------------------------------
def _luky_kernel(x_ref, fc1_ref, fc2_ref, dw_ref, chan_ref, mask7_ref,
                 pool_ref, pw1_ref, pbn_ref, pw2_ref, pb2_ref, dc_ref,
                 mask3_ref, sew1_ref, sew2_ref, o_ref, *, H, W, C):
    HW = H * W
    f32, bf16 = jnp.float32, jnp.bfloat16

    def masked_dwconv(src, w_cols, mask_ref, K):
        # Depthwise KxK conv with zero padding K//2, in (C, H*W) layout.
        # Spatial shifts = lane rotations (XLU slot); out-of-image taps are
        # zeroed by the precomputed (K*K, H*W) border masks.  Only the first
        # K*K columns of w_cols are read.
        # TODO(synk): for production C (C//4 >= 128 lanes per group) loop the
        # 7x7 taps per channel group (1+9+25+49 taps) instead of K*K over all C.
        c = (K * K) // 2
        out = w_cols[:, c:c + 1] * src                          # centre tap
        for t, (di, dj) in enumerate(_conv_taps(K)):
            if di == 0 and dj == 0:
                continue
            rolled = pltpu.roll(src, shift=(-(di * W + dj)) % HW, axis=1)
            out = out + w_cols[:, t:t + 1] * (mask_ref[t:t + 1, :] * rolled)
        return out

    x = x_ref[...]                                              # (C, HW) f32

    # ---- Mlp_1.fc1: 1x1 conv (bf16 MXU, f32 acc) + GELU + BN ----
    h = jnp.dot(fc1_ref[...], x.astype(bf16), preferred_element_type=f32)
    h = _gelu(h) * chan_ref[:, 0:1] + chan_ref[:, 1:2]

    # ---- MultiScaleDWConv (kernels 1/3/5/7 merged into one per-channel 7x7
    #      weight) + conv bias + residual with fc1 output + GELU + BN ----
    d = masked_dwconv(h, dw_ref[...], mask7_ref, 7)
    d = d + chan_ref[:, 2:3] + h
    d = _gelu(d) * chan_ref[:, 3:4] + chan_ref[:, 4:5]

    # ---- Mlp_1.fc2: 1x1 conv + BN ----
    mlp = jnp.dot(fc2_ref[...], d.astype(bf16), preferred_element_type=f32)
    mlp = mlp * chan_ref[:, 5:6] + chan_ref[:, 6:7]

    # ---- DynamicConv2d coefficients: adaptive 3x3 pool + global mean fused
    #      into one (HW,10) pooling matmul, shared 1x1 proj (BN+GELU), softmax
    #      over the 2 groups, blend with the static per-group weights/bias ----
    pooled = jnp.dot(mlp.astype(bf16), pool_ref[...],
                     preferred_element_type=f32)                # (C, 10)
    y = jnp.dot(pw1_ref[...], pooled.astype(bf16),
                preferred_element_type=f32)                     # (Cm, 10)
    y = _gelu(y * pbn_ref[:, 0:1] + pbn_ref[:, 1:2])
    z = jnp.dot(pw2_ref[...], y.astype(bf16),
                preferred_element_type=f32) + pb2_ref[...]      # (2C, 10)
    z0, z1 = z[:C, :], z[C:, :]                                 # group-major
    zm = jnp.maximum(z0, z1)
    e0, e1 = jnp.exp(z0 - zm), jnp.exp(z1 - zm)
    inv = pl.reciprocal(e0 + e1, approx=True)
    dc = dc_ref[...]                                            # (2C, 10)
    dyn = (e0 * dc[:C, :] + e1 * dc[C:, :]) * inv               # (C, 9 taps + bias)

    # ---- dynamic per-(batch, channel) 3x3 depthwise conv + dynamic bias ----
    a = masked_dwconv(mlp, dyn, mask3_ref, 3) + dyn[:, 9:10]

    # ---- SEAttention (VPU multiply + reductions; bottleneck too small for
    #      the MXU to help) ----
    avg = jnp.sum(a, axis=1, keepdims=True) * (1.0 / HW)        # (C, 1)
    y1 = jnp.maximum(jnp.sum(sew1_ref[...] * avg, axis=0, keepdims=True), 0.0)
    gate = jax.nn.sigmoid(jnp.sum(sew2_ref[...] * y1, axis=1, keepdims=True))

    # ---- Luky tail: x3 = x1 + sigmoid(se(IDconv(mlp(x)))) ----
    o_ref[...] = x + jax.nn.sigmoid(a * gate)                   # lane-dense store


# ---------------------------------------------------------------------------
# Wrapper
# ---------------------------------------------------------------------------
def luky_forward(x_nchw, p):
    B, C, H, W = x_nchw.shape
    HW = H * W
    x = x_nchw.reshape(B, C, HW)        # NCHW stays NCHW; reshape is free

    # Trace-time constants (H, W are static under jit).
    PH, PW = _adaptive_pool_matrix(H, 3), _adaptive_pool_matrix(W, 3)
    pool9 = np.einsum("ih,jw->ijhw", PH, PW).reshape(9, HW).T       # (HW, 9)
    pool10 = np.concatenate(
        [pool9, np.full((HW, 1), 1.0 / HW, np.float32)], axis=1)   # + global mean
    pool10 = jnp.asarray(pool10, jnp.bfloat16)
    mask7 = jnp.asarray(_tap_masks(H, W, 7))
    mask3 = jnp.asarray(_tap_masks(H, W, 3))

    operands = (x, p['fc1_w'], p['fc2_w'], p['dw_w'], p['chan'], mask7,
                pool10, p['p_w1'], p['p_bn'], p['p_w2'], p['p_b2'],
                p['dc_all'], mask3, p['se_w1t'], p['se_w2'])

    def rep(arr):   # small weight slab, resident (same block) every grid step
        nd = arr.ndim
        return pl.BlockSpec(arr.shape, lambda b: (0,) * nd)

    in_specs = [pl.BlockSpec((None, C, HW), lambda b: (b, 0, 0))]
    in_specs += [rep(a) for a in operands[1:]]
    out_spec = pl.BlockSpec((None, C, HW), lambda b: (b, 0, 0))

    # Explicit scoped-VMEM budget derived from the chosen blocks: double-
    # buffered in/out blocks + headroom for in-kernel temporaries.
    # TODO(synk): for production H*W, tile each batch image into row strips
    # with (K-1)-row halos so the working set stays well under v7x's 64 MiB.
    blk_bytes = sum(int(np.prod(a.shape[-2:])) * a.dtype.itemsize
                    for a in operands) + C * HW * 4
    vmem_limit = int(2 * blk_bytes + (8 << 20))

    out = pl.pallas_call(
        functools.partial(_luky_kernel, H=H, W=W, C=C),
        out_shape=jax.ShapeDtypeStruct((B, C, HW), jnp.float32),
        grid_spec=pltpu.PrefetchScalarGridSpec(
            num_scalar_prefetch=0,
            grid=(B,),
            in_specs=in_specs,
            out_specs=out_spec,
        ),
        compiler_params=pltpu.CompilerParams(
            dimension_semantics=("parallel",),
            vmem_limit_bytes=vmem_limit,
        ),
    )(*operands)

    return out.reshape(B, C, H, W)


# ---------------------------------------------------------------------------
# Deterministic parameter initialization (synthetic — no checkpoint load),
# pre-packed in the layouts the fused kernel expects.
# ---------------------------------------------------------------------------
def init_params(key, C):
    G, R = 2, 4                      # DynamicConv2d num_groups / reduction
    Cm = max(C // R, 1)
    Cse = max(C // 8, 1)             # SEAttention reduction=8
    eps = 1e-5
    keys = iter(jax.random.split(key, 32))

    def nrm(shape, std=0.05):
        return std * jax.random.normal(next(keys), shape, jnp.float32)

    def bn_affine(n):                # eval-mode BN: running stats (0, 1)
        gamma = 1.0 + 0.1 * jax.random.normal(next(keys), (n,), jnp.float32)
        beta = 0.1 * jax.random.normal(next(keys), (n,), jnp.float32)
        return gamma / jnp.sqrt(1.0 + eps), beta

    p = {}
    # Mlp_1.fc1 / fc2: Conv2d(C,C,1,bias=False) weights, bf16 for the MXU.
    p['fc1_w'] = nrm((C, C)).astype(jnp.bfloat16)
    bn1_s, bn1_b = bn_affine(C)

    # MultiScaleDWConv: per-group kernels (1,3,5,7), channel split, bias=True.
    # Merged into one zero-padded 7x7 depthwise weight, stored as (C, 49).
    scales = (1, 3, 5, 7)
    ns = len(scales)
    chans = [C - (C // ns) * (ns - 1)] + [C // ns] * (ns - 1)
    dw = np.zeros((7, 7, C), np.float32)
    off = 0
    for k, ch in zip(scales, chans):
        lo = (7 - k) // 2
        dw[lo:lo + k, lo:lo + k, off:off + ch] = np.asarray(
            nrm((k, k, ch), std=0.1))
        off += ch
    p['dw_w'] = jnp.asarray(dw.transpose(2, 0, 1).reshape(C, 49))
    dw_b = nrm((C,), std=0.02)
    bn2_s, bn2_b = bn_affine(C)

    p['fc2_w'] = nrm((C, C)).astype(jnp.bfloat16)
    bn3_s, bn3_b = bn_affine(C)

    # All per-channel affine vectors packed into one (C, 8) slab:
    # [bn1_s, bn1_b, dw_b, bn2_s, bn2_b, bn3_s, bn3_b, 0]
    p['chan'] = jnp.stack([bn1_s, bn1_b, dw_b, bn2_s, bn2_b, bn3_s, bn3_b,
                           jnp.zeros((C,), jnp.float32)], axis=1)

    # DynamicConv2d (dim=C, K=3, num_groups=2, bias=True): static per-group
    # 3x3 weights + bias packed group-major as (G*C, 9+1).
    dc_w = nrm((G, C, 3, 3), std=0.02)
    dc_b = nrm((G, C), std=0.02)
    p['dc_all'] = jnp.concatenate(
        [dc_w.reshape(G * C, 9), dc_b.reshape(G * C, 1)], axis=1)
    # proj = ConvModule(C -> C/R, 1x1, BN, GELU) + Conv2d(C/R -> G*C, 1x1, bias)
    p['p_w1'] = nrm((Cm, C)).astype(jnp.bfloat16)
    pbn_s, pbn_b = bn_affine(Cm)
    p['p_bn'] = jnp.stack([pbn_s, pbn_b], axis=1)
    p['p_w2'] = nrm((G * C, Cm)).astype(jnp.bfloat16)
    p['p_b2'] = nrm((G * C, 1), std=0.02)

    # SEAttention(reduction=8): Linear weights (bias=False), f32 (VPU path);
    # fc1 weight stored transposed as (C, Cse), fc2 weight is (C, Cse).
    p['se_w1t'] = nrm((C, Cse))
    p['se_w2'] = nrm((C, Cse))
    return p


if __name__ == "__main__":
    key = jax.random.PRNGKey(0)
    kx, kp = jax.random.split(key)
    B, C, H, W = 2, 16, 16, 16
    x = jax.random.normal(kx, (B, C, H, W), jnp.float32)
    params = init_params(kp, C)

    fwd = jax.jit(luky_forward)
    out = jax.block_until_ready(fwd(x, params))

    assert out.shape == (B, C, H, W)
    assert bool(jnp.all(jnp.isfinite(out)))
    print("KERNEL_OK")
</pallas_src>

<mosaic_0001>
module attributes {stable_mosaic.version = 11 : i64} {
  func.func @_luky_kernel(%arg0: i32, %arg1: memref<1x16x256xf32, #tpu.memory_space<vmem>>, %arg2: memref<16x16xbf16, #tpu.memory_space<vmem>>, %arg3: memref<16x16xbf16, #tpu.memory_space<vmem>>, %arg4: memref<16x49xf32, #tpu.memory_space<vmem>>, %arg5: memref<16x8xf32, #tpu.memory_space<vmem>>, %arg6: memref<49x256xf32, #tpu.memory_space<vmem>>, %arg7: memref<256x10xbf16, #tpu.memory_space<vmem>>, %arg8: memref<4x16xbf16, #tpu.memory_space<vmem>>, %arg9: memref<4x2xf32, #tpu.memory_space<vmem>>, %arg10: memref<32x4xbf16, #tpu.memory_space<vmem>>, %arg11: memref<32x1xf32, #tpu.memory_space<vmem>>, %arg12: memref<32x10xf32, #tpu.memory_space<vmem>>, %arg13: memref<9x256xf32, #tpu.memory_space<vmem>>, %arg14: memref<16x2xf32, #tpu.memory_space<vmem>>, %arg15: memref<16x2xf32, #tpu.memory_space<vmem>>, %arg16: memref<1x16x256xf32, #tpu.memory_space<vmem>>) attributes {dimension_semantics = [#tpu.dimension_semantics<parallel>], iteration_bounds = array<i64: 2>, scalar_prefetch = 0 : i64, scratch_operands = 0 : i64, tpu.core_type = #tpu.core_type<tc>, window_params = [{transform_indices = @transform_0, window_bounds = array<i64: 1, 16, 256>}, {pipeline_mode = #tpu.pipeline_mode<synchronous>, transform_indices = @transform_1, window_bounds = array<i64: 16, 16>}, {pipeline_mode = #tpu.pipeline_mode<synchronous>, transform_indices = @transform_2, window_bounds = array<i64: 16, 16>}, {pipeline_mode = #tpu.pipeline_mode<synchronous>, transform_indices = @transform_3, window_bounds = array<i64: 16, 49>}, {pipeline_mode = #tpu.pipeline_mode<synchronous>, transform_indices = @transform_4, window_bounds = array<i64: 16, 8>}, {pipeline_mode = #tpu.pipeline_mode<synchronous>, transform_indices = @transform_5, window_bounds = array<i64: 49, 256>}, {pipeline_mode = #tpu.pipeline_mode<synchronous>, transform_indices = @transform_6, window_bounds = array<i64: 256, 10>}, {pipeline_mode = #tpu.pipeline_mode<synchronous>, transform_indices = @transform_7, window_bounds = array<i64: 4, 16>}, {pipeline_mode = #tpu.pipeline_mode<synchronous>, transform_indices = @transform_8, window_bounds = array<i64: 4, 2>}, {pipeline_mode = #tpu.pipeline_mode<synchronous>, transform_indices = @transform_9, window_bounds = array<i64: 32, 4>}, {pipeline_mode = #tpu.pipeline_mode<synchronous>, transform_indices = @transform_10, window_bounds = array<i64: 32, 1>}, {pipeline_mode = #tpu.pipeline_mode<synchronous>, transform_indices = @transform_11, window_bounds = array<i64: 32, 10>}, {pipeline_mode = #tpu.pipeline_mode<synchronous>, transform_indices = @transform_12, window_bounds = array<i64: 9, 256>}, {pipeline_mode = #tpu.pipeline_mode<synchronous>, transform_indices = @transform_13, window_bounds = array<i64: 16, 2>}, {pipeline_mode = #tpu.pipeline_mode<synchronous>, transform_indices = @transform_14, window_bounds = array<i64: 16, 2>}, {transform_indices = @transform_15, window_bounds = array<i64: 1, 16, 256>}]} {
    %c0 = arith.constant 0 : index
    %c0_0 = arith.constant 0 : index
    %c0_1 = arith.constant 0 : index
    %0 = vector.load %arg1[%c0, %c0_0, %c0_1] : memref<1x16x256xf32, #tpu.memory_space<vmem>>, vector<1x16x256xf32>
    %1 = vector.shape_cast %0 : vector<1x16x256xf32> to vector<16x256xf32>
    %c0_2 = arith.constant 0 : index
    %c0_3 = arith.constant 0 : index
    %2 = vector.load %arg2[%c0_2, %c0_3] : memref<16x16xbf16, #tpu.memory_space<vmem>>, vector<16x16xbf16>
    %3 = arith.truncf %1 : vector<16x256xf32> to vector<16x256xbf16>
    %cst = arith.constant dense<0.000000e+00> : vector<16x256xf32>
    %4 = tpu.matmul %2, %3, %cst {dimension_numbers = #tpu.dot_dimension_numbers<[1], [0], [0], [1], [0, 0, 1, 1], [], []>} : vector<16x16xbf16>, vector<16x256xbf16>, vector<16x256xf32> -> vector<16x256xf32>
    %5 = arith.mulf %4, %4 : vector<16x256xf32>
    %6 = arith.mulf %4, %5 : vector<16x256xf32>
    %cst_4 = arith.constant 4.471500e-02 : f32
    %7 = vector.broadcast %cst_4 : f32 to vector<16x256xf32>
    %8 = arith.mulf %7, %6 : vector<16x256xf32>
    %9 = arith.addf %4, %8 : vector<16x256xf32>
    %cst_5 = arith.constant 0.797884583 : f32
    %10 = vector.broadcast %cst_5 : f32 to vector<16x256xf32>
    %11 = arith.mulf %10, %9 : vector<16x256xf32>
    %12 = math.tanh %11 : vector<16x256xf32>
    %cst_6 = arith.constant 1.000000e+00 : f32
    %13 = vector.broadcast %cst_6 : f32 to vector<16x256xf32>
    %14 = arith.addf %13, %12 : vector<16x256xf32>
    %cst_7 = arith.constant 5.000000e-01 : f32
    %15 = vector.broadcast %cst_7 : f32 to vector<16x256xf32>
    %16 = arith.mulf %15, %14 : vector<16x256xf32>
    %17 = arith.mulf %4, %16 : vector<16x256xf32>
    %c0_8 = arith.constant 0 : index
    %c0_9 = arith.constant 0 : index
    %18 = vector.load %arg5[%c0_8, %c0_9] : memref<16x8xf32, #tpu.memory_space<vmem>>, vector<16x1xf32>
    %19 = vector.broadcast %18 : vector<16x1xf32> to vector<16x256xf32>
    %20 = arith.mulf %17, %19 : vector<16x256xf32>
    %c0_10 = arith.constant 0 : index
    %c1 = arith.constant 1 : index
    %21 = vector.load %arg5[%c0_10, %c1] : memref<16x8xf32, #tpu.memory_space<vmem>>, vector<16x1xf32>
    %22 = vector.broadcast %21 : vector<16x1xf32> to vector<16x256xf32>
    %23 = arith.addf %20, %22 : vector<16x256xf32>
    %c0_11 = arith.constant 0 : index
    %c0_12 = arith.constant 0 : index
    %24 = vector.load %arg4[%c0_11, %c0_12] : memref<16x49xf32, #tpu.memory_space<vmem>>, vector<16x49xf32>
    %25 = vector.extract_strided_slice %24 {offsets = [0, 24], sizes = [16, 1], strides = [1, 1]} : vector<16x49xf32> to vector<16x1xf32>
    %26 = vector.broadcast %25 : vector<16x1xf32> to vector<16x256xf32>
    %27 = arith.mulf %26, %23 : vector<16x256xf32>
    %c51_i32 = arith.constant 51 : i32
    %28 = tpu.dynamic_rotate %23 by %c51_i32 dim 1 : vector<16x256xf32>, i32 -> vector<16x256xf32>
    %29 = vector.extract_strided_slice %24 {offsets = [0, 0], sizes = [16, 1], strides = [1, 1]} : vector<16x49xf32> to vector<16x1xf32>
    %c0_13 = arith.constant 0 : index
    %c0_14 = arith.constant 0 : index
    %30 = vector.load %arg6[%c0_13, %c0_14] : memref<49x256xf32, #tpu.memory_space<vmem>>, vector<1x256xf32>
    %31 = vector.broadcast %30 : vector<1x256xf32> to vector<16x256xf32>
    %32 = arith.mulf %31, %28 : vector<16x256xf32>
    %33 = vector.broadcast %29 : vector<16x1xf32> to vector<16x256xf32>
    %34 = arith.mulf %33, %32 : vector<16x256xf32>
    %35 = arith.addf %27, %34 : vector<16x256xf32>
    %c50_i32 = arith.constant 50 : i32
    %36 = tpu.dynamic_rotate %23 by %c50_i32 dim 1 : vector<16x256xf32>, i32 -> vector<16x256xf32>
    %37 = vector.extract_strided_slice %24 {offsets = [0, 1], sizes = [16, 1], strides = [1, 1]} : vector<16x49xf32> to vector<16x1xf32>
    %c1_15 = arith.constant 1 : index
    %c0_16 = arith.constant 0 : index
    %38 = vector.load %arg6[%c1_15, %c0_16] : memref<49x256xf32, #tpu.memory_space<vmem>>, vector<1x256xf32>
    %39 = vector.broadcast %38 : vector<1x256xf32> to vector<16x256xf32>
    %40 = arith.mulf %39, %36 : vector<16x256xf32>
    %41 = vector.broadcast %37 : vector<16x1xf32> to vector<16x256xf32>
    %42 = arith.mulf %41, %40 : vector<16x256xf32>
    %43 = arith.addf %35, %42 : vector<16x256xf32>
    %c49_i32 = arith.constant 49 : i32
    %44 = tpu.dynamic_rotate %23 by %c49_i32 dim 1 : vector<16x256xf32>, i32 -> vector<16x256xf32>
    %45 = vector.extract_strided_slice %24 {offsets = [0, 2], sizes = [16, 1], strides = [1, 1]} : vector<16x49xf32> to vector<16x1xf32>
    %c2 = arith.constant 2 : index
    %c0_17 = arith.constant 0 : index
    %46 = vector.load %arg6[%c2, %c0_17] : memref<49x256xf32, #tpu.memory_space<vmem>>, vector<1x256xf32>
    %47 = vector.broadcast %46 : vector<1x256xf32> to vector<16x256xf32>
    %48 = arith.mulf %47, %44 : vector<16x256xf32>
    %49 = vector.broadcast %45 : vector<16x1xf32> to vector<16x256xf32>
    %50 = arith.mulf %49, %48 : vector<16x256xf32>
    %51 = arith.addf %43, %50 : vector<16x256xf32>
    %c48_i32 = arith.constant 48 : i32
    %52 = tpu.dynamic_rotate %23 by %c48_i32 dim 1 : vector<16x256xf32>, i32 -> vector<16x256xf32>
    %53 = vector.extract_strided_slice %24 {offsets = [0, 3], sizes = [16, 1], strides = [1, 1]} : vector<16x49xf32> to vector<16x1xf32>
    %c3 = arith.constant 3 : index
    %c0_18 = arith.constant 0 : index
    %54 = vector.load %arg6[%c3, %c0_18] : memref<49x256xf32, #tpu.memory_space<vmem>>, vector<1x256xf32>
    %55 = vector.broadcast %54 : vector<1x256xf32> to vector<16x256xf32>
    %56 = arith.mulf %55, %52 : vector<16x256xf32>
    %57 = vector.broadcast %53 : vector<16x1xf32> to vector<16x256xf32>
    %58 = arith.mulf %57, %56 : vector<16x256xf32>
    %59 = arith.addf %51, %58 : vector<16x256xf32>
    %c47_i32 = arith.constant 47 : i32
    %60 = tpu.dynamic_rotate %23 by %c47_i32 dim 1 : vector<16x256xf32>, i32 -> vector<16x256xf32>
    %61 = vector.extract_strided_slice %24 {offsets = [0, 4], sizes = [16, 1], strides = [1, 1]} : vector<16x49xf32> to vector<16x1xf32>
    %c4 = arith.constant 4 : index
    %c0_19 = arith.constant 0 : index
    %62 = vector.load %arg6[%c4, %c0_19] : memref<49x256xf32, #tpu.memory_space<vmem>>, vector<1x256xf32>
    %63 = vector.broadcast %62 : vector<1x256xf32> to vector<16x256xf32>
    %64 = arith.mulf %63, %60 : vector<16x256xf32>
    %65 = vector.broadcast %61 : vector<16x1xf32> to vector<16x256xf32>
    %66 = arith.mulf %65, %64 : vector<16x256xf32>
    %67 = arith.addf %59, %66 : vector<16x256xf32>
    %c46_i32 = arith.constant 46 : i32
    %68 = tpu.dynamic_rotate %23 by %c46_i32 dim 1 : vector<16x256xf32>, i32 -> vector<16x256xf32>
    %69 = vector.extract_strided_slice %24 {offsets = [0, 5], sizes = [16, 1], strides = [1, 1]} : vector<16x49xf32> to vector<16x1xf32>
    %c5 = arith.constant 5 : index
    %c0_20 = arith.constant 0 : index
    %70 = vector.load %arg6[%c5, %c0_20] : memref<49x256xf32, #tpu.memory_space<vmem>>, vector<1x256xf32>
    %71 = vector.broadcast %70 : vector<1x256xf32> to vector<16x256xf32>
    %72 = arith.mulf %71, %68 : vector<16x256xf32>
    %73 = vector.broadcast %69 : vector<16x1xf32> to vector<16x256xf32>
    %74 = arith.mulf %73, %72 : vector<16x256xf32>
    %75 = arith.addf %67, %74 : vector<16x256xf32>
    %c45_i32 = arith.constant 45 : i32
    %76 = tpu.dynamic_rotate %23 by %c45_i32 dim 1 : vector<16x256xf32>, i32 -> vector<16x256xf32>
    %77 = vector.extract_strided_slice %24 {offsets = [0, 6], sizes = [16, 1], strides = [1, 1]} : vector<16x49xf32> to vector<16x1xf32>
    %c6 = arith.constant 6 : index
    %c0_21 = arith.constant 0 : index
    %78 = vector.load %arg6[%c6, %c0_21] : memref<49x256xf32, #tpu.memory_space<vmem>>, vector<1x256xf32>
    %79 = vector.broadcast %78 : vector<1x256xf32> to vector<16x256xf32>
    %80 = arith.mulf %79, %76 : vector<16x256xf32>
    %81 = vector.broadcast %77 : vector<16x1xf32> to vector<16x256xf32>
    %82 = arith.mulf %81, %80 : vector<16x256xf32>
    %83 = arith.addf %75, %82 : vector<16x256xf32>
    %c35_i32 = arith.constant 35 : i32
    %84 = tpu.dynamic_rotate %23 by %c35_i32 dim 1 : vector<16x256xf32>, i32 -> vector<16x256xf32>
    %85 = vector.extract_strided_slice %24 {offsets = [0, 7], sizes = [16, 1], strides = [1, 1]} : vector<16x49xf32> to vector<16x1xf32>
    %c7 = arith.constant 7 : index
    %c0_22 = arith.constant 0 : index
    %86 = vector.load %arg6[%c7, %c0_22] : memref<49x256xf32, #tpu.memory_space<vmem>>, vector<1x256xf32>
    %87 = vector.broadcast %86 : vector<1x256xf32> to vector<16x256xf32>
    %88 = arith.mulf %87, %84 : vector<16x256xf32>
    %89 = vector.broadcast %85 : vector<16x1xf32> to vector<16x256xf32>
    %90 = arith.mulf %89, %88 : vector<16x256xf32>
    %91 = arith.addf %83, %90 : vector<16x256xf32>
    %c34_i32 = arith.constant 34 : i32
    %92 = tpu.dynamic_rotate %23 by %c34_i32 dim 1 : vector<16x256xf32>, i32 -> vector<16x256xf32>
    %93 = vector.extract_strided_slice %24 {offsets = [0, 8], sizes = [16, 1], strides = [1, 1]} : vector<16x49xf32> to vector<16x1xf32>
    %c8 = arith.constant 8 : index
    %c0_23 = arith.constant 0 : index
    %94 = vector.load %arg6[%c8, %c0_23] : memref<49x256xf32, #tpu.memory_space<vmem>>, vector<1x256xf32>
    %95 = vector.broadcast %94 : vector<1x256xf32> to vector<16x256xf32>
    %96 = arith.mulf %95, %92 : vector<16x256xf32>
    %97 = vector.broadcast %93 : vector<16x1xf32> to vector<16x256xf32>
    %98 = arith.mulf %97, %96 : vector<16x256xf32>
    %99 = arith.addf %91, %98 : vector<16x256xf32>
    %c33_i32 = arith.constant 33 : i32
    %100 = tpu.dynamic_rotate %23 by %c33_i32 dim 1 : vector<16x256xf32>, i32 -> vector<16x256xf32>
    %101 = vector.extract_strided_slice %24 {offsets = [0, 9], sizes = [16, 1], strides = [1, 1]} : vector<16x49xf32> to vector<16x1xf32>
    %c9 = arith.constant 9 : index
    %c0_24 = arith.constant 0 : index
    %102 = vector.load %arg6[%c9, %c0_24] : memref<49x256xf32, #tpu.memory_space<vmem>>, vector<1x256xf32>
    %103 = vector.broadcast %102 : vector<1x256xf32> to vector<16x256xf32>
    %104 = arith.mulf %103, %100 : vector<16x256xf32>
    %105 = vector.broadcast %101 : vector<16x1xf32> to vector<16x256xf32>
    %106 = arith.mulf %105, %104 : vector<16x256xf32>
    %107 = arith.addf %99, %106 : vector<16x256xf32>
    %c32_i32 = arith.constant 32 : i32
    %108 = tpu.dynamic_rotate %23 by %c32_i32 dim 1 : vector<16x256xf32>, i32 -> vector<16x256xf32>
    %109 = vector.extract_strided_slice %24 {offsets = [0, 10], sizes = [16, 1], strides = [1, 1]} : vector<16x49xf32> to vector<16x1xf32>
    %c10 = arith.constant 10 : index
    %c0_25 = arith.constant 0 : index
    %110 = vector.load %arg6[%c10, %c0_25] : memref<49x256xf32, #tpu.memory_space<vmem>>, vector<1x256xf32>
    %111 = vector.broadcast %110 : vector<1x256xf32> to vector<16x256xf32>
    %112 = arith.mulf %111, %108 : vector<16x256xf32>
    %113 = vector.broadcast %109 : vector<16x1xf32> to vector<16x256xf32>
    %114 = arith.mulf %113, %112 : vector<16x256xf32>
    %115 = arith.addf %107, %114 : vector<16x256xf32>
    %c31_i32 = arith.constant 31 : i32
    %116 = tpu.dynamic_rotate %23 by %c31_i32 dim 1 : vector<16x256xf32>, i32 -> vector<16x256xf32>
    %117 = vector.extract_strided_slice %24 {offsets = [0, 11], sizes = [16, 1], strides = [1, 1]} : vector<16x49xf32> to vector<16x1xf32>
    %c11 = arith.constant 11 : index
    %c0_26 = arith.constant 0 : index
    %118 = vector.load %arg6[%c11, %c0_26] : memref<49x256xf32, #tpu.memory_space<vmem>>, vector<1x256xf32>
    %119 = vector.broadcast %118 : vector<1x256xf32> to vector<16x256xf32>
    %120 = arith.mulf %119, %116 : vector<16x256xf32>
    %121 = vector.broadcast %117 : vector<16x1xf32> to vector<16x256xf32>
    %122 = arith.mulf %121, %120 : vector<16x256xf32>
    %123 = arith.addf %115, %122 : vector<16x256xf32>
    %c30_i32 = arith.constant 30 : i32
    %124 = tpu.dynamic_rotate %23 by %c30_i32 dim 1 : vector<16x256xf32>, i32 -> vector<16x256xf32>
    %125 = vector.extract_strided_slice %24 {offsets = [0, 12], sizes = [16, 1], strides = [1, 1]} : vector<16x49xf32> to vector<16x1xf32>
    %c12 = arith.constant 12 : index
    %c0_27 = arith.constant 0 : index
    %126 = vector.load %arg6[%c12, %c0_27] : memref<49x256xf32, #tpu.memory_space<vmem>>, vector<1x256xf32>
    %127 = vector.broadcast %126 : vector<1x256xf32> to vector<16x256xf32>
    %128 = arith.mulf %127, %124 : vector<16x256xf32>
    %129 = vector.broadcast %125 : vector<16x1xf32> to vector<16x256xf32>
    %130 = arith.mulf %129, %128 : vector<16x256xf32>
    %131 = arith.addf %123, %130 : vector<16x256xf32>
    %c29_i32 = arith.constant 29 : i32
    %132 = tpu.dynamic_rotate %23 by %c29_i32 dim 1 : vector<16x256xf32>, i32 -> vector<16x256xf32>
    %133 = vector.extract_strided_slice %24 {offsets = [0, 13], sizes = [16, 1], strides = [1, 1]} : vector<16x49xf32> to vector<16x1xf32>
    %c13 = arith.constant 13 : index
    %c0_28 = arith.constant 0 : index
    %134 = vector.load %arg6[%c13, %c0_28] : memref<49x256xf32, #tpu.memory_space<vmem>>, vector<1x256xf32>
    %135 = vector.broadcast %134 : vector<1x256xf32> to vector<16x256xf32>
    %136 = arith.mulf %135, %132 : vector<16x256xf32>
    %137 = vector.broadcast %133 : vector<16x1xf32> to vector<16x256xf32>
    %138 = arith.mulf %137, %136 : vector<16x256xf32>
    %139 = arith.addf %131, %138 : vector<16x256xf32>
    %c19_i32 = arith.constant 19 : i32
    %140 = tpu.dynamic_rotate %23 by %c19_i32 dim 1 : vector<16x256xf32>, i32 -> vector<16x256xf32>
    %141 = vector.extract_strided_slice %24 {offsets = [0, 14], sizes = [16, 1], strides = [1, 1]} : vector<16x49xf32> to vector<16x1xf32>
    %c14 = arith.constant 14 : index
    %c0_29 = arith.constant 0 : index
    %142 = vector.load %arg6[%c14, %c0_29] : memref<49x256xf32, #tpu.memory_space<vmem>>, vector<1x256xf32>
    %143 = vector.broadcast %142 : vector<1x256xf32> to vector<16x256xf32>
    %144 = arith.mulf %143, %140 : vector<16x256xf32>
    %145 = vector.broadcast %141 : vector<16x1xf32> to vector<16x256xf32>
    %146 = arith.mulf %145, %144 : vector<16x256xf32>
    %147 = arith.addf %139, %146 : vector<16x256xf32>
    %c18_i32 = arith.constant 18 : i32
    %148 = tpu.dynamic_rotate %23 by %c18_i32 dim 1 : vector<16x256xf32>, i32 -> vector<16x256xf32>
    %149 = vector.extract_strided_slice %24 {offsets = [0, 15], sizes = [16, 1], strides = [1, 1]} : vector<16x49xf32> to vector<16x1xf32>
    %c15 = arith.constant 15 : index
    %c0_30 = arith.constant 0 : index
    %150 = vector.load %arg6[%c15, %c0_30] : memref<49x256xf32, #tpu.memory_space<vmem>>, vector<1x256xf32>
    %151 = vector.broadcast %150 : vector<1x256xf32> to vector<16x256xf32>
    %152 = arith.mulf %151, %148 : vector<16x256xf32>
    %153 = vector.broadcast %149 : vector<16x1xf32> to vector<16x256xf32>
    %154 = arith.mulf %153, %152 : vector<16x256xf32>
    %155 = arith.addf %147, %154 : vector<16x256xf32>
    %c17_i32 = arith.constant 17 : i32
    %156 = tpu.dynamic_rotate %23 by %c17_i32 dim 1 : vector<16x256xf32>, i32 -> vector<16x256xf32>
    %157 = vector.extract_strided_slice %24 {offsets = [0, 16], sizes = [16, 1], strides = [1, 1]} : vector<16x49xf32> to vector<16x1xf32>
    %c16 = arith.constant 16 : index
    %c0_31 = arith.constant 0 : index
    %158 = vector.load %arg6[%c16, %c0_31] : memref<49x256xf32, #tpu.memory_space<vmem>>, vector<1x256xf32>
    %159 = vector.broadcast %158 : vector<1x256xf32> to vector<16x256xf32>
    %160 = arith.mulf %159, %156 : vector<16x256xf32>
    %161 = vector.broadcast %157 : vector<16x1xf32> to vector<16x256xf32>
    %162 = arith.mulf %161, %160 : vector<16x256xf32>
    %163 = arith.addf %155, %162 : vector<16x256xf32>
    %c16_i32 = arith.constant 16 : i32
    %164 = tpu.dynamic_rotate %23 by %c16_i32 dim 1 : vector<16x256xf32>, i32 -> vector<16x256xf32>
    %165 = vector.extract_strided_slice %24 {offsets = [0, 17], sizes = [16, 1], strides = [1, 1]} : vector<16x49xf32> to vector<16x1xf32>
    %c17 = arith.constant 17 : index
    %c0_32 = arith.constant 0 : index
    %166 = vector.load %arg6[%c17, %c0_32] : memref<49x256xf32, #tpu.memory_space<vmem>>, vector<1x256xf32>
    %167 = vector.broadcast %166 : vector<1x256xf32> to vector<16x256xf32>
    %168 = arith.mulf %167, %164 : vector<16x256xf32>
    %169 = vector.broadcast %165 : vector<16x1xf32> to vector<16x256xf32>
    %170 = arith.mulf %169, %168 : vector<16x256xf32>
    %171 = arith.addf %163, %170 : vector<16x256xf32>
    %c15_i32 = arith.constant 15 : i32
    %172 = tpu.dynamic_rotate %23 by %c15_i32 dim 1 : vector<16x256xf32>, i32 -> vector<16x256xf32>
    %173 = vector.extract_strided_slice %24 {offsets = [0, 18], sizes = [16, 1], strides = [1, 1]} : vector<16x49xf32> to vector<16x1xf32>
    %c18 = arith.constant 18 : index
    %c0_33 = arith.constant 0 : index
    %174 = vector.load %arg6[%c18, %c0_33] : memref<49x256xf32, #tpu.memory_space<vmem>>, vector<1x256xf32>
    %175 = vector.broadcast %174 : vector<1x256xf32> to vector<16x256xf32>
    %176 = arith.mulf %175, %172 : vector<16x256xf32>
    %177 = vector.broadcast %173 : vector<16x1xf32> to vector<16x256xf32>
    %178 = arith.mulf %177, %176 : vector<16x256xf32>
    %179 = arith.addf %171, %178 : vector<16x256xf32>
    %c14_i32 = arith.constant 14 : i32
    %180 = tpu.dynamic_rotate %23 by %c14_i32 dim 1 : vector<16x256xf32>, i32 -> vector<16x256xf32>
    %181 = vector.extract_strided_slice %24 {offsets = [0, 19], sizes = [16, 1], strides = [1, 1]} : vector<16x49xf32> to vector<16x1xf32>
    %c19 = arith.constant 19 : index
    %c0_34 = arith.constant 0 : index
    %182 = vector.load %arg6[%c19, %c0_34] : memref<49x256xf32, #tpu.memory_space<vmem>>, vector<1x256xf32>
    %183 = vector.broadcast %182 : vector<1x256xf32> to vector<16x256xf32>
    %184 = arith.mulf %183, %180 : vector<16x256xf32>
    %185 = vector.broadcast %181 : vector<16x1xf32> to vector<16x256xf32>
    %186 = arith.mulf %185, %184 : vector<16x256xf32>
    %187 = arith.addf %179, %186 : vector<16x256xf32>
    %c13_i32 = arith.constant 13 : i32
    %188 = tpu.dynamic_rotate %23 by %c13_i32 dim 1 : vector<16x256xf32>, i32 -> vector<16x256xf32>
    %189 = vector.extract_strided_slice %24 {offsets = [0, 20], sizes = [16, 1], strides = [1, 1]} : vector<16x49xf32> to vector<16x1xf32>
    %c20 = arith.constant 20 : index
    %c0_35 = arith.constant 0 : index
    %190 = vector.load %arg6[%c20, %c0_35] : memref<49x256xf32, #tpu.memory_space<vmem>>, vector<1x256xf32>
    %191 = vector.broadcast %190 : vector<1x256xf32> to vector<16x256xf32>
    %192 = arith.mulf %191, %188 : vector<16x256xf32>
    %193 = vector.broadcast %189 : vector<16x1xf32> to vector<16x256xf32>
    %194 = arith.mulf %193, %192 : vector<16x256xf32>
    %195 = arith.addf %187, %194 : vector<16x256xf32>
    %c3_i32 = arith.constant 3 : i32
    %196 = tpu.dynamic_rotate %23 by %c3_i32 dim 1 : vector<16x256xf32>, i32 -> vector<16x256xf32>
    %197 = vector.extract_strided_slice %24 {offsets = [0, 21], sizes = [16, 1], strides = [1, 1]} : vector<16x49xf32> to vector<16x1xf32>
    %c21 = arith.constant 21 : index
    %c0_36 = arith.constant 0 : index
    %198 = vector.load %arg6[%c21, %c0_36] : memref<49x256xf32, #tpu.memory_space<vmem>>, vector<1x256xf32>
    %199 = vector.broadcast %198 : vector<1x256xf32> to vector<16x256xf32>
    %200 = arith.mulf %199, %196 : vector<16x256xf32>
    %201 = vector.broadcast %197 : vector<16x1xf32> to vector<16x256xf32>
    %202 = arith.mulf %201, %200 : vector<16x256xf32>
    %203 = arith.addf %195, %202 : vector<16x256xf32>
    %c2_i32 = arith.constant 2 : i32
    %204 = tpu.dynamic_rotate %23 by %c2_i32 dim 1 : vector<16x256xf32>, i32 -> vector<16x256xf32>
    %205 = vector.extract_strided_slice %24 {offsets = [0, 22], sizes = [16, 1], strides = [1, 1]} : vector<16x49xf32> to vector<16x1xf32>
    %c22 = arith.constant 22 : index
    %c0_37 = arith.constant 0 : index
    %206 = vector.load %arg6[%c22, %c0_37] : memref<49x256xf32, #tpu.memory_space<vmem>>, vector<1x256xf32>
    %207 = vector.broadcast %206 : vector<1x256xf32> to vector<16x256xf32>
    %208 = arith.mulf %207, %204 : vector<16x256xf32>
    %209 = vector.broadcast %205 : vector<16x1xf32> to vector<16x256xf32>
    %210 = arith.mulf %209, %208 : vector<16x256xf32>
    %211 = arith.addf %203, %210 : vector<16x256xf32>
    %c1_i32 = arith.constant 1 : i32
    %212 = tpu.dynamic_rotate %23 by %c1_i32 dim 1 : vector<16x256xf32>, i32 -> vector<16x256xf32>
    %213 = vector.extract_strided_slice %24 {offsets = [0, 23], sizes = [16, 1], strides = [1, 1]} : vector<16x49xf32> to vector<16x1xf32>
    %c23 = arith.constant 23 : index
    %c0_38 = arith.constant 0 : index
    %214 = vector.load %arg6[%c23, %c0_38] : memref<49x256xf32, #tpu.memory_space<vmem>>, vector<1x256xf32>
    %215 = vector.broadcast %214 : vector<1x256xf32> to vector<16x256xf32>
    %216 = arith.mulf %215, %212 : vector<16x256xf32>
    %217 = vector.broadcast %213 : vector<16x1xf32> to vector<16x256xf32>
    %218 = arith.mulf %217, %216 : vector<16x256xf32>
    %219 = arith.addf %211, %218 : vector<16x256xf32>
    %c255_i32 = arith.constant 255 : i32
    %220 = tpu.dynamic_rotate %23 by %c255_i32 dim 1 : vector<16x256xf32>, i32 -> vector<16x256xf32>
    %221 = vector.extract_strided_slice %24 {offsets = [0, 25], sizes = [16, 1], strides = [1, 1]} : vector<16x49xf32> to vector<16x1xf32>
    %c25 = arith.constant 25 : index
    %c0_39 = arith.constant 0 : index
    %222 = vector.load %arg6[%c25, %c0_39] : memref<49x256xf32, #tpu.memory_space<vmem>>, vector<1x256xf32>
    %223 = vector.broadcast %222 : vector<1x256xf32> to vector<16x256xf32>
    %224 = arith.mulf %223, %220 : vector<16x256xf32>
    %225 = vector.broadcast %221 : vector<16x1xf32> to vector<16x256xf32>
    %226 = arith.mulf %225, %224 : vector<16x256xf32>
    %227 = arith.addf %219, %226 : vector<16x256xf32>
    %c254_i32 = arith.constant 254 : i32
    %228 = tpu.dynamic_rotate %23 by %c254_i32 dim 1 : vector<16x256xf32>, i32 -> vector<16x256xf32>
    %229 = vector.extract_strided_slice %24 {offsets = [0, 26], sizes = [16, 1], strides = [1, 1]} : vector<16x49xf32> to vector<16x1xf32>
    %c26 = arith.constant 26 : index
    %c0_40 = arith.constant 0 : index
    %230 = vector.load %arg6[%c26, %c0_40] : memref<49x256xf32, #tpu.memory_space<vmem>>, vector<1x256xf32>
    %231 = vector.broadcast %230 : vector<1x256xf32> to vector<16x256xf32>
    %232 = arith.mulf %231, %228 : vector<16x256xf32>
    %233 = vector.broadcast %229 : vector<16x1xf32> to vector<16x256xf32>
    %234 = arith.mulf %233, %232 : vector<16x256xf32>
    %235 = arith.addf %227, %234 : vector<16x256xf32>
    %c253_i32 = arith.constant 253 : i32
    %236 = tpu.dynamic_rotate %23 by %c253_i32 dim 1 : vector<16x256xf32>, i32 -> vector<16x256xf32>
    %237 = vector.extract_strided_slice %24 {offsets = [0, 27], sizes = [16, 1], strides = [1, 1]} : vector<16x49xf32> to vector<16x1xf32>
    %c27 = arith.constant 27 : index
    %c0_41 = arith.constant 0 : index
    %238 = vector.load %arg6[%c27, %c0_41] : memref<49x256xf32, #tpu.memory_space<vmem>>, vector<1x256xf32>
    %239 = vector.broadcast %238 : vector<1x256xf32> to vector<16x256xf32>
    %240 = arith.mulf %239, %236 : vector<16x256xf32>
    %241 = vector.broadcast %237 : vector<16x1xf32> to vector<16x256xf32>
    %242 = arith.mulf %241, %240 : vector<16x256xf32>
    %243 = arith.addf %235, %242 : vector<16x256xf32>
    %c243_i32 = arith.constant 243 : i32
    %244 = tpu.dynamic_rotate %23 by %c243_i32 dim 1 : vector<16x256xf32>, i32 -> vector<16x256xf32>
    %245 = vector.extract_strided_slice %24 {offsets = [0, 28], sizes = [16, 1], strides = [1, 1]} : vector<16x49xf32> to vector<16x1xf32>
    %c28 = arith.constant 28 : index
    %c0_42 = arith.constant 0 : index
    %246 = vector.load %arg6[%c28, %c0_42] : memref<49x256xf32, #tpu.memory_space<vmem>>, vector<1x256xf32>
    %247 = vector.broadcast %246 : vector<1x256xf32> to vector<16x256xf32>
    %248 = arith.mulf %247, %244 : vector<16x256xf32>
    %249 = vector.broadcast %245 : vector<16x1xf32> to vector<16x256xf32>
    %250 = arith.mulf %249, %248 : vector<16x256xf32>
    %251 = arith.addf %243, %250 : vector<16x256xf32>
    %c242_i32 = arith.constant 242 : i32
    %252 = tpu.dynamic_rotate %23 by %c242_i32 dim 1 : vector<16x256xf32>, i32 -> vector<16x256xf32>
    %253 = vector.extract_strided_slice %24 {offsets = [0, 29], sizes = [16, 1], strides = [1, 1]} : vector<16x49xf32> to vector<16x1xf32>
    %c29 = arith.constant 29 : index
    %c0_43 = arith.constant 0 : index
    %254 = vector.load %arg6[%c29, %c0_43] : memref<49x256xf32, #tpu.memory_space<vmem>>, vector<1x256xf32>
    %255 = vector.broadcast %254 : vector<1x256xf32> to vector<16x256xf32>
    %256 = arith.mulf %255, %252 : vector<16x256xf32>
    %257 = vector.broadcast %253 : vector<16x1xf32> to vector<16x256xf32>
    %258 = arith.mulf %257, %256 : vector<16x256xf32>
    %259 = arith.addf %251, %258 : vector<16x256xf32>
    %c241_i32 = arith.constant 241 : i32
    %260 = tpu.dynamic_rotate %23 by %c241_i32 dim 1 : vector<16x256xf32>, i32 -> vector<16x256xf32>
    %261 = vector.extract_strided_slice %24 {offsets = [0, 30], sizes = [16, 1], strides = [1, 1]} : vector<16x49xf32> to vector<16x1xf32>
    %c30 = arith.constant 30 : index
    %c0_44 = arith.constant 0 : index
    %262 = vector.load %arg6[%c30, %c0_44] : memref<49x256xf32, #tpu.memory_space<vmem>>, vector<1x256xf32>
    %263 = vector.broadcast %262 : vector<1x256xf32> to vector<16x256xf32>
    %264 = arith.mulf %263, %260 : vector<16x256xf32>
    %265 = vector.broadcast %261 : vector<16x1xf32> to vector<16x256xf32>
    %266 = arith.mulf %265, %264 : vector<16x256xf32>
    %267 = arith.addf %259, %266 : vector<16x256xf32>
    %c240_i32 = arith.constant 240 : i32
    %268 = tpu.dynamic_rotate %23 by %c240_i32 dim 1 : vector<16x256xf32>, i32 -> vector<16x256xf32>
    %269 = vector.extract_strided_slice %24 {offsets = [0, 31], sizes = [16, 1], strides = [1, 1]} : vector<16x49xf32> to vector<16x1xf32>
    %c31 = arith.constant 31 : index
    %c0_45 = arith.constant 0 : index
    %270 = vector.load %arg6[%c31, %c0_45] : memref<49x256xf32, #tpu.memory_space<vmem>>, vector<1x256xf32>
    %271 = vector.broadcast %270 : vector<1x256xf32> to vector<16x256xf32>
    %272 = arith.mulf %271, %268 : vector<16x256xf32>
    %273 = vector.broadcast %269 : vector<16x1xf32> to vector<16x256xf32>
    %274 = arith.mulf %273, %272 : vector<16x256xf32>
    %275 = arith.addf %267, %274 : vector<16x256xf32>
    %c239_i32 = arith.constant 239 : i32
    %276 = tpu.dynamic_rotate %23 by %c239_i32 dim 1 : vector<16x256xf32>, i32 -> vector<16x256xf32>
    %277 = vector.extract_strided_slice %24 {offsets = [0, 32], sizes = [16, 1], strides = [1, 1]} : vector<16x49xf32> to vector<16x1xf32>
    %c32 = arith.constant 32 : index
    %c0_46 = arith.constant 0 : index
    %278 = vector.load %arg6[%c32, %c0_46] : memref<49x256xf32, #tpu.memory_space<vmem>>, vector<1x256xf32>
    %279 = vector.broadcast %278 : vector<1x256xf32> to vector<16x256xf32>
    %280 = arith.mulf %279, %276 : vector<16x256xf32>
    %281 = vector.broadcast %277 : vector<16x1xf32> to vector<16x256xf32>
    %282 = arith.mulf %281, %280 : vector<16x256xf32>
    %283 = arith.addf %275, %282 : vector<16x256xf32>
    %c238_i32 = arith.constant 238 : i32
    %284 = tpu.dynamic_rotate %23 by %c238_i32 dim 1 : vector<16x256xf32>, i32 -> vector<16x256xf32>
    %285 = vector.extract_strided_slice %24 {offsets = [0, 33], sizes = [16, 1], strides = [1, 1]} : vector<16x49xf32> to vector<16x1xf32>
    %c33 = arith.constant 33 : index
    %c0_47 = arith.constant 0 : index
    %286 = vector.load %arg6[%c33, %c0_47] : memref<49x256xf32, #tpu.memory_space<vmem>>, vector<1x256xf32>
    %287 = vector.broadcast %286 : vector<1x256xf32> to vector<16x256xf32>
    %288 = arith.mulf %287, %284 : vector<16x256xf32>
    %289 = vector.broadcast %285 : vector<16x1xf32> to vector<16x256xf32>
    %290 = arith.mulf %289, %288 : vector<16x256xf32>
    %291 = arith.addf %283, %290 : vector<16x256xf32>
    %c237_i32 = arith.constant 237 : i32
    %292 = tpu.dynamic_rotate %23 by %c237_i32 dim 1 : vector<16x256xf32>, i32 -> vector<16x256xf32>
    %293 = vector.extract_strided_slice %24 {offsets = [0, 34], sizes = [16, 1], strides = [1, 1]} : vector<16x49xf32> to vector<16x1xf32>
    %c34 = arith.constant 34 : index
    %c0_48 = arith.constant 0 : index
    %294 = vector.load %arg6[%c34, %c0_48] : memref<49x256xf32, #tpu.memory_space<vmem>>, vector<1x256xf32>
    %295 = vector.broadcast %294 : vector<1x256xf32> to vector<16x256xf32>
    %296 = arith.mulf %295, %292 : vector<16x256xf32>
    %297 = vector.broadcast %293 : vector<16x1xf32> to vector<16x256xf32>
    %298 = arith.mulf %297, %296 : vector<16x256xf32>
    %299 = arith.addf %291, %298 : vector<16x256xf32>
    %c227_i32 = arith.constant 227 : i32
    %300 = tpu.dynamic_rotate %23 by %c227_i32 dim 1 : vector<16x256xf32>, i32 -> vector<16x256xf32>
    %301 = vector.extract_strided_slice %24 {offsets = [0, 35], sizes = [16, 1], strides = [1, 1]} : vector<16x49xf32> to vector<16x1xf32>
    %c35 = arith.constant 35 : index
    %c0_49 = arith.constant 0 : index
    %302 = vector.load %arg6[%c35, %c0_49] : memref<49x256xf32, #tpu.memory_space<vmem>>, vector<1x256xf32>
    %303 = vector.broadcast %302 : vector<1x256xf32> to vector<16x256xf32>
    %304 = arith.mulf %303, %300 : vector<16x256xf32>
    %305 = vector.broadcast %301 : vector<16x1xf32> to vector<16x256xf32>
    %306 = arith.mulf %305, %304 : vector<16x256xf32>
    %307 = arith.addf %299, %306 : vector<16x256xf32>
    %c226_i32 = arith.constant 226 : i32
    %308 = tpu.dynamic_rotate %23 by %c226_i32 dim 1 : vector<16x256xf32>, i32 -> vector<16x256xf32>
    %309 = vector.extract_strided_slice %24 {offsets = [0, 36], sizes = [16, 1], strides = [1, 1]} : vector<16x49xf32> to vector<16x1xf32>
    %c36 = arith.constant 36 : index
    %c0_50 = arith.constant 0 : index
    %310 = vector.load %arg6[%c36, %c0_50] : memref<49x256xf32, #tpu.memory_space<vmem>>, vector<1x256xf32>
    %311 = vector.broadcast %310 : vector<1x256xf32> to vector<16x256xf32>
    %312 = arith.mulf %311, %308 : vector<16x256xf32>
    %313 = vector.broadcast %309 : vector<16x1xf32> to vector<16x256xf32>
    %314 = arith.mulf %313, %312 : vector<16x256xf32>
    %315 = arith.addf %307, %314 : vector<16x256xf32>
    %c225_i32 = arith.constant 225 : i32
    %316 = tpu.dynamic_rotate %23 by %c225_i32 dim 1 : vector<16x256xf32>, i32 -> vector<16x256xf32>
    %317 = vector.extract_strided_slice %24 {offsets = [0, 37], sizes = [16, 1], strides = [1, 1]} : vector<16x49xf32> to vector<16x1xf32>
    %c37 = arith.constant 37 : index
    %c0_51 = arith.constant 0 : index
    %318 = vector.load %arg6[%c37, %c0_51] : memref<49x256xf32, #tpu.memory_space<vmem>>, vector<1x256xf32>
    %319 = vector.broadcast %318 : vector<1x256xf32> to vector<16x256xf32>
    %320 = arith.mulf %319, %316 : vector<16x256xf32>
    %321 = vector.broadcast %317 : vector<16x1xf32> to vector<16x256xf32>
    %322 = arith.mulf %321, %320 : vector<16x256xf32>
    %323 = arith.addf %315, %322 : vector<16x256xf32>
    %c224_i32 = arith.constant 224 : i32
    %324 = tpu.dynamic_rotate %23 by %c224_i32 dim 1 : vector<16x256xf32>, i32 -> vector<16x256xf32>
    %325 = vector.extract_strided_slice %24 {offsets = [0, 38], sizes = [16, 1], strides = [1, 1]} : vector<16x49xf32> to vector<16x1xf32>
    %c38 = arith.constant 38 : index
    %c0_52 = arith.constant 0 : index
    %326 = vector.load %arg6[%c38, %c0_52] : memref<49x256xf32, #tpu.memory_space<vmem>>, vector<1x256xf32>
    %327 = vector.broadcast %326 : vector<1x256xf32> to vector<16x256xf32>
    %328 = arith.mulf %327, %324 : vector<16x256xf32>
    %329 = vector.broadcast %325 : vector<16x1xf32> to vector<16x256xf32>
    %330 = arith.mulf %329, %328 : vector<16x256xf32>
    %331 = arith.addf %323, %330 : vector<16x256xf32>
    %c223_i32 = arith.constant 223 : i32
    %332 = tpu.dynamic_rotate %23 by %c223_i32 dim 1 : vector<16x256xf32>, i32 -> vector<16x256xf32>
    %333 = vector.extract_strided_slice %24 {offsets = [0, 39], sizes = [16, 1], strides = [1, 1]} : vector<16x49xf32> to vector<16x1xf32>
    %c39 = arith.constant 39 : index
    %c0_53 = arith.constant 0 : index
    %334 = vector.load %arg6[%c39, %c0_53] : memref<49x256xf32, #tpu.memory_space<vmem>>, vector<1x256xf32>
    %335 = vector.broadcast %334 : vector<1x256xf32> to vector<16x256xf32>
    %336 = arith.mulf %335, %332 : vector<16x256xf32>
    %337 = vector.broadcast %333 : vector<16x1xf32> to vector<16x256xf32>
    %338 = arith.mulf %337, %336 : vector<16x256xf32>
    %339 = arith.addf %331, %338 : vector<16x256xf32>
    %c222_i32 = arith.constant 222 : i32
    %340 = tpu.dynamic_rotate %23 by %c222_i32 dim 1 : vector<16x256xf32>, i32 -> vector<16x256xf32>
    %341 = vector.extract_strided_slice %24 {offsets = [0, 40], sizes = [16, 1], strides = [1, 1]} : vector<16x49xf32> to vector<16x1xf32>
    %c40 = arith.constant 40 : index
    %c0_54 = arith.constant 0 : index
    %342 = vector.load %arg6[%c40, %c0_54] : memref<49x256xf32, #tpu.memory_space<vmem>>, vector<1x256xf32>
    %343 = vector.broadcast %342 : vector<1x256xf32> to vector<16x256xf32>
    %344 = arith.mulf %343, %340 : vector<16x256xf32>
    %345 = vector.broadcast %341 : vector<16x1xf32> to vector<16x256xf32>
    %346 = arith.mulf %345, %344 : vector<16x256xf32>
    %347 = arith.addf %339, %346 : vector<16x256xf32>
    %c221_i32 = arith.constant 221 : i32
    %348 = tpu.dynamic_rotate %23 by %c221_i32 dim 1 : vector<16x256xf32>, i32 -> vector<16x256xf32>
    %349 = vector.extract_strided_slice %24 {offsets = [0, 41], sizes = [16, 1], strides = [1, 1]} : vector<16x49xf32> to vector<16x1xf32>
    %c41 = arith.constant 41 : index
    %c0_55 = arith.constant 0 : index
    %350 = vector.load %arg6[%c41, %c0_55] : memref<49x256xf32, #tpu.memory_space<vmem>>, vector<1x256xf32>
    %351 = vector.broadcast %350 : vector<1x256xf32> to vector<16x256xf32>
    %352 = arith.mulf %351, %348 : vector<16x256xf32>
    %353 = vector.broadcast %349 : vector<16x1xf32> to vector<16x256xf32>
    %354 = arith.mulf %353, %352 : vector<16x256xf32>
    %355 = arith.addf %347, %354 : vector<16x256xf32>
    %c211_i32 = arith.constant 211 : i32
    %356 = tpu.dynamic_rotate %23 by %c211_i32 dim 1 : vector<16x256xf32>, i32 -> vector<16x256xf32>
    %357 = vector.extract_strided_slice %24 {offsets = [0, 42], sizes = [16, 1], strides = [1, 1]} : vector<16x49xf32> to vector<16x1xf32>
    %c42 = arith.constant 42 : index
    %c0_56 = arith.constant 0 : index
    %358 = vector.load %arg6[%c42, %c0_56] : memref<49x256xf32, #tpu.memory_space<vmem>>, vector<1x256xf32>
    %359 = vector.broadcast %358 : vector<1x256xf32> to vector<16x256xf32>
    %360 = arith.mulf %359, %356 : vector<16x256xf32>
    %361 = vector.broadcast %357 : vector<16x1xf32> to vector<16x256xf32>
    %362 = arith.mulf %361, %360 : vector<16x256xf32>
    %363 = arith.addf %355, %362 : vector<16x256xf32>
    %c210_i32 = arith.constant 210 : i32
    %364 = tpu.dynamic_rotate %23 by %c210_i32 dim 1 : vector<16x256xf32>, i32 -> vector<16x256xf32>
    %365 = vector.extract_strided_slice %24 {offsets = [0, 43], sizes = [16, 1], strides = [1, 1]} : vector<16x49xf32> to vector<16x1xf32>
    %c43 = arith.constant 43 : index
    %c0_57 = arith.constant 0 : index
    %366 = vector.load %arg6[%c43, %c0_57] : memref<49x256xf32, #tpu.memory_space<vmem>>, vector<1x256xf32>
    %367 = vector.broadcast %366 : vector<1x256xf32> to vector<16x256xf32>
    %368 = arith.mulf %367, %364 : vector<16x256xf32>
    %369 = vector.broadcast %365 : vector<16x1xf32> to vector<16x256xf32>
    %370 = arith.mulf %369, %368 : vector<16x256xf32>
    %371 = arith.addf %363, %370 : vector<16x256xf32>
    %c209_i32 = arith.constant 209 : i32
    %372 = tpu.dynamic_rotate %23 by %c209_i32 dim 1 : vector<16x256xf32>, i32 -> vector<16x256xf32>
    %373 = vector.extract_strided_slice %24 {offsets = [0, 44], sizes = [16, 1], strides = [1, 1]} : vector<16x49xf32> to vector<16x1xf32>
    %c44 = arith.constant 44 : index
    %c0_58 = arith.constant 0 : index
    %374 = vector.load %arg6[%c44, %c0_58] : memref<49x256xf32, #tpu.memory_space<vmem>>, vector<1x256xf32>
    %375 = vector.broadcast %374 : vector<1x256xf32> to vector<16x256xf32>
    %376 = arith.mulf %375, %372 : vector<16x256xf32>
    %377 = vector.broadcast %373 : vector<16x1xf32> to vector<16x256xf32>
    %378 = arith.mulf %377, %376 : vector<16x256xf32>
    %379 = arith.addf %371, %378 : vector<16x256xf32>
    %c208_i32 = arith.constant 208 : i32
    %380 = tpu.dynamic_rotate %23 by %c208_i32 dim 1 : vector<16x256xf32>, i32 -> vector<16x256xf32>
    %381 = vector.extract_strided_slice %24 {offsets = [0, 45], sizes = [16, 1], strides = [1, 1]} : vector<16x49xf32> to vector<16x1xf32>
    %c45 = arith.constant 45 : index
    %c0_59 = arith.constant 0 : index
    %382 = vector.load %arg6[%c45, %c0_59] : memref<49x256xf32, #tpu.memory_space<vmem>>, vector<1x256xf32>
    %383 = vector.broadcast %382 : vector<1x256xf32> to vector<16x256xf32>
    %384 = arith.mulf %383, %380 : vector<16x256xf32>
    %385 = vector.broadcast %381 : vector<16x1xf32> to vector<16x256xf32>
    %386 = arith.mulf %385, %384 : vector<16x256xf32>
    %387 = arith.addf %379, %386 : vector<16x256xf32>
    %c207_i32 = arith.constant 207 : i32
    %388 = tpu.dynamic_rotate %23 by %c207_i32 dim 1 : vector<16x256xf32>, i32 -> vector<16x256xf32>
    %389 = vector.extract_strided_slice %24 {offsets = [0, 46], sizes = [16, 1], strides = [1, 1]} : vector<16x49xf32> to vector<16x1xf32>
    %c46 = arith.constant 46 : index
    %c0_60 = arith.constant 0 : index
    %390 = vector.load %arg6[%c46, %c0_60] : memref<49x256xf32, #tpu.memory_space<vmem>>, vector<1x256xf32>
    %391 = vector.broadcast %390 : vector<1x256xf32> to vector<16x256xf32>
    %392 = arith.mulf %391, %388 : vector<16x256xf32>
    %393 = vector.broadcast %389 : vector<16x1xf32> to vector<16x256xf32>
    %394 = arith.mulf %393, %392 : vector<16x256xf32>
    %395 = arith.addf %387, %394 : vector<16x256xf32>
    %c206_i32 = arith.constant 206 : i32
    %396 = tpu.dynamic_rotate %23 by %c206_i32 dim 1 : vector<16x256xf32>, i32 -> vector<16x256xf32>
    %397 = vector.extract_strided_slice %24 {offsets = [0, 47], sizes = [16, 1], strides = [1, 1]} : vector<16x49xf32> to vector<16x1xf32>
    %c47 = arith.constant 47 : index
    %c0_61 = arith.constant 0 : index
    %398 = vector.load %arg6[%c47, %c0_61] : memref<49x256xf32, #tpu.memory_space<vmem>>, vector<1x256xf32>
    %399 = vector.broadcast %398 : vector<1x256xf32> to vector<16x256xf32>
    %400 = arith.mulf %399, %396 : vector<16x256xf32>
    %401 = vector.broadcast %397 : vector<16x1xf32> to vector<16x256xf32>
    %402 = arith.mulf %401, %400 : vector<16x256xf32>
    %403 = arith.addf %395, %402 : vector<16x256xf32>
    %c205_i32 = arith.constant 205 : i32
    %404 = tpu.dynamic_rotate %23 by %c205_i32 dim 1 : vector<16x256xf32>, i32 -> vector<16x256xf32>
    %405 = vector.extract_strided_slice %24 {offsets = [0, 48], sizes = [16, 1], strides = [1, 1]} : vector<16x49xf32> to vector<16x1xf32>
    %c48 = arith.constant 48 : index
    %c0_62 = arith.constant 0 : index
    %406 = vector.load %arg6[%c48, %c0_62] : memref<49x256xf32, #tpu.memory_space<vmem>>, vector<1x256xf32>
    %407 = vector.broadcast %406 : vector<1x256xf32> to vector<16x256xf32>
    %408 = arith.mulf %407, %404 : vector<16x256xf32>
    %409 = vector.broadcast %405 : vector<16x1xf32> to vector<16x256xf32>
    %410 = arith.mulf %409, %408 : vector<16x256xf32>
    %411 = arith.addf %403, %410 : vector<16x256xf32>
    %c0_63 = arith.constant 0 : index
    %c2_64 = arith.constant 2 : index
    %412 = vector.load %arg5[%c0_63, %c2_64] : memref<16x8xf32, #tpu.memory_space<vmem>>, vector<16x1xf32>
    %413 = vector.broadcast %412 : vector<16x1xf32> to vector<16x256xf32>
    %414 = arith.addf %411, %413 : vector<16x256xf32>
    %415 = arith.addf %414, %23 : vector<16x256xf32>
    %416 = arith.mulf %415, %415 : vector<16x256xf32>
    %417 = arith.mulf %415, %416 : vector<16x256xf32>
    %cst_65 = arith.constant 4.471500e-02 : f32
    %418 = vector.broadcast %cst_65 : f32 to vector<16x256xf32>
    %419 = arith.mulf %418, %417 : vector<16x256xf32>
    %420 = arith.addf %415, %419 : vector<16x256xf32>
    %cst_66 = arith.constant 0.797884583 : f32
    %421 = vector.broadcast %cst_66 : f32 to vector<16x256xf32>
    %422 = arith.mulf %421, %420 : vector<16x256xf32>
    %423 = math.tanh %422 : vector<16x256xf32>
    %cst_67 = arith.constant 1.000000e+00 : f32
    %424 = vector.broadcast %cst_67 : f32 to vector<16x256xf32>
    %425 = arith.addf %424, %423 : vector<16x256xf32>
    %cst_68 = arith.constant 5.000000e-01 : f32
    %426 = vector.broadcast %cst_68 : f32 to vector<16x256xf32>
    %427 = arith.mulf %426, %425 : vector<16x256xf32>
    %428 = arith.mulf %415, %427 : vector<16x256xf32>
    %c0_69 = arith.constant 0 : index
    %c3_70 = arith.constant 3 : index
    %429 = vector.load %arg5[%c0_69, %c3_70] : memref<16x8xf32, #tpu.memory_space<vmem>>, vector<16x1xf32>
    %430 = vector.broadcast %429 : vector<16x1xf32> to vector<16x256xf32>
    %431 = arith.mulf %428, %430 : vector<16x256xf32>
    %c0_71 = arith.constant 0 : index
    %c4_72 = arith.constant 4 : index
    %432 = vector.load %arg5[%c0_71, %c4_72] : memref<16x8xf32, #tpu.memory_space<vmem>>, vector<16x1xf32>
    %433 = vector.broadcast %432 : vector<16x1xf32> to vector<16x256xf32>
    %434 = arith.addf %431, %433 : vector<16x256xf32>
    %c0_73 = arith.constant 0 : index
    %c0_74 = arith.constant 0 : index
    %435 = vector.load %arg3[%c0_73, %c0_74] : memref<16x16xbf16, #tpu.memory_space<vmem>>, vector<16x16xbf16>
    %436 = arith.truncf %434 : vector<16x256xf32> to vector<16x256xbf16>
    %cst_75 = arith.constant dense<0.000000e+00> : vector<16x256xf32>
    %437 = tpu.matmul %435, %436, %cst_75 {dimension_numbers = #tpu.dot_dimension_numbers<[1], [0], [0], [1], [0, 0, 1, 1], [], []>} : vector<16x16xbf16>, vector<16x256xbf16>, vector<16x256xf32> -> vector<16x256xf32>
    %c0_76 = arith.constant 0 : index
    %c5_77 = arith.constant 5 : index
    %438 = vector.load %arg5[%c0_76, %c5_77] : memref<16x8xf32, #tpu.memory_space<vmem>>, vector<16x1xf32>
    %439 = vector.broadcast %438 : vector<16x1xf32> to vector<16x256xf32>
    %440 = arith.mulf %437, %439 : vector<16x256xf32>
    %c0_78 = arith.constant 0 : index
    %c6_79 = arith.constant 6 : index
    %441 = vector.load %arg5[%c0_78, %c6_79] : memref<16x8xf32, #tpu.memory_space<vmem>>, vector<16x1xf32>
    %442 = vector.broadcast %441 : vector<16x1xf32> to vector<16x256xf32>
    %443 = arith.addf %440, %442 : vector<16x256xf32>
    %444 = arith.truncf %443 : vector<16x256xf32> to vector<16x256xbf16>
    %c0_80 = arith.constant 0 : index
    %c0_81 = arith.constant 0 : index
    %445 = vector.load %arg7[%c0_80, %c0_81] : memref<256x10xbf16, #tpu.memory_space<vmem>>, vector<256x10xbf16>
    %cst_82 = arith.constant dense<0.000000e+00> : vector<16x10xf32>
    %446 = tpu.matmul %444, %445, %cst_82 {dimension_numbers = #tpu.dot_dimension_numbers<[1], [0], [0], [1], [0, 0, 1, 1], [], []>} : vector<16x256xbf16>, vector<256x10xbf16>, vector<16x10xf32> -> vector<16x10xf32>
    %c0_83 = arith.constant 0 : index
    %c0_84 = arith.constant 0 : index
    %447 = vector.load %arg8[%c0_83, %c0_84] : memref<4x16xbf16, #tpu.memory_space<vmem>>, vector<4x16xbf16>
    %448 = arith.truncf %446 : vector<16x10xf32> to vector<16x10xbf16>
    %cst_85 = arith.constant dense<0.000000e+00> : vector<4x10xf32>
    %449 = tpu.matmul %447, %448, %cst_85 {dimension_numbers = #tpu.dot_dimension_numbers<[1], [0], [0], [1], [0, 0, 1, 1], [], []>} : vector<4x16xbf16>, vector<16x10xbf16>, vector<4x10xf32> -> vector<4x10xf32>
    %c0_86 = arith.constant 0 : index
    %c0_87 = arith.constant 0 : index
    %450 = vector.load %arg9[%c0_86, %c0_87] : memref<4x2xf32, #tpu.memory_space<vmem>>, vector<4x1xf32>
    %451 = vector.broadcast %450 : vector<4x1xf32> to vector<4x10xf32>
    %452 = arith.mulf %449, %451 : vector<4x10xf32>
    %c0_88 = arith.constant 0 : index
    %c1_89 = arith.constant 1 : index
    %453 = vector.load %arg9[%c0_88, %c1_89] : memref<4x2xf32, #tpu.memory_space<vmem>>, vector<4x1xf32>
    %454 = vector.broadcast %453 : vector<4x1xf32> to vector<4x10xf32>
    %455 = arith.addf %452, %454 : vector<4x10xf32>
    %456 = arith.mulf %455, %455 : vector<4x10xf32>
    %457 = arith.mulf %455, %456 : vector<4x10xf32>
    %cst_90 = arith.constant 4.471500e-02 : f32
    %458 = vector.broadcast %cst_90 : f32 to vector<4x10xf32>
    %459 = arith.mulf %458, %457 : vector<4x10xf32>
    %460 = arith.addf %455, %459 : vector<4x10xf32>
    %cst_91 = arith.constant 0.797884583 : f32
    %461 = vector.broadcast %cst_91 : f32 to vector<4x10xf32>
    %462 = arith.mulf %461, %460 : vector<4x10xf32>
    %463 = math.tanh %462 : vector<4x10xf32>
    %cst_92 = arith.constant 1.000000e+00 : f32
    %464 = vector.broadcast %cst_92 : f32 to vector<4x10xf32>
    %465 = arith.addf %464, %463 : vector<4x10xf32>
    %cst_93 = arith.constant 5.000000e-01 : f32
    %466 = vector.broadcast %cst_93 : f32 to vector<4x10xf32>
    %467 = arith.mulf %466, %465 : vector<4x10xf32>
    %468 = arith.mulf %455, %467 : vector<4x10xf32>
    %c0_94 = arith.constant 0 : index
    %c0_95 = arith.constant 0 : index
    %469 = vector.load %arg10[%c0_94, %c0_95] : memref<32x4xbf16, #tpu.memory_space<vmem>>, vector<32x4xbf16>
    %470 = arith.truncf %468 : vector<4x10xf32> to vector<4x10xbf16>
    %cst_96 = arith.constant dense<0.000000e+00> : vector<32x10xf32>
    %471 = tpu.matmul %469, %470, %cst_96 {dimension_numbers = #tpu.dot_dimension_numbers<[1], [0], [0], [1], [0, 0, 1, 1], [], []>} : vector<32x4xbf16>, vector<4x10xbf16>, vector<32x10xf32> -> vector<32x10xf32>
    %c0_97 = arith.constant 0 : index
    %c0_98 = arith.constant 0 : index
    %472 = vector.load %arg11[%c0_97, %c0_98] : memref<32x1xf32, #tpu.memory_space<vmem>>, vector<32x1xf32>
    %473 = vector.broadcast %472 : vector<32x1xf32> to vector<32x10xf32>
    %474 = arith.addf %471, %473 : vector<32x10xf32>
    %475 = vector.extract_strided_slice %474 {offsets = [0, 0], sizes = [16, 10], strides = [1, 1]} : vector<32x10xf32> to vector<16x10xf32>
    %476 = vector.extract_strided_slice %474 {offsets = [16, 0], sizes = [16, 10], strides = [1, 1]} : vector<32x10xf32> to vector<16x10xf32>
    %477 = arith.maximumf %475, %476 : vector<16x10xf32>
    %478 = arith.subf %475, %477 : vector<16x10xf32>
    %479 = math.exp %478 : vector<16x10xf32>
    %480 = arith.subf %476, %477 : vector<16x10xf32>
    %481 = math.exp %480 : vector<16x10xf32>
    %482 = arith.addf %479, %481 : vector<16x10xf32>
    %483 = tpu.reciprocal %482 {approx = true} : vector<16x10xf32> -> vector<16x10xf32>
    %c0_99 = arith.constant 0 : index
    %c0_100 = arith.constant 0 : index
    %484 = vector.load %arg12[%c0_99, %c0_100] : memref<32x10xf32, #tpu.memory_space<vmem>>, vector<32x10xf32>
    %485 = vector.extract_strided_slice %484 {offsets = [0, 0], sizes = [16, 10], strides = [1, 1]} : vector<32x10xf32> to vector<16x10xf32>
    %486 = arith.mulf %479, %485 : vector<16x10xf32>
    %487 = vector.extract_strided_slice %484 {offsets = [16, 0], sizes = [16, 10], strides = [1, 1]} : vector<32x10xf32> to vector<16x10xf32>
    %488 = arith.mulf %481, %487 : vector<16x10xf32>
    %489 = arith.addf %486, %488 : vector<16x10xf32>
    %490 = arith.mulf %489, %483 : vector<16x10xf32>
    %491 = vector.extract_strided_slice %490 {offsets = [0, 4], sizes = [16, 1], strides = [1, 1]} : vector<16x10xf32> to vector<16x1xf32>
    %492 = vector.broadcast %491 : vector<16x1xf32> to vector<16x256xf32>
    %493 = arith.mulf %492, %443 : vector<16x256xf32>
    %c17_i32_101 = arith.constant 17 : i32
    %494 = tpu.dynamic_rotate %443 by %c17_i32_101 dim 1 : vector<16x256xf32>, i32 -> vector<16x256xf32>
    %495 = vector.extract_strided_slice %490 {offsets = [0, 0], sizes = [16, 1], strides = [1, 1]} : vector<16x10xf32> to vector<16x1xf32>
    %c0_102 = arith.constant 0 : index
    %c0_103 = arith.constant 0 : index
    %496 = vector.load %arg13[%c0_102, %c0_103] : memref<9x256xf32, #tpu.memory_space<vmem>>, vector<1x256xf32>
    %497 = vector.broadcast %496 : vector<1x256xf32> to vector<16x256xf32>
    %498 = arith.mulf %497, %494 : vector<16x256xf32>
    %499 = vector.broadcast %495 : vector<16x1xf32> to vector<16x256xf32>
    %500 = arith.mulf %499, %498 : vector<16x256xf32>
    %501 = arith.addf %493, %500 : vector<16x256xf32>
    %c16_i32_104 = arith.constant 16 : i32
    %502 = tpu.dynamic_rotate %443 by %c16_i32_104 dim 1 : vector<16x256xf32>, i32 -> vector<16x256xf32>
    %503 = vector.extract_strided_slice %490 {offsets = [0, 1], sizes = [16, 1], strides = [1, 1]} : vector<16x10xf32> to vector<16x1xf32>
    %c1_105 = arith.constant 1 : index
    %c0_106 = arith.constant 0 : index
    %504 = vector.load %arg13[%c1_105, %c0_106] : memref<9x256xf32, #tpu.memory_space<vmem>>, vector<1x256xf32>
    %505 = vector.broadcast %504 : vector<1x256xf32> to vector<16x256xf32>
    %506 = arith.mulf %505, %502 : vector<16x256xf32>
    %507 = vector.broadcast %503 : vector<16x1xf32> to vector<16x256xf32>
    %508 = arith.mulf %507, %506 : vector<16x256xf32>
    %509 = arith.addf %501, %508 : vector<16x256xf32>
    %c15_i32_107 = arith.constant 15 : i32
    %510 = tpu.dynamic_rotate %443 by %c15_i32_107 dim 1 : vector<16x256xf32>, i32 -> vector<16x256xf32>
    %511 = vector.extract_strided_slice %490 {offsets = [0, 2], sizes = [16, 1], strides = [1, 1]} : vector<16x10xf32> to vector<16x1xf32>
    %c2_108 = arith.constant 2 : index
    %c0_109 = arith.constant 0 : index
    %512 = vector.load %arg13[%c2_108, %c0_109] : memref<9x256xf32, #tpu.memory_space<vmem>>, vector<1x256xf32>
    %513 = vector.broadcast %512 : vector<1x256xf32> to vector<16x256xf32>
    %514 = arith.mulf %513, %510 : vector<16x256xf32>
    %515 = vector.broadcast %511 : vector<16x1xf32> to vector<16x256xf32>
    %516 = arith.mulf %515, %514 : vector<16x256xf32>
    %517 = arith.addf %509, %516 : vector<16x256xf32>
    %c1_i32_110 = arith.constant 1 : i32
    %518 = tpu.dynamic_rotate %443 by %c1_i32_110 dim 1 : vector<16x256xf32>, i32 -> vector<16x256xf32>
    %519 = vector.extract_strided_slice %490 {offsets = [0, 3], sizes = [16, 1], strides = [1, 1]} : vector<16x10xf32> to vector<16x1xf32>
    %c3_111 = arith.constant 3 : index
    %c0_112 = arith.constant 0 : index
    %520 = vector.load %arg13[%c3_111, %c0_112] : memref<9x256xf32, #tpu.memory_space<vmem>>, vector<1x256xf32>
    %521 = vector.broadcast %520 : vector<1x256xf32> to vector<16x256xf32>
    %522 = arith.mulf %521, %518 : vector<16x256xf32>
    %523 = vector.broadcast %519 : vector<16x1xf32> to vector<16x256xf32>
    %524 = arith.mulf %523, %522 : vector<16x256xf32>
    %525 = arith.addf %517, %524 : vector<16x256xf32>
    %c255_i32_113 = arith.constant 255 : i32
    %526 = tpu.dynamic_rotate %443 by %c255_i32_113 dim 1 : vector<16x256xf32>, i32 -> vector<16x256xf32>
    %527 = vector.extract_strided_slice %490 {offsets = [0, 5], sizes = [16, 1], strides = [1, 1]} : vector<16x10xf32> to vector<16x1xf32>
    %c5_114 = arith.constant 5 : index
    %c0_115 = arith.constant 0 : index
    %528 = vector.load %arg13[%c5_114, %c0_115] : memref<9x256xf32, #tpu.memory_space<vmem>>, vector<1x256xf32>
    %529 = vector.broadcast %528 : vector<1x256xf32> to vector<16x256xf32>
    %530 = arith.mulf %529, %526 : vector<16x256xf32>
    %531 = vector.broadcast %527 : vector<16x1xf32> to vector<16x256xf32>
    %532 = arith.mulf %531, %530 : vector<16x256xf32>
    %533 = arith.addf %525, %532 : vector<16x256xf32>
    %c241_i32_116 = arith.constant 241 : i32
    %534 = tpu.dynamic_rotate %443 by %c241_i32_116 dim 1 : vector<16x256xf32>, i32 -> vector<16x256xf32>
    %535 = vector.extract_strided_slice %490 {offsets = [0, 6], sizes = [16, 1], strides = [1, 1]} : vector<16x10xf32> to vector<16x1xf32>
    %c6_117 = arith.constant 6 : index
    %c0_118 = arith.constant 0 : index
    %536 = vector.load %arg13[%c6_117, %c0_118] : memref<9x256xf32, #tpu.memory_space<vmem>>, vector<1x256xf32>
    %537 = vector.broadcast %536 : vector<1x256xf32> to vector<16x256xf32>
    %538 = arith.mulf %537, %534 : vector<16x256xf32>
    %539 = vector.broadcast %535 : vector<16x1xf32> to vector<16x256xf32>
    %540 = arith.mulf %539, %538 : vector<16x256xf32>
    %541 = arith.addf %533, %540 : vector<16x256xf32>
    %c240_i32_119 = arith.constant 240 : i32
    %542 = tpu.dynamic_rotate %443 by %c240_i32_119 dim 1 : vector<16x256xf32>, i32 -> vector<16x256xf32>
    %543 = vector.extract_strided_slice %490 {offsets = [0, 7], sizes = [16, 1], strides = [1, 1]} : vector<16x10xf32> to vector<16x1xf32>
    %c7_120 = arith.constant 7 : index
    %c0_121 = arith.constant 0 : index
    %544 = vector.load %arg13[%c7_120, %c0_121] : memref<9x256xf32, #tpu.memory_space<vmem>>, vector<1x256xf32>
    %545 = vector.broadcast %544 : vector<1x256xf32> to vector<16x256xf32>
    %546 = arith.mulf %545, %542 : vector<16x256xf32>
    %547 = vector.broadcast %543 : vector<16x1xf32> to vector<16x256xf32>
    %548 = arith.mulf %547, %546 : vector<16x256xf32>
    %549 = arith.addf %541, %548 : vector<16x256xf32>
    %c239_i32_122 = arith.constant 239 : i32
    %550 = tpu.dynamic_rotate %443 by %c239_i32_122 dim 1 : vector<16x256xf32>, i32 -> vector<16x256xf32>
    %551 = vector.extract_strided_slice %490 {offsets = [0, 8], sizes = [16, 1], strides = [1, 1]} : vector<16x10xf32> to vector<16x1xf32>
    %c8_123 = arith.constant 8 : index
    %c0_124 = arith.constant 0 : index
    %552 = vector.load %arg13[%c8_123, %c0_124] : memref<9x256xf32, #tpu.memory_space<vmem>>, vector<1x256xf32>
    %553 = vector.broadcast %552 : vector<1x256xf32> to vector<16x256xf32>
    %554 = arith.mulf %553, %550 : vector<16x256xf32>
    %555 = vector.broadcast %551 : vector<16x1xf32> to vector<16x256xf32>
    %556 = arith.mulf %555, %554 : vector<16x256xf32>
    %557 = arith.addf %549, %556 : vector<16x256xf32>
    %558 = vector.extract_strided_slice %490 {offsets = [0, 9], sizes = [16, 1], strides = [1, 1]} : vector<16x10xf32> to vector<16x1xf32>
    %559 = vector.broadcast %558 : vector<16x1xf32> to vector<16x256xf32>
    %560 = arith.addf %557, %559 : vector<16x256xf32>
    %cst_125 = arith.constant dense<0.000000e+00> : vector<16xf32>
    %561 = vector.multi_reduction <add>, %560, %cst_125 [1] : vector<16x256xf32> to vector<16xf32>
    %562 = vector.shape_cast %561 : vector<16xf32> to vector<16x1xf32>
    %cst_126 = arith.constant 3.906250e-03 : f32
    %563 = vector.broadcast %cst_126 : f32 to vector<16x1xf32>
    %564 = arith.mulf %562, %563 : vector<16x1xf32>
    %c0_127 = arith.constant 0 : index
    %c0_128 = arith.constant 0 : index
    %565 = vector.load %arg14[%c0_127, %c0_128] : memref<16x2xf32, #tpu.memory_space<vmem>>, vector<16x2xf32>
    %566 = vector.broadcast %564 : vector<16x1xf32> to vector<16x2xf32>
    %567 = arith.mulf %565, %566 : vector<16x2xf32>
    %cst_129 = arith.constant dense<0.000000e+00> : vector<2xf32>
    %568 = vector.multi_reduction <add>, %567, %cst_129 [0] : vector<16x2xf32> to vector<2xf32>
    %569 = vector.shape_cast %568 : vector<2xf32> to vector<1x2xf32>
    %cst_130 = arith.constant 0.000000e+00 : f32
    %570 = vector.broadcast %cst_130 : f32 to vector<1x2xf32>
    %571 = arith.maximumf %569, %570 : vector<1x2xf32>
    %c0_131 = arith.constant 0 : index
    %c0_132 = arith.constant 0 : index
    %572 = vector.load %arg15[%c0_131, %c0_132] : memref<16x2xf32, #tpu.memory_space<vmem>>, vector<16x2xf32>
    %573 = vector.broadcast %571 : vector<1x2xf32> to vector<16x2xf32>
    %574 = arith.mulf %572, %573 : vector<16x2xf32>
    %cst_133 = arith.constant dense<0.000000e+00> : vector<16xf32>
    %575 = vector.multi_reduction <add>, %574, %cst_133 [1] : vector<16x2xf32> to vector<16xf32>
    %576 = vector.shape_cast %575 : vector<16xf32> to vector<16x1xf32>
    %577 = arith.negf %576 : vector<16x1xf32>
    %578 = math.exp %577 : vector<16x1xf32>
    %cst_134 = arith.constant 1.000000e+00 : f32
    %579 = vector.broadcast %cst_134 : f32 to vector<16x1xf32>
    %580 = arith.addf %579, %578 : vector<16x1xf32>
    %581 = arith.divf %579, %580 : vector<16x1xf32>
    %582 = vector.broadcast %581 : vector<16x1xf32> to vector<16x256xf32>
    %583 = arith.mulf %560, %582 : vector<16x256xf32>
    %584 = arith.negf %583 : vector<16x256xf32>
    %585 = math.exp %584 : vector<16x256xf32>
    %cst_135 = arith.constant 1.000000e+00 : f32
    %586 = vector.broadcast %cst_135 : f32 to vector<16x256xf32>
    %587 = arith.addf %586, %585 : vector<16x256xf32>
    %588 = arith.divf %586, %587 : vector<16x256xf32>
    %589 = arith.addf %1, %588 : vector<16x256xf32>
    %c0_136 = arith.constant 0 : index
    %c0_137 = arith.constant 0 : index
    %c0_138 = arith.constant 0 : index
    %590 = vector.load %arg16[%c0_136, %c0_137, %c0_138] : memref<1x16x256xf32, #tpu.memory_space<vmem>>, vector<1x16x256xf32>
    %591 = vector.shape_cast %590 : vector<1x16x256xf32> to vector<16x256xf32>
    %592 = vector.shape_cast %589 : vector<16x256xf32> to vector<1x16x256xf32>
    tpu.vector_store %arg16[%c0_136, %c0_137, %c0_138], %592 {strides = array<i32>} : memref<1x16x256xf32, #tpu.memory_space<vmem>>, vector<1x16x256xf32>,
    return
  }
  func.func @transform_0(%arg0: i32) -> (i32, i32, i32) {
    %c0_i32 = arith.constant 0 : i32
    %c0_i32_0 = arith.constant 0 : i32
    %c0_i32_1 = arith.constant 0 : i32
    return %arg0, %c0_i32, %c0_i32_0 : i32, i32, i32
  }
  func.func @transform_1(%arg0: i32) -> (i32, i32) {
    %c0_i32 = arith.constant 0 : i32
    %c0_i32_0 = arith.constant 0 : i32
    %c0_i32_1 = arith.constant 0 : i32
    return %c0_i32, %c0_i32_0 : i32, i32
  }
  func.func @transform_2(%arg0: i32) -> (i32, i32) {
    %c0_i32 = arith.constant 0 : i32
    %c0_i32_0 = arith.constant 0 : i32
    %c0_i32_1 = arith.constant 0 : i32
    return %c0_i32, %c0_i32_0 : i32, i32
  }
  func.func @transform_3(%arg0: i32) -> (i32, i32) {
    %c0_i32 = arith.constant 0 : i32
    %c0_i32_0 = arith.constant 0 : i32
    %c0_i32_1 = arith.constant 0 : i32
    return %c0_i32, %c0_i32_0 : i32, i32
  }
  func.func @transform_4(%arg0: i32) -> (i32, i32) {
    %c0_i32 = arith.constant 0 : i32
    %c0_i32_0 = arith.constant 0 : i32
    %c0_i32_1 = arith.constant 0 : i32
    return %c0_i32, %c0_i32_0 : i32, i32
  }
  func.func @transform_5(%arg0: i32) -> (i32, i32) {
    %c0_i32 = arith.constant 0 : i32
    %c0_i32_0 = arith.constant 0 : i32
    %c0_i32_1 = arith.constant 0 : i32
    return %c0_i32, %c0_i32_0 : i32, i32
  }
  func.func @transform_6(%arg0: i32) -> (i32, i32) {
    %c0_i32 = arith.constant 0 : i32
    %c0_i32_0 = arith.constant 0 : i32
    %c0_i32_1 = arith.constant 0 : i32
    return %c0_i32, %c0_i32_0 : i32, i32
  }
  func.func @transform_7(%arg0: i32) -> (i32, i32) {
    %c0_i32 = arith.constant 0 : i32
    %c0_i32_0 = arith.constant 0 : i32
    %c0_i32_1 = arith.constant 0 : i32
    return %c0_i32, %c0_i32_0 : i32, i32
  }
  func.func @transform_8(%arg0: i32) -> (i32, i32) {
    %c0_i32 = arith.constant 0 : i32
    %c0_i32_0 = arith.constant 0 : i32
    %c0_i32_1 = arith.constant 0 : i32
    return %c0_i32, %c0_i32_0 : i32, i32
  }
  func.func @transform_9(%arg0: i32) -> (i32, i32) {
    %c0_i32 = arith.constant 0 : i32
    %c0_i32_0 = arith.constant 0 : i32
    %c0_i32_1 = arith.constant 0 : i32
    return %c0_i32, %c0_i32_0 : i32, i32
  }
  func.func @transform_10(%arg0: i32) -> (i32, i32) {
    %c0_i32 = arith.constant 0 : i32
    %c0_i32_0 = arith.constant 0 : i32
    %c0_i32_1 = arith.constant 0 : i32
    return %c0_i32, %c0_i32_0 : i32, i32
  }
  func.func @transform_11(%arg0: i32) -> (i32, i32) {
    %c0_i32 = arith.constant 0 : i32
    %c0_i32_0 = arith.constant 0 : i32
    %c0_i32_1 = arith.constant 0 : i32
    return %c0_i32, %c0_i32_0 : i32, i32
  }
  func.func @transform_12(%arg0: i32) -> (i32, i32) {
    %c0_i32 = arith.constant 0 : i32
    %c0_i32_0 = arith.constant 0 : i32
    %c0_i32_1 = arith.constant 0 : i32
    return %c0_i32, %c0_i32_0 : i32, i32
  }
  func.func @transform_13(%arg0: i32) -> (i32, i32) {
    %c0_i32 = arith.constant 0 : i32
    %c0_i32_0 = arith.constant 0 : i32
    %c0_i32_1 = arith.constant 0 : i32
    return %c0_i32, %c0_i32_0 : i32, i32
  }
  func.func @transform_14(%arg0: i32) -> (i32, i32) {
    %c0_i32 = arith.constant 0 : i32
    %c0_i32_0 = arith.constant 0 : i32
    %c0_i32_1 = arith.constant 0 : i32
    return %c0_i32, %c0_i32_0 : i32, i32
  }
  func.func @transform_15(%arg0: i32) -> (i32, i32, i32) {
    %c0_i32 = arith.constant 0 : i32
    %c0_i32_0 = arith.constant 0 : i32
    %c0_i32_1 = arith.constant 0 : i32
    return %arg0, %c0_i32, %c0_i32_0 : i32, i32, i32
  }
}

</mosaic_0001>

<llo_original>
// kernel: luky_forward.1
$region0: #{luky_forward.1}
  #allocation0 [shape = 'u32[]', space=smem, size = 0x4, offset = 0x4, fixed_abs, tag = 'smem constant byte address 0x4 - core index']
  #allocation1 [shape = 'u32[72,128]{1,0:T(1,128)}', space=vmem, size = 0x9000, scoped, tag = 'internal scratch']
  %s0 = inlined_call_operand.vmem [shape: f32[2,16,256], index: 0, kind: input, shape index: {}]
  %s1 = inlined_call_operand.vmem [shape: bf16[16,16], index: 1, kind: input, shape index: {}]
  %s2 = inlined_call_operand.vmem [shape: bf16[16,16], index: 2, kind: input, shape index: {}]
  %s3 = inlined_call_operand.vmem [shape: f32[16,49], index: 3, kind: input, shape index: {}]
  %s4 = inlined_call_operand.vmem [shape: f32[16,8], index: 4, kind: input, shape index: {}]
  %s5 = inlined_call_operand.vmem [shape: f32[49,256], index: 5, kind: input, shape index: {}]
  %s6 = inlined_call_operand.vmem [shape: bf16[256,10], index: 6, kind: input, shape index: {}]
  %s7 = inlined_call_operand.vmem [shape: bf16[4,16], index: 7, kind: input, shape index: {}]
  %s8 = inlined_call_operand.vmem [shape: f32[4,2], index: 8, kind: input, shape index: {}]
  %s9 = inlined_call_operand.vmem [shape: bf16[32,4], index: 9, kind: input, shape index: {}]
  %s10 = inlined_call_operand.vmem [shape: f32[32,1], index: 10, kind: input, shape index: {}]
  %s11 = inlined_call_operand.vmem [shape: f32[32,10], index: 11, kind: input, shape index: {}]
  %s12 = inlined_call_operand.vmem [shape: f32[9,256], index: 12, kind: input, shape index: {}]
  %s13 = inlined_call_operand.vmem [shape: f32[16,2], index: 13, kind: input, shape index: {}]
  %s14 = inlined_call_operand.vmem [shape: f32[16,2], index: 14, kind: input, shape index: {}]
  %s15 = inlined_call_operand.vmem [shape: f32[2,16,256], index: 15, kind: output, shape index: {}]
  %s16 = sld [smem:[#allocation0]]
  $region93: #{luky_forward.1} parent=0
    _
  %s18 = ssub.s32 1, %s16
  %s19 = scalar_select 0, %s18, %s16
  loop: start=0, step=1, limit=4
  $region2: #{luky_forward.1} parent=0 // loop_pre_header
    _
  $region3: #{luky_forward.1} parent=0 // loop_header
    %s21 = sphi 0, %s25
    %p22 = scmp.ge.s32.totalorder %s21, 4
    %s31 = sphi 0, %s33
    %s34 = sphi 0, %s31
    %s35 = sphi 0, %s34
    %s51 = sphi 0, %s35
    %s55 = sphi 0, %s55
    %s57 = sphi 0, %s55
    %s58 = sphi 0, %s57
    %s72 = sphi 0, %s58
    %s76 = sphi 0, %s76
    %s78 = sphi 0, %s76
    %s79 = sphi 0, %s78
    %s93 = sphi 0, %s79
    %s97 = sphi 0, %s97
    %s99 = sphi 0, %s97
    %s100 = sphi 0, %s99
    %s114 = sphi 0, %s100
    %s118 = sphi 0, %s118
    %s120 = sphi 0, %s118
    %s121 = sphi 0, %s120
    %s135 = sphi 0, %s121
    %s139 = sphi 0, %s139
    %s141 = sphi 0, %s139
    %s142 = sphi 0, %s141
    %s156 = sphi 0, %s142
    %s160 = sphi 0, %s160
    %s162 = sphi 0, %s160
    %s163 = sphi 0, %s162
    %s177 = sphi 0, %s163
    %s181 = sphi 0, %s181
    %s183 = sphi 0, %s181
    %s184 = sphi 0, %s183
    %s198 = sphi 0, %s184
    %s202 = sphi 0, %s202
    %s204 = sphi 0, %s202
    %s205 = sphi 0, %s204
    %s219 = sphi 0, %s205
    %s223 = sphi 0, %s223
    %s225 = sphi 0, %s223
    %s226 = sphi 0, %s225
    %s240 = sphi 0, %s226
    %s244 = sphi 0, %s244
    %s246 = sphi 0, %s244
    %s247 = sphi 0, %s246
    %s261 = sphi 0, %s247
    %s265 = sphi 0, %s265
    %s267 = sphi 0, %s265
    %s268 = sphi 0, %s267
    %s282 = sphi 0, %s268
    %s286 = sphi 0, %s286
    %s288 = sphi 0, %s286
    %s289 = sphi 0, %s288
    %s303 = sphi 0, %s289
    %s307 = sphi 0, %s307
    %s309 = sphi 0, %s307
    %s310 = sphi 0, %s309
    %s324 = sphi 0, %s310
    %s328 = sphi 0, %s328
    %s330 = sphi 0, %s328
    %s331 = sphi 0, %s330
    %s345 = sphi 0, %s331
    %s351 = sphi 0, %s353
    %s354 = sphi 0, %s351
    %s355 = sphi 0, %s354
    %s371 = sphi 0, %s355
  $region4: #{luky_forward.1} parent=0 // loop_header_branch
    %24 = sbr.rel (%p22) target = $region8
  $region5: #{luky_forward.1} parent=0 // loop_body
    %s26 = ssub.s32 %s21, 1
    %s27 = ssub.s32 %s21, 2
    %s28 = sadd.s32 %s21, 1
    %s29 = ssub.s32 %s21, %s28
    %p30 = scmp.eq.s32.totalorder %s29, 0
    %s32 = sadd.s32 %s31, 1
    %s33 = scalar_select %p30, %s31, %s32
    %p36 = pneg %p30
    %p37 = scmp.eq.s32.totalorder %s21, 1
    %p38 = por %p36, %p37
    %p39 = scmp.ne.s32.totalorder %s31, %s34
    %p40 = scmp.eq.s32.totalorder %s21, 0
    %p41 = por %p39, %p40
    %p42 = scmp.ne.s32.totalorder %s31, %s34
    %p43 = scmp.eq.s32.totalorder %s26, 1
    %p44 = por %p42, %p43
    %p45 = scmp.ne.s32.totalorder %s34, %s35
    %p46 = scmp.eq.s32.totalorder %s26, 0
    %p47 = por %p45, %p46
    %p48 = scmp.ne.s32.totalorder %s34, %s35
    %p49 = scmp.eq.s32.totalorder %s27, 1
    %p50 = por %p48, %p49
    %p52 = scmp.ne.s32.totalorder %s35, %s51
    %p53 = scmp.eq.s32.totalorder %s27, 0
    %p54 = por %p52, %p53
    %s56 = sadd.s32 %s55, 1
    %p59 = scmp.eq.s32.totalorder %s21, 1
    %p60 = scmp.ne.s32.totalorder %s55, %s57
    %p61 = scmp.eq.s32.totalorder %s21, 0
    %p62 = por %p60, %p61
    %p63 = scmp.ne.s32.totalorder %s55, %s57
    %p64 = scmp.eq.s32.totalorder %s26, 1
    %p65 = por %p63, %p64
    %p66 = scmp.ne.s32.totalorder %s57, %s58
    %p67 = scmp.eq.s32.totalorder %s26, 0
    %p68 = por %p66, %p67
    %p69 = scmp.ne.s32.totalorder %s57, %s58
    %p70 = scmp.eq.s32.totalorder %s27, 1
    %p71 = por %p69, %p70
    %p73 = scmp.ne.s32.totalorder %s58, %s72
    %p74 = scmp.eq.s32.totalorder %s27, 0
    %p75 = por %p73, %p74
    %s77 = sadd.s32 %s76, 1
    %p80 = scmp.eq.s32.totalorder %s21, 1
    %p81 = scmp.ne.s32.totalorder %s76, %s78
    %p82 = scmp.eq.s32.totalorder %s21, 0
    %p83 = por %p81, %p82
    %p84 = scmp.ne.s32.totalorder %s76, %s78
    %p85 = scmp.eq.s32.totalorder %s26, 1
    %p86 = por %p84, %p85
    %p87 = scmp.ne.s32.totalorder %s78, %s79
    %p88 = scmp.eq.s32.totalorder %s26, 0
    %p89 = por %p87, %p88
    %p90 = scmp.ne.s32.totalorder %s78, %s79
    %p91 = scmp.eq.s32.totalorder %s27, 1
    %p92 = por %p90, %p91
    %p94 = scmp.ne.s32.totalorder %s79, %s93
    %p95 = scmp.eq.s32.totalorder %s27, 0
    %p96 = por %p94, %p95
    %s98 = sadd.s32 %s97, 1
    %p101 = scmp.eq.s32.totalorder %s21, 1
    %p102 = scmp.ne.s32.totalorder %s97, %s99
    %p103 = scmp.eq.s32.totalorder %s21, 0
    %p104 = por %p102, %p103
    %p105 = scmp.ne.s32.totalorder %s97, %s99
    %p106 = scmp.eq.s32.totalorder %s26, 1
    %p107 = por %p105, %p106
    %p108 = scmp.ne.s32.totalorder %s99, %s100
    %p109 = scmp.eq.s32.totalorder %s26, 0
    %p110 = por %p108, %p109
    %p111 = scmp.ne.s32.totalorder %s99, %s100
    %p112 = scmp.eq.s32.totalorder %s27, 1
    %p113 = por %p111, %p112
    %p115 = scmp.ne.s32.totalorder %s100, %s114
    %p116 = scmp.eq.s32.totalorder %s27, 0
    %p117 = por %p115, %p116
    %s119 = sadd.s32 %s118, 1
    %p122 = scmp.eq.s32.totalorder %s21, 1
    %p123 = scmp.ne.s32.totalorder %s118, %s120
    %p124 = scmp.eq.s32.totalorder %s21, 0
    %p125 = por %p123, %p124
    %p126 = scmp.ne.s32.totalorder %s118, %s120
    %p127 = scmp.eq.s32.totalorder %s26, 1
    %p128 = por %p126, %p127
    %p129 = scmp.ne.s32.totalorder %s120, %s121
    %p130 = scmp.eq.s32.totalorder %s26, 0
    %p131 = por %p129, %p130
    %p132 = scmp.ne.s32.totalorder %s120, %s121
    %p133 = scmp.eq.s32.totalorder %s27, 1
    %p134 = por %p132, %p133
    %p136 = scmp.ne.s32.totalorder %s121, %s135
    %p137 = scmp.eq.s32.totalorder %s27, 0
    %p138 = por %p136, %p137
    %s140 = sadd.s32 %s139, 1
    %p143 = scmp.eq.s32.totalorder %s21, 1
    %p144 = scmp.ne.s32.totalorder %s139, %s141
    %p145 = scmp.eq.s32.totalorder %s21, 0
    %p146 = por %p144, %p145
    %p147 = scmp.ne.s32.totalorder %s139, %s141
    %p148 = scmp.eq.s32.totalorder %s26, 1
    %p149 = por %p147, %p148
    %p150 = scmp.ne.s32.totalorder %s141, %s142
    %p151 = scmp.eq.s32.totalorder %s26, 0
    %p152 = por %p150, %p151
    %p153 = scmp.ne.s32.totalorder %s141, %s142
    %p154 = scmp.eq.s32.totalorder %s27, 1
    %p155 = por %p153, %p154
    %p157 = scmp.ne.s32.totalorder %s142, %s156
    %p158 = scmp.eq.s32.totalorder %s27, 0
    %p159 = por %p157, %p158
    %s161 = sadd.s32 %s160, 1
    %p164 = scmp.eq.s32.totalorder %s21, 1
    %p165 = scmp.ne.s32.totalorder %s160, %s162
    %p166 = scmp.eq.s32.totalorder %s21, 0
    %p167 = por %p165, %p166
    %p168 = scmp.ne.s32.totalorder %s160, %s162
    %p169 = scmp.eq.s32.totalorder %s26, 1
    %p170 = por %p168, %p169
    %p171 = scmp.ne.s32.totalorder %s162, %s163
    %p172 = scmp.eq.s32.totalorder %s26, 0
    %p173 = por %p171, %p172
    %p174 = scmp.ne.s32.totalorder %s162, %s163
    %p175 = scmp.eq.s32.totalorder %s27, 1
    %p176 = por %p174, %p175
    %p178 = scmp.ne.s32.totalorder %s163, %s177
    %p179 = scmp.eq.s32.totalorder %s27, 0
    %p180 = por %p178, %p179
    %s182 = sadd.s32 %s181, 1
    %p185 = scmp.eq.s32.totalorder %s21, 1
    %p186 = scmp.ne.s32.totalorder %s181, %s183
    %p187 = scmp.eq.s32.totalorder %s21, 0
    %p188 = por %p186, %p187
    %p189 = scmp.ne.s32.totalorder %s181, %s183
    %p190 = scmp.eq.s32.totalorder %s26, 1
    %p191 = por %p189, %p190
    %p192 = scmp.ne.s32.totalorder %s183, %s184
    %p193 = scmp.eq.s32.totalorder %s26, 0
    %p194 = por %p192, %p193
    %p195 = scmp.ne.s32.totalorder %s183, %s184
    %p196 = scmp.eq.s32.totalorder %s27, 1
    %p197 = por %p195, %p196
    %p199 = scmp.ne.s32.totalorder %s184, %s198
    %p200 = scmp.eq.s32.totalorder %s27, 0
    %p201 = por %p199, %p200
    %s203 = sadd.s32 %s202, 1
    %p206 = scmp.eq.s32.totalorder %s21, 1
    %p207 = scmp.ne.s32.totalorder %s202, %s204
    %p208 = scmp.eq.s32.totalorder %s21, 0
    %p209 = por %p207, %p208
    %p210 = scmp.ne.s32.totalorder %s202, %s204
    %p211 = scmp.eq.s32.totalorder %s26, 1
    %p212 = por %p210, %p211
    %p213 = scmp.ne.s32.totalorder %s204, %s205
    %p214 = scmp.eq.s32.totalorder %s26, 0
    %p215 = por %p213, %p214
    %p216 = scmp.ne.s32.totalorder %s204, %s205
    %p217 = scmp.eq.s32.totalorder %s27, 1
    %p218 = por %p216, %p217
    %p220 = scmp.ne.s32.totalorder %s205, %s219
    %p221 = scmp.eq.s32.totalorder %s27, 0
    %p222 = por %p220, %p221
    %s224 = sadd.s32 %s223, 1
    %p227 = scmp.eq.s32.totalorder %s21, 1
    %p228 = scmp.ne.s32.totalorder %s223, %s225
    %p229 = scmp.eq.s32.totalorder %s21, 0
    %p230 = por %p228, %p229
    %p231 = scmp.ne.s32.totalorder %s223, %s225
    %p232 = scmp.eq.s32.totalorder %s26, 1
    %p233 = por %p231, %p232
    %p234 = scmp.ne.s32.totalorder %s225, %s226
    %p235 = scmp.eq.s32.totalorder %s26, 0
    %p236 = por %p234, %p235
    %p237 = scmp.ne.s32.totalorder %s225, %s226
    %p238 = scmp.eq.s32.totalorder %s27, 1
    %p239 = por %p237, %p238
    %p241 = scmp.ne.s32.totalorder %s226, %s240
    %p242 = scmp.eq.s32.totalorder %s27, 0
    %p243 = por %p241, %p242
    %s245 = sadd.s32 %s244, 1
    %p248 = scmp.eq.s32.totalorder %s21, 1
    %p249 = scmp.ne.s32.totalorder %s244, %s246
    %p250 = scmp.eq.s32.totalorder %s21, 0
    %p251 = por %p249, %p250
    %p252 = scmp.ne.s32.totalorder %s244, %s246
    %p253 = scmp.eq.s32.totalorder %s26, 1
    %p254 = por %p252, %p253
    %p255 = scmp.ne.s32.totalorder %s246, %s247
    %p256 = scmp.eq.s32.totalorder %s26, 0
    %p257 = por %p255, %p256
    %p258 = scmp.ne.s32.totalorder %s246, %s247
    %p259 = scmp.eq.s32.totalorder %s27, 1
    %p260 = por %p258, %p259
    %p262 = scmp.ne.s32.totalorder %s247, %s261
    %p263 = scmp.eq.s32.totalorder %s27, 0
    %p264 = por %p262, %p263
    %s266 = sadd.s32 %s265, 1
    %p269 = scmp.eq.s32.totalorder %s21, 1
    %p270 = scmp.ne.s32.totalorder %s265, %s267
    %p271 = scmp.eq.s32.totalorder %s21, 0
    %p272 = por %p270, %p271
    %p273 = scmp.ne.s32.totalorder %s265, %s267
    %p274 = scmp.eq.s32.totalorder %s26, 1
    %p275 = por %p273, %p274
    %p276 = scmp.ne.s32.totalorder %s267, %s268
    %p277 = scmp.eq.s32.totalorder %s26, 0
    %p278 = por %p276, %p277
    %p279 = scmp.ne.s32.totalorder %s267, %s268
    %p280 = scmp.eq.s32.totalorder %s27, 1
    %p281 = por %p279, %p280
    %p283 = scmp.ne.s32.totalorder %s268, %s282
    %p284 = scmp.eq.s32.totalorder %s27, 0
    %p285 = por %p283, %p284
    %s287 = sadd.s32 %s286, 1
    %p290 = scmp.eq.s32.totalorder %s21, 1
    %p291 = scmp.ne.s32.totalorder %s286, %s288
    %p292 = scmp.eq.s32.totalorder %s21, 0
    %p293 = por %p291, %p292
    %p294 = scmp.ne.s32.totalorder %s286, %s288
    %p295 = scmp.eq.s32.totalorder %s26, 1
    %p296 = por %p294, %p295
    %p297 = scmp.ne.s32.totalorder %s288, %s289
    %p298 = scmp.eq.s32.totalorder %s26, 0
    %p299 = por %p297, %p298
    %p300 = scmp.ne.s32.totalorder %s288, %s289
    %p301 = scmp.eq.s32.totalorder %s27, 1
    %p302 = por %p300, %p301
    %p304 = scmp.ne.s32.totalorder %s289, %s303
    %p305 = scmp.eq.s32.totalorder %s27, 0
    %p306 = por %p304, %p305
    %s308 = sadd.s32 %s307, 1
    %p311 = scmp.eq.s32.totalorder %s21, 1
    %p312 = scmp.ne.s32.totalorder %s307, %s309
    %p313 = scmp.eq.s32.totalorder %s21, 0
    %p314 = por %p312, %p313
    %p315 = scmp.ne.s32.totalorder %s307, %s309
    %p316 = scmp.eq.s32.totalorder %s26, 1
    %p317 = por %p315, %p316
    %p318 = scmp.ne.s32.totalorder %s309, %s310
    %p319 = scmp.eq.s32.totalorder %s26, 0
    %p320 = por %p318, %p319
    %p321 = scmp.ne.s32.totalorder %s309, %s310
    %p322 = scmp.eq.s32.totalorder %s27, 1
    %p323 = por %p321, %p322
    %p325 = scmp.ne.s32.totalorder %s310, %s324
    %p326 = scmp.eq.s32.totalorder %s27, 0
    %p327 = por %p325, %p326
    %s329 = sadd.s32 %s328, 1
    %p332 = scmp.eq.s32.totalorder %s21, 1
    %p333 = scmp.ne.s32.totalorder %s328, %s330
    %p334 = scmp.eq.s32.totalorder %s21, 0
    %p335 = por %p333, %p334
    %p336 = scmp.ne.s32.totalorder %s328, %s330
    %p337 = scmp.eq.s32.totalorder %s26, 1
    %p338 = por %p336, %p337
    %p339 = scmp.ne.s32.totalorder %s330, %s331
    %p340 = scmp.eq.s32.totalorder %s26, 0
    %p341 = por %p339, %p340
    %p342 = scmp.ne.s32.totalorder %s330, %s331
    %p343 = scmp.eq.s32.totalorder %s27, 1
    %p344 = por %p342, %p343
    %p346 = scmp.ne.s32.totalorder %s331, %s345
    %p347 = scmp.eq.s32.totalorder %s27, 0
    %p348 = por %p346, %p347
    %s349 = ssub.s32 %s21, %s28
    %p350 = scmp.eq.s32.totalorder %s349, 0
    %s352 = sadd.s32 %s351, 1
    %s353 = scalar_select %p350, %s351, %s352
    %p356 = pneg %p350
    %p357 = scmp.eq.s32.totalorder %s21, 1
    %p358 = por %p356, %p357
    %p359 = scmp.ne.s32.totalorder %s351, %s354
    %p360 = scmp.eq.s32.totalorder %s21, 0
    %p361 = por %p359, %p360
    %p362 = scmp.ne.s32.totalorder %s351, %s354
    %p363 = scmp.eq.s32.totalorder %s26, 1
    %p364 = por %p362, %p363
    %p365 = scmp.ne.s32.totalorder %s354, %s355
    %p366 = scmp.eq.s32.totalorder %s26, 0
    %p367 = por %p365, %p366
    %p368 = scmp.ne.s32.totalorder %s354, %s355
    %p369 = scmp.eq.s32.totalorder %s27, 1
    %p370 = por %p368, %p369
    %p372 = scmp.ne.s32.totalorder %s355, %s371
    %p373 = scmp.eq.s32.totalorder %s27, 0
    %p374 = por %p372, %p373
    %p375 = scmp.le.s32.totalorder 1, %s21
    %p376 = scmp.lt.s32.totalorder %s21, 3
    %p377 = pnand %p375, %p376
    %p378 = pneg %p377
    // Predicated region
    $region9: #{luky_forward.1} parent=5 // pred_check
      _
    $region10: #{luky_forward.1} parent=5 // pred_check_branch
      %380 = sbr.rel (%p377) target = $region12
    $region11: #{luky_forward.1} parent=5 // pred_region
      %s381 = ssub.s32 %s21, 1
      // Predicated region
      $region13: #{luky_forward.1} parent=11 // pred_check
        %p382 = pneg %p68
      $region14: #{luky_forward.1} parent=11 // pred_check_branch
        %384 = sbr.rel (%p382) target = $region16
      $region15: #{luky_forward.1} parent=11 // pred_region
        _
      $region16: #{luky_forward.1} parent=11 // pred_fallthru
        _
      // Predicated region
      $region17: #{luky_forward.1} parent=11 // pred_check
        %p385 = pneg %p89
      $region18: #{luky_forward.1} parent=11 // pred_check_branch
        %387 = sbr.rel (%p385) target = $region20
      $region19: #{luky_forward.1} parent=11 // pred_region
        _
      $region20: #{luky_forward.1} parent=11 // pred_fallthru
        _
      // Predicated region
      $region21: #{luky_forward.1} parent=11 // pred_check
        %p388 = pneg %p110
      $region22: #{luky_forward.1} parent=11 // pred_check_branch
        %390 = sbr.rel (%p388) target = $region24
      $region23: #{luky_forward.1} parent=11 // pred_region
        _
      $region24: #{luky_forward.1} parent=11 // pred_fallthru
        _
      // Predicated region
      $region25: #{luky_forward.1} parent=11 // pred_check
        %p391 = pneg %p131
      $region26: #{luky_forward.1} parent=11 // pred_check_branch
        %393 = sbr.rel (%p391) target = $region28
      $region27: #{luky_forward.1} parent=11 // pred_region
        _
      $region28: #{luky_forward.1} parent=11 // pred_fallthru
        _
      // Predicated region
      $region29: #{luky_forward.1} parent=11 // pred_check
        %p394 = pneg %p152
      $region30: #{luky_forward.1} parent=11 // pred_check_branch
        %396 = sbr.rel (%p394) target = $region32
      $region31: #{luky_forward.1} parent=11 // pred_region
        _
      $region32: #{luky_forward.1} parent=11 // pred_fallthru
        _
      // Predicated region
      $region33: #{luky_forward.1} parent=11 // pred_check
        %p397 = pneg %p173
      $region34: #{luky_forward.1} parent=11 // pred_check_branch
        %399 = sbr.rel (%p397) target = $region36
      $region35: #{luky_forward.1} parent=11 // pred_region
        _
      $region36: #{luky_forward.1} parent=11 // pred_fallthru
        _
      // Predicated region
      $region37: #{luky_forward.1} parent=11 // pred_check
        %p400 = pneg %p194
      $region38: #{luky_forward.1} parent=11 // pred_check_branch
        %402 = sbr.rel (%p400) target = $region40
      $region39: #{luky_forward.1} parent=11 // pred_region
        _
      $region40: #{luky_forward.1} parent=11 // pred_fallthru
        _
      // Predicated region
      $region41: #{luky_forward.1} parent=11 // pred_check
        %p403 = pneg %p215
      $region42: #{luky_forward.1} parent=11 // pred_check_branch
        %405 = sbr.rel (%p403) target = $region44
      $region43: #{luky_forward.1} parent=11 // pred_region
        _
      $region44: #{luky_forward.1} parent=11 // pred_fallthru
        _
      // Predicated region
      $region45: #{luky_forward.1} parent=11 // pred_check
        %p406 = pneg %p236
      $region46: #{luky_forward.1} parent=11 // pred_check_branch
        %408 = sbr.rel (%p406) target = $region48
      $region47: #{luky_forward.1} parent=11 // pred_region
        _
      $region48: #{luky_forward.1} parent=11 // pred_fallthru
        _
      // Predicated region
      $region49: #{luky_forward.1} parent=11 // pred_check
        %p409 = pneg %p257
      $region50: #{luky_forward.1} parent=11 // pred_check_branch
        %411 = sbr.rel (%p409) target = $region52
      $region51: #{luky_forward.1} parent=11 // pred_region
        _
      $region52: #{luky_forward.1} parent=11 // pred_fallthru
        _
      // Predicated region
      $region53: #{luky_forward.1} parent=11 // pred_check
        %p412 = pneg %p278
      $region54: #{luky_forward.1} parent=11 // pred_check_branch
        %414 = sbr.rel (%p412) target = $region56
      $region55: #{luky_forward.1} parent=11 // pred_region
        _
      $region56: #{luky_forward.1} parent=11 // pred_fallthru
        _
      // Predicated region
      $region57: #{luky_forward.1} parent=11 // pred_check
        %p415 = pneg %p299
      $region58: #{luky_forward.1} parent=11 // pred_check_branch
        %417 = sbr.rel (%p415) target = $region60
      $region59: #{luky_forward.1} parent=11 // pred_region
        _
      $region60: #{luky_forward.1} parent=11 // pred_fallthru
        _
      // Predicated region
      $region61: #{luky_forward.1} parent=11 // pred_check
        %p418 = pneg %p320
      $region62: #{luky_forward.1} parent=11 // pred_check_branch
        %420 = sbr.rel (%p418) target = $region64
      $region63: #{luky_forward.1} parent=11 // pred_region
        _
      $region64: #{luky_forward.1} parent=11 // pred_fallthru
        _
      // Predicated region
      $region65: #{luky_forward.1} parent=11 // pred_check
        %p421 = pneg %p341
      $region66: #{luky_forward.1} parent=11 // pred_check_branch
        %423 = sbr.rel (%p421) target = $region68
      $region67: #{luky_forward.1} parent=11 // pred_region
        _
      $region68: #{luky_forward.1} parent=11 // pred_fallthru
        _
    $region12: #{luky_forward.1} parent=5 // pred_fallthru
      _
    %p424 = scmp.lt.s32.totalorder %s21, 2
    // Predicated region
    $region69: #{luky_forward.1} parent=5 // pred_check
      %p425 = pneg %p424
    $region70: #{luky_forward.1} parent=5 // pred_check_branch
      %427 = sbr.rel (%p425) target = $region72
    $region71: #{luky_forward.1} parent=5 // pred_region
      // Predicated region
      $region73: #{luky_forward.1} parent=71 // pred_check
        %p428 = pneg %p41
      $region74: #{luky_forward.1} parent=71 // pred_check_branch
        %430 = sbr.rel (%p428) target = $region76
      $region75: #{luky_forward.1} parent=71 // pred_region
        %p431 = scmp.lt.s32.totalorder %s21, 1
        %s432 = scalar_select %p431, %s21, 1
        %s433 = smul.addr %s432, 4
        %s434 = smul.addr %s433, 8
        %s435 = scalar_lea.vmem %s0, %s434
      $region76: #{luky_forward.1} parent=71 // pred_fallthru
        _
    $region72: #{luky_forward.1} parent=5 // pred_fallthru
      _
    %p436 = scmp.le.s32.totalorder 1, %s21
    %p437 = scmp.lt.s32.totalorder %s21, 3
    %p438 = pnand %p436, %p437
    %p439 = pneg %p438
    // Predicated region
    $region77: #{luky_forward.1} parent=5 // pred_check
      _
    $region78: #{luky_forward.1} parent=5 // pred_check_branch
      %441 = sbr.rel (%p438) target = $region80
    $region79: #{luky_forward.1} parent=5 // pred_region
      %s442 = ssub.s32 %s21, 1
      %p443 = scmp.lt.s32.totalorder %s26, 1
      %s444 = scalar_select %p443, %s26, 1
      %s445 = smul.addr %s444, 4
      %s446 = smul.addr %s445, 8
      %s447 = scalar_lea.vmem %s0, %s446
      %p448 = pneg %p47
      %p449 = pneg %p44
      %p450 = pneg %p68
      %p451 = pneg %p65
      %p452 = pneg %p89
      %p453 = pneg %p86
      %p454 = pneg %p110
      %p455 = pneg %p107
      %p456 = pneg %p131
      %p457 = pneg %p128
      %p458 = pneg %p152
      %p459 = pneg %p149
      %p460 = pneg %p173
      %p461 = pneg %p170
      %p462 = pneg %p194
      %p463 = pneg %p191
      %p464 = pneg %p215
      %p465 = pneg %p212
      %p466 = pneg %p236
      %p467 = pneg %p233
      %p468 = pneg %p257
      %p469 = pneg %p254
      %p470 = pneg %p278
      %p471 = pneg %p275
      %p472 = pneg %p299
      %p473 = pneg %p296
      %p474 = pneg %p320
      %p475 = pneg %p317
      %p476 = pneg %p341
      %p477 = pneg %p338
      %p478 = pneg %p367
      %p479 = pneg %p364
      %p480 = scmp.lt.s32.totalorder %s26, 1
      %s481 = scalar_select %p480, %s26, 1
      %s482 = smul.addr %s481, 4
      %s483 = smul.addr %s482, 8
      %s484 = scalar_lea.vmem %s15, %s483
      %p485 = scmp.lt.s32.totalorder %s26, 1
      %s486 = scalar_select %p485, %s26, 1
      %s487 = smul.addr %s486, 4
      %s488 = smul.addr %s487, 8
      %s489 = scalar_lea.vmem %s0, %s488
      %p490 = scmp.lt.s32.totalorder %s26, 1
      %s491 = scalar_select %p490, %s26, 1
      %s492 = smul.addr %s491, 4
      %s493 = smul.addr %s492, 8
      %s494 = scalar_lea.vmem %s15, %s493
      %v496 = vld [vmem:[%s489] sm:$0xff]
      %v497 = vld [vmem:[%s489 + $0x8] sm:$0xff]
      %v498 = vld [vmem:[%s489 + $0x10] sm:$0xff]
      %v499 = vld [vmem:[%s489 + $0x18] sm:$0xff]
      %v500 = vld [vmem:[%s1] sm:$0xf]
      %v501 = vld [vmem:[%s1 + $0x4] sm:$0xf]
      %v502 = vpack.c.bf16 %v498, %v496
      %v503 = vpack.c.bf16 %v499, %v497
      %v506 = vunpack.c.l.b16 %v500
      %v507 = vunpack.c.l.b16 %v501
      %v508 = vpack.c.b16 %v507, %v506
      %vm509 = vcmask 130048
      %v511 = vsel %vm509, %v508, 0
      %513 = vmatpush.bf16.msra.mxu0 0
      %514 = vmatpush.bf16.msra.mxu0 0
      %515 = vmatpush.bf16.msra.mxu0 0
      %516 = vmatpush.bf16.msra.mxu0 0
      %517 = vmatpush.bf16.msra.mxu0 0
      %518 = vmatpush.bf16.msra.mxu0 0
      %519 = vmatpush.bf16.msra.mxu0 0
      %520 = vmatpush.bf16.msra.mxu0 %v502
      %521 = vmatmul.bf16.gmra.mxu0 %v511
      %v522 = vpop.f32.mrf.mxu0
      %v523 = vadd.f32 0.0, %v522
      %v524 = vpop.f32.mrf.mxu0
      %v525 = vadd.f32 0.0, %v524
      %526 = vdwg.mxu0
      %527 = vmatpush.bf16.msra.mxu0 0
      %528 = vmatpush.bf16.msra.mxu0 0
      %529 = vmatpush.bf16.msra.mxu0 0
      %530 = vmatpush.bf16.msra.mxu0 0
      %531 = vmatpush.bf16.msra.mxu0 0
      %532 = vmatpush.bf16.msra.mxu0 0
      %533 = vmatpush.bf16.msra.mxu0 0
      %534 = vmatpush.bf16.msra.mxu0 %v503
      %535 = vmatmul.bf16.gmra.mxu0 %v511
      %v536 = vpop.f32.mrf.mxu0
      %v537 = vadd.f32 0.0, %v536
      %v538 = vpop.f32.mrf.mxu0
      %v539 = vadd.f32 0.0, %v538
      %540 = vdwg.mxu0
      %v541 = vmul.f32 %v523, %v523
      %v542 = vmul.f32 %v537, %v537
      %v543 = vmul.f32 %v525, %v525
      %v544 = vmul.f32 %v539, %v539
      %v545 = vmul.f32 %v523, %v541
      %v546 = vmul.f32 %v537, %v542
      %v547 = vmul.f32 %v525, %v543
      %v548 = vmul.f32 %v539, %v544
      %v549 = vmul.f32 %v545, 0.044715
      %v550 = vmul.f32 %v546, 0.044715
      %v551 = vmul.f32 %v547, 0.044715
      %v552 = vmul.f32 %v548, 0.044715
      %v553 = vadd.f32 %v523, %v549
      %v554 = vadd.f32 %v537, %v550
      %v555 = vadd.f32 %v525, %v551
      %v556 = vadd.f32 %v539, %v552
      %v557 = vmul.f32 %v553, 0.7978846
      %v558 = vmul.f32 %v554, 0.7978846
      %v559 = vmul.f32 %v555, 0.7978846
      %v560 = vmul.f32 %v556, 0.7978846
      %v561 = vtanh.pop %v557
      %v562 = vtanh.pop %v558
      %v563 = vtanh.pop %v559
      %v564 = vtanh.pop %v560
      %v565 = vadd.f32 %v561, 1.0
      %v566 = vadd.f32 %v562, 1.0
      %v567 = vadd.f32 %v563, 1.0
      %v568 = vadd.f32 %v564, 1.0
      %v569 = vmul.f32 %v565, 0.5
      %v570 = vmul.f32 %v566, 0.5
      %v571 = vmul.f32 %v567, 0.5
      %v572 = vmul.f32 %v568, 0.5
      %v573 = vmul.f32 %v523, %v569
      %v574 = vmul.f32 %v537, %v570
      %v575 = vmul.f32 %v525, %v571
      %v576 = vmul.f32 %v539, %v572
      %v577 = vld [vmem:[%s4] sm:$0xff]
      %v578 = vld [vmem:[%s4 + $0x8] sm:$0xff]
      %580 = vset.pattern.permute.xlu0 0
      %581 = vperm.xlu0 %580, %v577
      %v582 = vpop.permute.xlu0 %581
      %585 = vset.pattern.permute.xlu0 0
      %586 = vperm.xlu0 %585, %v578
      %v587 = vpop.permute.xlu0 %586
      %v589 = vmul.f32 %v573, %v582
      %v590 = vmul.f32 %v574, %v582
      %v591 = vmul.f32 %v575, %v587
      %v592 = vmul.f32 %v576, %v587
      %593 = vset.pattern.permute.xlu0 1
      %594 = vperm.xlu0 %593, %v577
      %v595 = vpop.permute.xlu0 %594
      %597 = vset.pattern.permute.xlu0 1
      %598 = vperm.xlu0 %597, %v578
      %v599 = vpop.permute.xlu0 %598
      %v601 = vadd.f32 %v589, %v595
      %v602 = vadd.f32 %v590, %v595
      %v603 = vadd.f32 %v591, %v599
      %v604 = vadd.f32 %v592, %v599
      %v605 = vld [vmem:[%s3] sm:$0xff]
      %v606 = vld [vmem:[%s3 + $0x8] sm:$0xff]
      %608 = vset.pattern.permute.xlu0 24
      %609 = vperm.xlu0 %608, %v605
      %v610 = vpop.permute.xlu0 %609
      %613 = vset.pattern.permute.xlu0 24
      %614 = vperm.xlu0 %613, %v606
      %v615 = vpop.permute.xlu0 %614
      %v617 = vmul.f32 %v610, %v601
      %v618 = vmul.f32 %v610, %v602
      %v619 = vmul.f32 %v615, %v603
      %v620 = vmul.f32 %v615, %v604
      %621 = vrot.lane.b32.xlu0 %v601, 51
      %v622 = vpop.permute.xlu0 %621
      %623 = vrot.lane.b32.xlu0 %v603, 51
      %v624 = vpop.permute.xlu0 %623
      %625 = vrot.lane.b32.xlu0 %v602, 51
      %v626 = vpop.permute.xlu0 %625
      %627 = vrot.lane.b32.xlu0 %v604, 51
      %v628 = vpop.permute.xlu0 %627
      %v629 = vlaneseq
      %v630 = vand.u32 %v629, 127
      %vm631 = vcmp.lt.s32.totalorder %v630, 51
      %v632 = vsel %vm631, %v622, %v626
      %v633 = vsel %vm631, %v624, %v628
      %v634 = vsel %vm631, %v626, %v622
      %v635 = vsel %vm631, %v628, %v624
      %v636 = vld [vmem:[%s5] ss:$8 sm:$0x3]
      %v638 = vperm.slane %v636, 0
      %v639 = vperm.slane %v636, 1
      %v642 = vmul.f32 %v638, %v634
      %v643 = vmul.f32 %v639, %v632
      %v644 = vmul.f32 %v638, %v635
      %v645 = vmul.f32 %v639, %v633
      %646 = vset.pattern.permute.xlu0 0
      %647 = vperm.xlu0 %646, %v605
      %v648 = vpop.permute.xlu0 %647
      %650 = vset.pattern.permute.xlu0 0
      %651 = vperm.xlu0 %650, %v606
      %v652 = vpop.permute.xlu0 %651
      %v654 = vmul.f32 %v648, %v642
      %v655 = vmul.f32 %v648, %v643
      %v656 = vmul.f32 %v652, %v644
      %v657 = vmul.f32 %v652, %v645
      %v658 = vadd.f32 %v617, %v654
      %v659 = vadd.f32 %v618, %v655
      %v660 = vadd.f32 %v619, %v656
      %v661 = vadd.f32 %v620, %v657
      %662 = vrot.lane.b32.xlu0 %v601, 50
      %v663 = vpop.permute.xlu0 %662
      %664 = vrot.lane.b32.xlu0 %v603, 50
      %v665 = vpop.permute.xlu0 %664
      %666 = vrot.lane.b32.xlu0 %v602, 50
      %v667 = vpop.permute.xlu0 %666
      %668 = vrot.lane.b32.xlu0 %v604, 50
      %v669 = vpop.permute.xlu0 %668
      %vm670 = vcmp.lt.s32.totalorder %v630, 50
      %v671 = vsel %vm670, %v663, %v667
      %v672 = vsel %vm670, %v665, %v669
      %v673 = vsel %vm670, %v667, %v663
      %v674 = vsel %vm670, %v669, %v665
      %s675 = scalar_lea.vmem %s5, 1
      %v676 = vld [vmem:[%s675] ss:$8 sm:$0x3]
      %v678 = vperm.slane %v676, 0
      %v679 = vperm.slane %v676, 1
      %v682 = vmul.f32 %v678, %v673
      %v683 = vmul.f32 %v679, %v671
      %v684 = vmul.f32 %v678, %v674
      %v685 = vmul.f32 %v679, %v672
      %686 = vset.pattern.permute.xlu0 1
      %687 = vperm.xlu0 %686, %v605
      %v688 = vpop.permute.xlu0 %687
      %690 = vset.pattern.permute.xlu0 1
      %691 = vperm.xlu0 %690, %v606
      %v692 = vpop.permute.xlu0 %691
      %v694 = vmul.f32 %v688, %v682
      %v695 = vmul.f32 %v688, %v683
      %v696 = vmul.f32 %v692, %v684
      %v697 = vmul.f32 %v692, %v685
      %v698 = vadd.f32 %v658, %v694
      %v699 = vadd.f32 %v659, %v695
      %v700 = vadd.f32 %v660, %v696
      %v701 = vadd.f32 %v661, %v697
      %702 = vrot.lane.b32.xlu0 %v601, 49
      %v703 = vpop.permute.xlu0 %702
      %704 = vrot.lane.b32.xlu0 %v603, 49
      %v705 = vpop.permute.xlu0 %704
      %706 = vrot.lane.b32.xlu0 %v602, 49
      %v707 = vpop.permute.xlu0 %706
      %708 = vrot.lane.b32.xlu0 %v604, 49
      %v709 = vpop.permute.xlu0 %708
      %vm710 = vcmp.lt.s32.totalorder %v630, 49
      %v711 = vsel %vm710, %v703, %v707
      %v712 = vsel %vm710, %v705, %v709
      %v713 = vsel %vm710, %v707, %v703
      %v714 = vsel %vm710, %v709, %v705
      %s715 = scalar_lea.vmem %s5, 2
      %v716 = vld [vmem:[%s715] ss:$8 sm:$0x3]
      %v718 = vperm.slane %v716, 0
      %v719 = vperm.slane %v716, 1
      %v722 = vmul.f32 %v718, %v713
      %v723 = vmul.f32 %v719, %v711
      %v724 = vmul.f32 %v718, %v714
      %v725 = vmul.f32 %v719, %v712
      %726 = vset.pattern.permute.xlu0 2
      %727 = vperm.xlu0 %726, %v605
      %v728 = vpop.permute.xlu0 %727
      %730 = vset.pattern.permute.xlu0 2
      %731 = vperm.xlu0 %730, %v606
      %v732 = vpop.permute.xlu0 %731
      %v734 = vmul.f32 %v728, %v722
      %v735 = vmul.f32 %v728, %v723
      %v736 = vmul.f32 %v732, %v724
      %v737 = vmul.f32 %v732, %v725
      %v738 = vadd.f32 %v698, %v734
      %v739 = vadd.f32 %v699, %v735
      %v740 = vadd.f32 %v700, %v736
      %v741 = vadd.f32 %v701, %v737
      %742 = vrot.lane.b32.xlu0 %v601, 48
      %v743 = vpop.permute.xlu0 %742
      %744 = vrot.lane.b32.xlu0 %v603, 48
      %v745 = vpop.permute.xlu0 %744
      %746 = vrot.lane.b32.xlu0 %v602, 48
      %v747 = vpop.permute.xlu0 %746
      %748 = vrot.lane.b32.xlu0 %v604, 48
      %v749 = vpop.permute.xlu0 %748
      %vm750 = vcmp.lt.s32.totalorder %v630, 48
      %v751 = vsel %vm750, %v743, %v747
      %v752 = vsel %vm750, %v745, %v749
      %v753 = vsel %vm750, %v747, %v743
      %v754 = vsel %vm750, %v749, %v745
      %s755 = scalar_lea.vmem %s5, 3
      %v756 = vld [vmem:[%s755] ss:$8 sm:$0x3]
      %v758 = vperm.slane %v756, 0
      %v759 = vperm.slane %v756, 1
      %v762 = vmul.f32 %v758, %v753
      %v763 = vmul.f32 %v759, %v751
      %v764 = vmul.f32 %v758, %v754
      %v765 = vmul.f32 %v759, %v752
      %766 = vset.pattern.permute.xlu0 3
      %767 = vperm.xlu0 %766, %v605
      %v768 = vpop.permute.xlu0 %767
      %770 = vset.pattern.permute.xlu0 3
      %771 = vperm.xlu0 %770, %v606
      %v772 = vpop.permute.xlu0 %771
      %v774 = vmul.f32 %v768, %v762
      %v775 = vmul.f32 %v768, %v763
      %v776 = vmul.f32 %v772, %v764
      %v777 = vmul.f32 %v772, %v765
      %v778 = vadd.f32 %v738, %v774
      %v779 = vadd.f32 %v739, %v775
      %v780 = vadd.f32 %v740, %v776
      %v781 = vadd.f32 %v741, %v777
      %782 = vrot.lane.b32.xlu0 %v601, 47
      %v783 = vpop.permute.xlu0 %782
      %784 = vrot.lane.b32.xlu0 %v603, 47
      %v785 = vpop.permute.xlu0 %784
      %786 = vrot.lane.b32.xlu0 %v602, 47
      %v787 = vpop.permute.xlu0 %786
      %788 = vrot.lane.b32.xlu0 %v604, 47
      %v789 = vpop.permute.xlu0 %788
      %vm790 = vcmp.lt.s32.totalorder %v630, 47
      %v791 = vsel %vm790, %v783, %v787
      %v792 = vsel %vm790, %v785, %v789
      %v793 = vsel %vm790, %v787, %v783
      %v794 = vsel %vm790, %v789, %v785
      %s795 = scalar_lea.vmem %s5, 4
      %v796 = vld [vmem:[%s795] ss:$8 sm:$0x3]
      %v798 = vperm.slane %v796, 0
      %v799 = vperm.slane %v796, 1
      %v802 = vmul.f32 %v798, %v793
      %v803 = vmul.f32 %v799, %v791
      %v804 = vmul.f32 %v798, %v794
      %v805 = vmul.f32 %v799, %v792
      %806 = vset.pattern.permute.xlu0 4
      %807 = vperm.xlu0 %806, %v605
      %v808 = vpop.permute.xlu0 %807
      %810 = vset.pattern.permute.xlu0 4
      %811 = vperm.xlu0 %810, %v606
      %v812 = vpop.permute.xlu0 %811
      %v814 = vmul.f32 %v808, %v802
      %v815 = vmul.f32 %v808, %v803
      %v816 = vmul.f32 %v812, %v804
      %v817 = vmul.f32 %v812, %v805
      %v818 = vadd.f32 %v778, %v814
      %v819 = vadd.f32 %v779, %v815
      %v820 = vadd.f32 %v780, %v816
      %v821 = vadd.f32 %v781, %v817
      %822 = vrot.lane.b32.xlu0 %v601, 46
      %v823 = vpop.permute.xlu0 %822
      %824 = vrot.lane.b32.xlu0 %v603, 46
      %v825 = vpop.permute.xlu0 %824
      %826 = vrot.lane.b32.xlu0 %v602, 46
      %v827 = vpop.permute.xlu0 %826
      %828 = vrot.lane.b32.xlu0 %v604, 46
      %v829 = vpop.permute.xlu0 %828
      %vm830 = vcmp.lt.s32.totalorder %v630, 46
      %v831 = vsel %vm830, %v823, %v827
      %v832 = vsel %vm830, %v825, %v829
      %v833 = vsel %vm830, %v827, %v823
      %v834 = vsel %vm830, %v829, %v825
      %s835 = scalar_lea.vmem %s5, 5
      %v836 = vld [vmem:[%s835] ss:$8 sm:$0x3]
      %v838 = vperm.slane %v836, 0
      %v839 = vperm.slane %v836, 1
      %v842 = vmul.f32 %v838, %v833
      %v843 = vmul.f32 %v839, %v831
      %v844 = vmul.f32 %v838, %v834
      %v845 = vmul.f32 %v839, %v832
      %846 = vset.pattern.permute.xlu0 5
      %847 = vperm.xlu0 %846, %v605
      %v848 = vpop.permute.xlu0 %847
      %850 = vset.pattern.permute.xlu0 5
      %851 = vperm.xlu0 %850, %v606
      %v852 = vpop.permute.xlu0 %851
      %v854 = vmul.f32 %v848, %v842
      %v855 = vmul.f32 %v848, %v843
      %v856 = vmul.f32 %v852, %v844
      %v857 = vmul.f32 %v852, %v845
      %v858 = vadd.f32 %v818, %v854
      %v859 = vadd.f32 %v819, %v855
      %v860 = vadd.f32 %v820, %v856
      %v861 = vadd.f32 %v821, %v857
      %862 = vrot.lane.b32.xlu0 %v601, 45
      %v863 = vpop.permute.xlu0 %862
      %864 = vrot.lane.b32.xlu0 %v603, 45
      %v865 = vpop.permute.xlu0 %864
      %866 = vrot.lane.b32.xlu0 %v602, 45
      %v867 = vpop.permute.xlu0 %866
      %868 = vrot.lane.b32.xlu0 %v604, 45
      %v869 = vpop.permute.xlu0 %868
      %vm870 = vcmp.lt.s32.totalorder %v630, 45
      %v871 = vsel %vm870, %v863, %v867
      %v872 = vsel %vm870, %v865, %v869
      %v873 = vsel %vm870, %v867, %v863
      %v874 = vsel %vm870, %v869, %v865
      %s875 = scalar_lea.vmem %s5, 6
      %v876 = vld [vmem:[%s875] ss:$8 sm:$0x3]
      %v878 = vperm.slane %v876, 0
      %v879 = vperm.slane %v876, 1
      %v882 = vmul.f32 %v878, %v873
      %v883 = vmul.f32 %v879, %v871
      %v884 = vmul.f32 %v878, %v874
      %v885 = vmul.f32 %v879, %v872
      %886 = vset.pattern.permute.xlu0 6
      %887 = vperm.xlu0 %886, %v605
      %v888 = vpop.permute.xlu0 %887
      %890 = vset.pattern.permute.xlu0 6
      %891 = vperm.xlu0 %890, %v606
      %v892 = vpop.permute.xlu0 %891
      %v894 = vmul.f32 %v888, %v882
      %v895 = vmul.f32 %v888, %v883
      %v896 = vmul.f32 %v892, %v884
      %v897 = vmul.f32 %v892, %v885
      %v898 = vadd.f32 %v858, %v894
      %v899 = vadd.f32 %v859, %v895
      %v900 = vadd.f32 %v860, %v896
      %v901 = vadd.f32 %v861, %v897
      %902 = vrot.lane.b32.xlu0 %v601, 35
      %v903 = vpop.permute.xlu0 %902
      %904 = vrot.lane.b32.xlu0 %v603, 35
      %v905 = vpop.permute.xlu0 %904
      %906 = vrot.lane.b32.xlu0 %v602, 35
      %v907 = vpop.permute.xlu0 %906
      %908 = vrot.lane.b32.xlu0 %v604, 35
      %v909 = vpop.permute.xlu0 %908
      %vm910 = vcmp.lt.s32.totalorder %v630, 35
      %v911 = vsel %vm910, %v903, %v907
      %v912 = vsel %vm910, %v905, %v909
      %v913 = vsel %vm910, %v907, %v903
      %v914 = vsel %vm910, %v909, %v905
      %s915 = scalar_lea.vmem %s5, 7
      %v916 = vld [vmem:[%s915] ss:$8 sm:$0x3]
      %v918 = vperm.slane %v916, 0
      %v919 = vperm.slane %v916, 1
      %v922 = vmul.f32 %v918, %v913
      %v923 = vmul.f32 %v919, %v911
      %v924 = vmul.f32 %v918, %v914
      %v925 = vmul.f32 %v919, %v912
      %926 = vset.pattern.permute.xlu0 7
      %927 = vperm.xlu0 %926, %v605
      %v928 = vpop.permute.xlu0 %927
      %930 = vset.pattern.permute.xlu0 7
      %931 = vperm.xlu0 %930, %v606
      %v932 = vpop.permute.xlu0 %931
      %v934 = vmul.f32 %v928, %v922
      %v935 = vmul.f32 %v928, %v923
      %v936 = vmul.f32 %v932, %v924
      %v937 = vmul.f32 %v932, %v925
      %v938 = vadd.f32 %v898, %v934
      %v939 = vadd.f32 %v899, %v935
      %v940 = vadd.f32 %v900, %v936
      %v941 = vadd.f32 %v901, %v937
      %942 = vrot.lane.b32.xlu0 %v601, 34
      %v943 = vpop.permute.xlu0 %942
      %944 = vrot.lane.b32.xlu0 %v603, 34
      %v945 = vpop.permute.xlu0 %944
      %946 = vrot.lane.b32.xlu0 %v602, 34
      %v947 = vpop.permute.xlu0 %946
      %948 = vrot.lane.b32.xlu0 %v604, 34
      %v949 = vpop.permute.xlu0 %948
      %vm950 = vcmp.lt.s32.totalorder %v630, 34
      %v951 = vsel %vm950, %v943, %v947
      %v952 = vsel %vm950, %v945, %v949
      %v953 = vsel %vm950, %v947, %v943
      %v954 = vsel %vm950, %v949, %v945
      %s955 = scalar_lea.vmem %s5, 16
      %v956 = vld [vmem:[%s955] ss:$8 sm:$0x3]
      %v958 = vperm.slane %v956, 0
      %v959 = vperm.slane %v956, 1
      %v962 = vmul.f32 %v958, %v953
      %v963 = vmul.f32 %v959, %v951
      %v964 = vmul.f32 %v958, %v954
      %v965 = vmul.f32 %v959, %v952
      %966 = vset.pattern.permute.xlu0 8
      %967 = vperm.xlu0 %966, %v605
      %v968 = vpop.permute.xlu0 %967
      %970 = vset.pattern.permute.xlu0 8
      %971 = vperm.xlu0 %970, %v606
      %v972 = vpop.permute.xlu0 %971
      %v974 = vmul.f32 %v968, %v962
      %v975 = vmul.f32 %v968, %v963
      %v976 = vmul.f32 %v972, %v964
      %v977 = vmul.f32 %v972, %v965
      %v978 = vadd.f32 %v938, %v974
      %v979 = vadd.f32 %v939, %v975
      %v980 = vadd.f32 %v940, %v976
      %v981 = vadd.f32 %v941, %v977
      %982 = vrot.lane.b32.xlu0 %v601, 33
      %v983 = vpop.permute.xlu0 %982
      %984 = vrot.lane.b32.xlu0 %v603, 33
      %v985 = vpop.permute.xlu0 %984
      %986 = vrot.lane.b32.xlu0 %v602, 33
      %v987 = vpop.permute.xlu0 %986
      %988 = vrot.lane.b32.xlu0 %v604, 33
      %v989 = vpop.permute.xlu0 %988
      %vm990 = vcmp.lt.s32.totalorder %v630, 33
      %v991 = vsel %vm990, %v983, %v987
      %v992 = vsel %vm990, %v985, %v989
      %v993 = vsel %vm990, %v987, %v983
      %v994 = vsel %vm990, %v989, %v985
      %s995 = scalar_lea.vmem %s5, 17
      %v996 = vld [vmem:[%s995] ss:$8 sm:$0x3]
      %v998 = vperm.slane %v996, 0
      %v999 = vperm.slane %v996, 1
      %v1002 = vmul.f32 %v998, %v993
      %v1003 = vmul.f32 %v999, %v991
      %v1004 = vmul.f32 %v998, %v994
      %v1005 = vmul.f32 %v999, %v992
      %1006 = vset.pattern.permute.xlu0 9
      %1007 = vperm.xlu0 %1006, %v605
      %v1008 = vpop.permute.xlu0 %1007
      %1010 = vset.pattern.permute.xlu0 9
      %1011 = vperm.xlu0 %1010, %v606
      %v1012 = vpop.permute.xlu0 %1011
      %v1014 = vmul.f32 %v1008, %v1002
      %v1015 = vmul.f32 %v1008, %v1003
      %v1016 = vmul.f32 %v1012, %v1004
      %v1017 = vmul.f32 %v1012, %v1005
      %v1018 = vadd.f32 %v978, %v1014
      %v1019 = vadd.f32 %v979, %v1015
      %v1020 = vadd.f32 %v980, %v1016
      %v1021 = vadd.f32 %v981, %v1017
      %1022 = vrot.lane.b32.xlu0 %v601, 32
      %v1023 = vpop.permute.xlu0 %1022
      %1024 = vrot.lane.b32.xlu0 %v603, 32
      %v1025 = vpop.permute.xlu0 %1024
      %1026 = vrot.lane.b32.xlu0 %v602, 32
      %v1027 = vpop.permute.xlu0 %1026
      %1028 = vrot.lane.b32.xlu0 %v604, 32
      %v1029 = vpop.permute.xlu0 %1028
      %vm1030 = vcmp.lt.s32.totalorder %v630, 32
      %v1031 = vsel %vm1030, %v1023, %v1027
      %v1032 = vsel %vm1030, %v1025, %v1029
      %v1033 = vsel %vm1030, %v1027, %v1023
      %v1034 = vsel %vm1030, %v1029, %v1025
      %s1035 = scalar_lea.vmem %s5, 18
      %v1036 = vld [vmem:[%s1035] ss:$8 sm:$0x3]
      %v1038 = vperm.slane %v1036, 0
      %v1039 = vperm.slane %v1036, 1
      %v1042 = vmul.f32 %v1038, %v1033
      %v1043 = vmul.f32 %v1039, %v1031
      %v1044 = vmul.f32 %v1038, %v1034
      %v1045 = vmul.f32 %v1039, %v1032
      %1046 = vset.pattern.permute.xlu0 10
      %1047 = vperm.xlu0 %1046, %v605
      %v1048 = vpop.permute.xlu0 %1047
      %1050 = vset.pattern.permute.xlu0 10
      %1051 = vperm.xlu0 %1050, %v606
      %v1052 = vpop.permute.xlu0 %1051
      %v1054 = vmul.f32 %v1048, %v1042
      %v1055 = vmul.f32 %v1048, %v1043
      %v1056 = vmul.f32 %v1052, %v1044
      %v1057 = vmul.f32 %v1052, %v1045
      %v1058 = vadd.f32 %v1018, %v1054
      %v1059 = vadd.f32 %v1019, %v1055
      %v1060 = vadd.f32 %v1020, %v1056
      %v1061 = vadd.f32 %v1021, %v1057
      %1062 = vrot.lane.b32.xlu0 %v601, 31
      %v1063 = vpop.permute.xlu0 %1062
      %1064 = vrot.lane.b32.xlu0 %v603, 31
      %v1065 = vpop.permute.xlu0 %1064
      %1066 = vrot.lane.b32.xlu0 %v602, 31
      %v1067 = vpop.permute.xlu0 %1066
      %1068 = vrot.lane.b32.xlu0 %v604, 31
      %v1069 = vpop.permute.xlu0 %1068
      %vm1070 = vcmp.lt.s32.totalorder %v630, 31
      %v1071 = vsel %vm1070, %v1063, %v1067
      %v1072 = vsel %vm1070, %v1065, %v1069
      %v1073 = vsel %vm1070, %v1067, %v1063
      %v1074 = vsel %vm1070, %v1069, %v1065
      %s1075 = scalar_lea.vmem %s5, 19
      %v1076 = vld [vmem:[%s1075] ss:$8 sm:$0x3]
      %v1078 = vperm.slane %v1076, 0
      %v1079 = vperm.slane %v1076, 1
      %v1082 = vmul.f32 %v1078, %v1073
      %v1083 = vmul.f32 %v1079, %v1071
      %v1084 = vmul.f32 %v1078, %v1074
      %v1085 = vmul.f32 %v1079, %v1072
      %1086 = vset.pattern.permute.xlu0 11
      %1087 = vperm.xlu0 %1086, %v605
      %v1088 = vpop.permute.xlu0 %1087
      %1090 = vset.pattern.permute.xlu0 11
      %1091 = vperm.xlu0 %1090, %v606
      %v1092 = vpop.permute.xlu0 %1091
      %v1094 = vmul.f32 %v1088, %v1082
      %v1095 = vmul.f32 %v1088, %v1083
      %v1096 = vmul.f32 %v1092, %v1084
      %v1097 = vmul.f32 %v1092, %v1085
      %v1098 = vadd.f32 %v1058, %v1094
      %v1099 = vadd.f32 %v1059, %v1095
      %v1100 = vadd.f32 %v1060, %v1096
      %v1101 = vadd.f32 %v1061, %v1097
      %1102 = vrot.lane.b32.xlu0 %v601, 30
      %v1103 = vpop.permute.xlu0 %1102
      %1104 = vrot.lane.b32.xlu0 %v603, 30
      %v1105 = vpop.permute.xlu0 %1104
      %1106 = vrot.lane.b32.xlu0 %v602, 30
      %v1107 = vpop.permute.xlu0 %1106
      %1108 = vrot.lane.b32.xlu0 %v604, 30
      %v1109 = vpop.permute.xlu0 %1108
      %vm1110 = vcmp.lt.s32.totalorder %v630, 30
      %v1111 = vsel %vm1110, %v1103, %v1107
      %v1112 = vsel %vm1110, %v1105, %v1109
      %v1113 = vsel %vm1110, %v1107, %v1103
      %v1114 = vsel %vm1110, %v1109, %v1105
      %s1115 = scalar_lea.vmem %s5, 20
      %v1116 = vld [vmem:[%s1115] ss:$8 sm:$0x3]
      %v1118 = vperm.slane %v1116, 0
      %v1119 = vperm.slane %v1116, 1
      %v1122 = vmul.f32 %v1118, %v1113
      %v1123 = vmul.f32 %v1119, %v1111
      %v1124 = vmul.f32 %v1118, %v1114
      %v1125 = vmul.f32 %v1119, %v1112
      %1126 = vset.pattern.permute.xlu0 12
      %1127 = vperm.xlu0 %1126, %v605
      %v1128 = vpop.permute.xlu0 %1127
      %1130 = vset.pattern.permute.xlu0 12
      %1131 = vperm.xlu0 %1130, %v606
      %v1132 = vpop.permute.xlu0 %1131
      %v1134 = vmul.f32 %v1128, %v1122
      %v1135 = vmul.f32 %v1128, %v1123
      %v1136 = vmul.f32 %v1132, %v1124
      %v1137 = vmul.f32 %v1132, %v1125
      %v1138 = vadd.f32 %v1098, %v1134
      %v1139 = vadd.f32 %v1099, %v1135
      %v1140 = vadd.f32 %v1100, %v1136
      %v1141 = vadd.f32 %v1101, %v1137
      %1142 = vrot.lane.b32.xlu0 %v601, 29
      %v1143 = vpop.permute.xlu0 %1142
      %1144 = vrot.lane.b32.xlu0 %v603, 29
      %v1145 = vpop.permute.xlu0 %1144
      %1146 = vrot.lane.b32.xlu0 %v602, 29
      %v1147 = vpop.permute.xlu0 %1146
      %1148 = vrot.lane.b32.xlu0 %v604, 29
      %v1149 = vpop.permute.xlu0 %1148
      %vm1150 = vcmp.lt.s32.totalorder %v630, 29
      %v1151 = vsel %vm1150, %v1143, %v1147
      %v1152 = vsel %vm1150, %v1145, %v1149
      %v1153 = vsel %vm1150, %v1147, %v1143
      %v1154 = vsel %vm1150, %v1149, %v1145
      %s1155 = scalar_lea.vmem %s5, 21
      %v1156 = vld [vmem:[%s1155] ss:$8 sm:$0x3]
      %v1158 = vperm.slane %v1156, 0
      %v1159 = vperm.slane %v1156, 1
      %v1162 = vmul.f32 %v1158, %v1153
      %v1163 = vmul.f32 %v1159, %v1151
      %v1164 = vmul.f32 %v1158, %v1154
      %v1165 = vmul.f32 %v1159, %v1152
      %1166 = vset.pattern.permute.xlu0 13
      %1167 = vperm.xlu0 %1166, %v605
      %v1168 = vpop.permute.xlu0 %1167
      %1170 = vset.pattern.permute.xlu0 13
      %1171 = vperm.xlu0 %1170, %v606
      %v1172 = vpop.permute.xlu0 %1171
      %v1174 = vmul.f32 %v1168, %v1162
      %v1175 = vmul.f32 %v1168, %v1163
      %v1176 = vmul.f32 %v1172, %v1164
      %v1177 = vmul.f32 %v1172, %v1165
      %v1178 = vadd.f32 %v1138, %v1174
      %v1179 = vadd.f32 %v1139, %v1175
      %v1180 = vadd.f32 %v1140, %v1176
      %v1181 = vadd.f32 %v1141, %v1177
      %1182 = vrot.lane.b32.xlu0 %v601, 19
      %v1183 = vpop.permute.xlu0 %1182
      %1184 = vrot.lane.b32.xlu0 %v603, 19
      %v1185 = vpop.permute.xlu0 %1184
      %1186 = vrot.lane.b32.xlu0 %v602, 19
      %v1187 = vpop.permute.xlu0 %1186
      %1188 = vrot.lane.b32.xlu0 %v604, 19
      %v1189 = vpop.permute.xlu0 %1188
      %vm1190 = vcmp.lt.s32.totalorder %v630, 19
      %v1191 = vsel %vm1190, %v1183, %v1187
      %v1192 = vsel %vm1190, %v1185, %v1189
      %v1193 = vsel %vm1190, %v1187, %v1183
      %v1194 = vsel %vm1190, %v1189, %v1185
      %s1195 = scalar_lea.vmem %s5, 22
      %v1196 = vld [vmem:[%s1195] ss:$8 sm:$0x3]
      %v1198 = vperm.slane %v1196, 0
      %v1199 = vperm.slane %v1196, 1
      %v1202 = vmul.f32 %v1198, %v1193
      %v1203 = vmul.f32 %v1199, %v1191
      %v1204 = vmul.f32 %v1198, %v1194
      %v1205 = vmul.f32 %v1199, %v1192
      %1206 = vset.pattern.permute.xlu0 14
      %1207 = vperm.xlu0 %1206, %v605
      %v1208 = vpop.permute.xlu0 %1207
      %1210 = vset.pattern.permute.xlu0 14
      %1211 = vperm.xlu0 %1210, %v606
      %v1212 = vpop.permute.xlu0 %1211
      %v1214 = vmul.f32 %v1208, %v1202
      %v1215 = vmul.f32 %v1208, %v1203
      %v1216 = vmul.f32 %v1212, %v1204
      %v1217 = vmul.f32 %v1212, %v1205
      %v1218 = vadd.f32 %v1178, %v1214
      %v1219 = vadd.f32 %v1179, %v1215
      %v1220 = vadd.f32 %v1180, %v1216
      %v1221 = vadd.f32 %v1181, %v1217
      %1222 = vrot.lane.b32.xlu0 %v601, 18
      %v1223 = vpop.permute.xlu0 %1222
      %1224 = vrot.lane.b32.xlu0 %v603, 18
      %v1225 = vpop.permute.xlu0 %1224
      %1226 = vrot.lane.b32.xlu0 %v602, 18
      %v1227 = vpop.permute.xlu0 %1226
      %1228 = vrot.lane.b32.xlu0 %v604, 18
      %v1229 = vpop.permute.xlu0 %1228
      %vm1230 = vcmp.lt.s32.totalorder %v630, 18
      %v1231 = vsel %vm1230, %v1223, %v1227
      %v1232 = vsel %vm1230, %v1225, %v1229
      %v1233 = vsel %vm1230, %v1227, %v1223
      %v1234 = vsel %vm1230, %v1229, %v1225
      %s1235 = scalar_lea.vmem %s5, 23
      %v1236 = vld [vmem:[%s1235] ss:$8 sm:$0x3]
      %v1238 = vperm.slane %v1236, 0
      %v1239 = vperm.slane %v1236, 1
      %v1242 = vmul.f32 %v1238, %v1233
      %v1243 = vmul.f32 %v1239, %v1231
      %v1244 = vmul.f32 %v1238, %v1234
      %v1245 = vmul.f32 %v1239, %v1232
      %1246 = vset.pattern.permute.xlu0 15
      %1247 = vperm.xlu0 %1246, %v605
      %v1248 = vpop.permute.xlu0 %1247
      %1250 = vset.pattern.permute.xlu0 15
      %1251 = vperm.xlu0 %1250, %v606
      %v1252 = vpop.permute.xlu0 %1251
      %v1254 = vmul.f32 %v1248, %v1242
      %v1255 = vmul.f32 %v1248, %v1243
      %v1256 = vmul.f32 %v1252, %v1244
      %v1257 = vmul.f32 %v1252, %v1245
      %v1258 = vadd.f32 %v1218, %v1254
      %v1259 = vadd.f32 %v1219, %v1255
      %v1260 = vadd.f32 %v1220, %v1256
      %v1261 = vadd.f32 %v1221, %v1257
      %1262 = vrot.lane.b32.xlu0 %v601, 17
      %v1263 = vpop.permute.xlu0 %1262
      %1264 = vrot.lane.b32.xlu0 %v603, 17
      %v1265 = vpop.permute.xlu0 %1264
      %1266 = vrot.lane.b32.xlu0 %v602, 17
      %v1267 = vpop.permute.xlu0 %1266
      %1268 = vrot.lane.b32.xlu0 %v604, 17
      %v1269 = vpop.permute.xlu0 %1268
      %vm1270 = vcmp.lt.s32.totalorder %v630, 17
      %v1271 = vsel %vm1270, %v1263, %v1267
      %v1272 = vsel %vm1270, %v1265, %v1269
      %v1273 = vsel %vm1270, %v1267, %v1263
      %v1274 = vsel %vm1270, %v1269, %v1265
      %s1275 = scalar_lea.vmem %s5, 32
      %v1276 = vld [vmem:[%s1275] ss:$8 sm:$0x3]
      %v1278 = vperm.slane %v1276, 0
      %v1279 = vperm.slane %v1276, 1
      %v1282 = vmul.f32 %v1278, %v1273
      %v1283 = vmul.f32 %v1279, %v1271
      %v1284 = vmul.f32 %v1278, %v1274
      %v1285 = vmul.f32 %v1279, %v1272
      %1286 = vset.pattern.permute.xlu0 16
      %1287 = vperm.xlu0 %1286, %v605
      %v1288 = vpop.permute.xlu0 %1287
      %1290 = vset.pattern.permute.xlu0 16
      %1291 = vperm.xlu0 %1290, %v606
      %v1292 = vpop.permute.xlu0 %1291
      %v1294 = vmul.f32 %v1288, %v1282
      %v1295 = vmul.f32 %v1288, %v1283
      %v1296 = vmul.f32 %v1292, %v1284
      %v1297 = vmul.f32 %v1292, %v1285
      %v1298 = vadd.f32 %v1258, %v1294
      %v1299 = vadd.f32 %v1259, %v1295
      %v1300 = vadd.f32 %v1260, %v1296
      %v1301 = vadd.f32 %v1261, %v1297
      %1302 = vrot.lane.b32.xlu0 %v601, 16
      %v1303 = vpop.permute.xlu0 %1302
      %1304 = vrot.lane.b32.xlu0 %v603, 16
      %v1305 = vpop.permute.xlu0 %1304
      %1306 = vrot.lane.b32.xlu0 %v602, 16
      %v1307 = vpop.permute.xlu0 %1306
      %1308 = vrot.lane.b32.xlu0 %v604, 16
      %v1309 = vpop.permute.xlu0 %1308
      %vm1310 = vcmp.lt.s32.totalorder %v630, 16
      %v1311 = vsel %vm1310, %v1303, %v1307
      %v1312 = vsel %vm1310, %v1305, %v1309
      %v1313 = vsel %vm1310, %v1307, %v1303
      %v1314 = vsel %vm1310, %v1309, %v1305
      %s1315 = scalar_lea.vmem %s5, 33
      %v1316 = vld [vmem:[%s1315] ss:$8 sm:$0x3]
      %v1318 = vperm.slane %v1316, 0
      %v1319 = vperm.slane %v1316, 1
      %v1322 = vmul.f32 %v1318, %v1313
      %v1323 = vmul.f32 %v1319, %v1311
      %v1324 = vmul.f32 %v1318, %v1314
      %v1325 = vmul.f32 %v1319, %v1312
      %1326 = vset.pattern.permute.xlu0 17
      %1327 = vperm.xlu0 %1326, %v605
      %v1328 = vpop.permute.xlu0 %1327
      %1330 = vset.pattern.permute.xlu0 17
      %1331 = vperm.xlu0 %1330, %v606
      %v1332 = vpop.permute.xlu0 %1331
      %v1334 = vmul.f32 %v1328, %v1322
      %v1335 = vmul.f32 %v1328, %v1323
      %v1336 = vmul.f32 %v1332, %v1324
      %v1337 = vmul.f32 %v1332, %v1325
      %v1338 = vadd.f32 %v1298, %v1334
      %v1339 = vadd.f32 %v1299, %v1335
      %v1340 = vadd.f32 %v1300, %v1336
      %v1341 = vadd.f32 %v1301, %v1337
      %1342 = vrot.lane.b32.xlu0 %v601, 15
      %v1343 = vpop.permute.xlu0 %1342
      %1344 = vrot.lane.b32.xlu0 %v603, 15
      %v1345 = vpop.permute.xlu0 %1344
      %1346 = vrot.lane.b32.xlu0 %v602, 15
      %v1347 = vpop.permute.xlu0 %1346
      %1348 = vrot.lane.b32.xlu0 %v604, 15
      %v1349 = vpop.permute.xlu0 %1348
      %vm1350 = vcmp.lt.s32.totalorder %v630, 15
      %v1351 = vsel %vm1350, %v1343, %v1347
      %v1352 = vsel %vm1350, %v1345, %v1349
      %v1353 = vsel %vm1350, %v1347, %v1343
      %v1354 = vsel %vm1350, %v1349, %v1345
      %s1355 = scalar_lea.vmem %s5, 34
      %v1356 = vld [vmem:[%s1355] ss:$8 sm:$0x3]
      %v1358 = vperm.slane %v1356, 0
      %v1359 = vperm.slane %v1356, 1
      %v1362 = vmul.f32 %v1358, %v1353
      %v1363 = vmul.f32 %v1359, %v1351
      %v1364 = vmul.f32 %v1358, %v1354
      %v1365 = vmul.f32 %v1359, %v1352
      %1366 = vset.pattern.permute.xlu0 18
      %1367 = vperm.xlu0 %1366, %v605
      %v1368 = vpop.permute.xlu0 %1367
      %1370 = vset.pattern.permute.xlu0 18
      %1371 = vperm.xlu0 %1370, %v606
      %v1372 = vpop.permute.xlu0 %1371
      %v1374 = vmul.f32 %v1368, %v1362
      %v1375 = vmul.f32 %v1368, %v1363
      %v1376 = vmul.f32 %v1372, %v1364
      %v1377 = vmul.f32 %v1372, %v1365
      %v1378 = vadd.f32 %v1338, %v1374
      %v1379 = vadd.f32 %v1339, %v1375
      %v1380 = vadd.f32 %v1340, %v1376
      %v1381 = vadd.f32 %v1341, %v1377
      %1382 = vrot.lane.b32.xlu0 %v601, 14
      %v1383 = vpop.permute.xlu0 %1382
      %1384 = vrot.lane.b32.xlu0 %v603, 14
      %v1385 = vpop.permute.xlu0 %1384
      %1386 = vrot.lane.b32.xlu0 %v602, 14
      %v1387 = vpop.permute.xlu0 %1386
      %1388 = vrot.lane.b32.xlu0 %v604, 14
      %v1389 = vpop.permute.xlu0 %1388
      %vm1390 = vcmp.lt.s32.totalorder %v630, 14
      %v1391 = vsel %vm1390, %v1383, %v1387
      %v1392 = vsel %vm1390, %v1385, %v1389
      %v1393 = vsel %vm1390, %v1387, %v1383
      %v1394 = vsel %vm1390, %v1389, %v1385
      %s1395 = scalar_lea.vmem %s5, 35
      %v1396 = vld [vmem:[%s1395] ss:$8 sm:$0x3]
      %v1398 = vperm.slane %v1396, 0
      %v1399 = vperm.slane %v1396, 1
      %v1402 = vmul.f32 %v1398, %v1393
      %v1403 = vmul.f32 %v1399, %v1391
      %v1404 = vmul.f32 %v1398, %v1394
      %v1405 = vmul.f32 %v1399, %v1392
      %1406 = vset.pattern.permute.xlu0 19
      %1407 = vperm.xlu0 %1406, %v605
      %v1408 = vpop.permute.xlu0 %1407
      %1410 = vset.pattern.permute.xlu0 19
      %1411 = vperm.xlu0 %1410, %v606
      %v1412 = vpop.permute.xlu0 %1411
      %v1414 = vmul.f32 %v1408, %v1402
      %v1415 = vmul.f32 %v1408, %v1403
      %v1416 = vmul.f32 %v1412, %v1404
      %v1417 = vmul.f32 %v1412, %v1405
      %v1418 = vadd.f32 %v1378, %v1414
      %v1419 = vadd.f32 %v1379, %v1415
      %v1420 = vadd.f32 %v1380, %v1416
      %v1421 = vadd.f32 %v1381, %v1417
      %1422 = vrot.lane.b32.xlu0 %v601, 13
      %v1423 = vpop.permute.xlu0 %1422
      %1424 = vrot.lane.b32.xlu0 %v603, 13
      %v1425 = vpop.permute.xlu0 %1424
      %1426 = vrot.lane.b32.xlu0 %v602, 13
      %v1427 = vpop.permute.xlu0 %1426
      %1428 = vrot.lane.b32.xlu0 %v604, 13
      %v1429 = vpop.permute.xlu0 %1428
      %vm1430 = vcmp.lt.s32.totalorder %v630, 13
      %v1431 = vsel %vm1430, %v1423, %v1427
      %v1432 = vsel %vm1430, %v1425, %v1429
      %v1433 = vsel %vm1430, %v1427, %v1423
      %v1434 = vsel %vm1430, %v1429, %v1425
      %s1435 = scalar_lea.vmem %s5, 36
      %v1436 = vld [vmem:[%s1435] ss:$8 sm:$0x3]
      %v1438 = vperm.slane %v1436, 0
      %v1439 = vperm.slane %v1436, 1
      %v1442 = vmul.f32 %v1438, %v1433
      %v1443 = vmul.f32 %v1439, %v1431
      %v1444 = vmul.f32 %v1438, %v1434
      %v1445 = vmul.f32 %v1439, %v1432
      %1446 = vset.pattern.permute.xlu0 20
      %1447 = vperm.xlu0 %1446, %v605
      %v1448 = vpop.permute.xlu0 %1447
      %1450 = vset.pattern.permute.xlu0 20
      %1451 = vperm.xlu0 %1450, %v606
      %v1452 = vpop.permute.xlu0 %1451
      %v1454 = vmul.f32 %v1448, %v1442
      %v1455 = vmul.f32 %v1448, %v1443
      %v1456 = vmul.f32 %v1452, %v1444
      %v1457 = vmul.f32 %v1452, %v1445
      %v1458 = vadd.f32 %v1418, %v1454
      %v1459 = vadd.f32 %v1419, %v1455
      %v1460 = vadd.f32 %v1420, %v1456
      %v1461 = vadd.f32 %v1421, %v1457
      %1462 = vrot.lane.b32.xlu0 %v601, 3
      %v1463 = vpop.permute.xlu0 %1462
      %1464 = vrot.lane.b32.xlu0 %v603, 3
      %v1465 = vpop.permute.xlu0 %1464
      %1466 = vrot.lane.b32.xlu0 %v602, 3
      %v1467 = vpop.permute.xlu0 %1466
      %1468 = vrot.lane.b32.xlu0 %v604, 3
      %v1469 = vpop.permute.xlu0 %1468
      %vm1470 = vcmp.lt.s32.totalorder %v630, 3
      %v1471 = vsel %vm1470, %v1463, %v1467
      %v1472 = vsel %vm1470, %v1465, %v1469
      %v1473 = vsel %vm1470, %v1467, %v1463
      %v1474 = vsel %vm1470, %v1469, %v1465
      %s1475 = scalar_lea.vmem %s5, 37
      %v1476 = vld [vmem:[%s1475] ss:$8 sm:$0x3]
      %v1478 = vperm.slane %v1476, 0
      %v1479 = vperm.slane %v1476, 1
      %v1482 = vmul.f32 %v1478, %v1473
      %v1483 = vmul.f32 %v1479, %v1471
      %v1484 = vmul.f32 %v1478, %v1474
      %v1485 = vmul.f32 %v1479, %v1472
      %1486 = vset.pattern.permute.xlu0 21
      %1487 = vperm.xlu0 %1486, %v605
      %v1488 = vpop.permute.xlu0 %1487
      %1490 = vset.pattern.permute.xlu0 21
      %1491 = vperm.xlu0 %1490, %v606
      %v1492 = vpop.permute.xlu0 %1491
      %v1494 = vmul.f32 %v1488, %v1482
      %v1495 = vmul.f32 %v1488, %v1483
      %v1496 = vmul.f32 %v1492, %v1484
      %v1497 = vmul.f32 %v1492, %v1485
      %v1498 = vadd.f32 %v1458, %v1494
      %v1499 = vadd.f32 %v1459, %v1495
      %v1500 = vadd.f32 %v1460, %v1496
      %v1501 = vadd.f32 %v1461, %v1497
      %1502 = vrot.lane.b32.xlu0 %v601, 2
      %v1503 = vpop.permute.xlu0 %1502
      %1504 = vrot.lane.b32.xlu0 %v603, 2
      %v1505 = vpop.permute.xlu0 %1504
      %1506 = vrot.lane.b32.xlu0 %v602, 2
      %v1507 = vpop.permute.xlu0 %1506
      %1508 = vrot.lane.b32.xlu0 %v604, 2
      %v1509 = vpop.permute.xlu0 %1508
      %vm1510 = vcmp.lt.s32.totalorder %v630, 2
      %v1511 = vsel %vm1510, %v1503, %v1507
      %v1512 = vsel %vm1510, %v1505, %v1509
      %v1513 = vsel %vm1510, %v1507, %v1503
      %v1514 = vsel %vm1510, %v1509, %v1505
      %s1515 = scalar_lea.vmem %s5, 38
      %v1516 = vld [vmem:[%s1515] ss:$8 sm:$0x3]
      %v1518 = vperm.slane %v1516, 0
      %v1519 = vperm.slane %v1516, 1
      %v1522 = vmul.f32 %v1518, %v1513
      %v1523 = vmul.f32 %v1519, %v1511
      %v1524 = vmul.f32 %v1518, %v1514
      %v1525 = vmul.f32 %v1519, %v1512
      %1526 = vset.pattern.permute.xlu0 22
      %1527 = vperm.xlu0 %1526, %v605
      %v1528 = vpop.permute.xlu0 %1527
      %1530 = vset.pattern.permute.xlu0 22
      %1531 = vperm.xlu0 %1530, %v606
      %v1532 = vpop.permute.xlu0 %1531
      %v1534 = vmul.f32 %v1528, %v1522
      %v1535 = vmul.f32 %v1528, %v1523
      %v1536 = vmul.f32 %v1532, %v1524
      %v1537 = vmul.f32 %v1532, %v1525
      %v1538 = vadd.f32 %v1498, %v1534
      %v1539 = vadd.f32 %v1499, %v1535
      %v1540 = vadd.f32 %v1500, %v1536
      %v1541 = vadd.f32 %v1501, %v1537
      %1542 = vrot.lane.b32.xlu0 %v601, 1
      %v1543 = vpop.permute.xlu0 %1542
      %1544 = vrot.lane.b32.xlu0 %v603, 1
      %v1545 = vpop.permute.xlu0 %1544
      %1546 = vrot.lane.b32.xlu0 %v602, 1
      %v1547 = vpop.permute.xlu0 %1546
      %1548 = vrot.lane.b32.xlu0 %v604, 1
      %v1549 = vpop.permute.xlu0 %1548
      %vm1550 = vcmp.lt.s32.totalorder %v630, 1
      %v1551 = vsel %vm1550, %v1543, %v1547
      %v1552 = vsel %vm1550, %v1545, %v1549
      %v1553 = vsel %vm1550, %v1547, %v1543
      %v1554 = vsel %vm1550, %v1549, %v1545
      %s1555 = scalar_lea.vmem %s5, 39
      %v1556 = vld [vmem:[%s1555] ss:$8 sm:$0x3]
      %v1558 = vperm.slane %v1556, 0
      %v1559 = vperm.slane %v1556, 1
      %v1562 = vmul.f32 %v1558, %v1553
      %v1563 = vmul.f32 %v1559, %v1551
      %v1564 = vmul.f32 %v1558, %v1554
      %v1565 = vmul.f32 %v1559, %v1552
      %1566 = vset.pattern.permute.xlu0 23
      %1567 = vperm.xlu0 %1566, %v605
      %v1568 = vpop.permute.xlu0 %1567
      %1570 = vset.pattern.permute.xlu0 23
      %1571 = vperm.xlu0 %1570, %v606
      %v1572 = vpop.permute.xlu0 %1571
      %v1574 = vmul.f32 %v1568, %v1562
      %v1575 = vmul.f32 %v1568, %v1563
      %v1576 = vmul.f32 %v1572, %v1564
      %v1577 = vmul.f32 %v1572, %v1565
      %v1578 = vadd.f32 %v1538, %v1574
      %v1579 = vadd.f32 %v1539, %v1575
      %v1580 = vadd.f32 %v1540, %v1576
      %v1581 = vadd.f32 %v1541, %v1577
      %1582 = vrot.lane.b32.xlu0 %v601, 127
      %v1583 = vpop.permute.xlu0 %1582
      %1584 = vrot.lane.b32.xlu0 %v603, 127
      %v1585 = vpop.permute.xlu0 %1584
      %1586 = vrot.lane.b32.xlu0 %v602, 127
      %v1587 = vpop.permute.xlu0 %1586
      %1588 = vrot.lane.b32.xlu0 %v604, 127
      %v1589 = vpop.permute.xlu0 %1588
      %vm1590 = vcmp.lt.s32.totalorder %v630, 127
      %v1591 = vsel %vm1590, %v1583, %v1587
      %v1592 = vsel %vm1590, %v1585, %v1589
      %v1593 = vsel %vm1590, %v1587, %v1583
      %v1594 = vsel %vm1590, %v1589, %v1585
      %s1595 = scalar_lea.vmem %s5, 49
      %v1596 = vld [vmem:[%s1595] ss:$8 sm:$0x3]
      %v1598 = vperm.slane %v1596, 0
      %v1599 = vperm.slane %v1596, 1
      %v1602 = vmul.f32 %v1598, %v1591
      %v1603 = vmul.f32 %v1599, %v1593
      %v1604 = vmul.f32 %v1598, %v1592
      %v1605 = vmul.f32 %v1599, %v1594
      %1606 = vset.pattern.permute.xlu0 25
      %1607 = vperm.xlu0 %1606, %v605
      %v1608 = vpop.permute.xlu0 %1607
      %1610 = vset.pattern.permute.xlu0 25
      %1611 = vperm.xlu0 %1610, %v606
      %v1612 = vpop.permute.xlu0 %1611
      %v1614 = vmul.f32 %v1608, %v1602
      %v1615 = vmul.f32 %v1608, %v1603
      %v1616 = vmul.f32 %v1612, %v1604
      %v1617 = vmul.f32 %v1612, %v1605
      %v1618 = vadd.f32 %v1578, %v1614
      %v1619 = vadd.f32 %v1579, %v1615
      %v1620 = vadd.f32 %v1580, %v1616
      %v1621 = vadd.f32 %v1581, %v1617
      %1622 = vrot.lane.b32.xlu0 %v601, 126
      %v1623 = vpop.permute.xlu0 %1622
      %1624 = vrot.lane.b32.xlu0 %v603, 126
      %v1625 = vpop.permute.xlu0 %1624
      %1626 = vrot.lane.b32.xlu0 %v602, 126
      %v1627 = vpop.permute.xlu0 %1626
      %1628 = vrot.lane.b32.xlu0 %v604, 126
      %v1629 = vpop.permute.xlu0 %1628
      %vm1630 = vcmp.lt.s32.totalorder %v630, 126
      %v1631 = vsel %vm1630, %v1623, %v1627
      %v1632 = vsel %vm1630, %v1625, %v1629
      %v1633 = vsel %vm1630, %v1627, %v1623
      %v1634 = vsel %vm1630, %v1629, %v1625
      %s1635 = scalar_lea.vmem %s5, 50
      %v1636 = vld [vmem:[%s1635] ss:$8 sm:$0x3]
      %v1638 = vperm.slane %v1636, 0
      %v1639 = vperm.slane %v1636, 1
      %v1642 = vmul.f32 %v1638, %v1631
      %v1643 = vmul.f32 %v1639, %v1633
      %v1644 = vmul.f32 %v1638, %v1632
      %v1645 = vmul.f32 %v1639, %v1634
      %1646 = vset.pattern.permute.xlu0 26
      %1647 = vperm.xlu0 %1646, %v605
      %v1648 = vpop.permute.xlu0 %1647
      %1650 = vset.pattern.permute.xlu0 26
      %1651 = vperm.xlu0 %1650, %v606
      %v1652 = vpop.permute.xlu0 %1651
      %v1654 = vmul.f32 %v1648, %v1642
      %v1655 = vmul.f32 %v1648, %v1643
      %v1656 = vmul.f32 %v1652, %v1644
      %v1657 = vmul.f32 %v1652, %v1645
      %v1658 = vadd.f32 %v1618, %v1654
      %v1659 = vadd.f32 %v1619, %v1655
      %v1660 = vadd.f32 %v1620, %v1656
      %v1661 = vadd.f32 %v1621, %v1657
      %1662 = vrot.lane.b32.xlu0 %v601, 125
      %v1663 = vpop.permute.xlu0 %1662
      %1664 = vrot.lane.b32.xlu0 %v603, 125
      %v1665 = vpop.permute.xlu0 %1664
      %1666 = vrot.lane.b32.xlu0 %v602, 125
      %v1667 = vpop.permute.xlu0 %1666
      %1668 = vrot.lane.b32.xlu0 %v604, 125
      %v1669 = vpop.permute.xlu0 %1668
      %vm1670 = vcmp.lt.s32.totalorder %v630, 125
      %v1671 = vsel %vm1670, %v1663, %v1667
      %v1672 = vsel %vm1670, %v1665, %v1669
      %v1673 = vsel %vm1670, %v1667, %v1663
      %v1674 = vsel %vm1670, %v1669, %v1665
      %s1675 = scalar_lea.vmem %s5, 51
      %v1676 = vld [vmem:[%s1675] ss:$8 sm:$0x3]
      %v1678 = vperm.slane %v1676, 0
      %v1679 = vperm.slane %v1676, 1
      %v1682 = vmul.f32 %v1678, %v1671
      %v1683 = vmul.f32 %v1679, %v1673
      %v1684 = vmul.f32 %v1678, %v1672
      %v1685 = vmul.f32 %v1679, %v1674
      %1686 = vset.pattern.permute.xlu0 27
      %1687 = vperm.xlu0 %1686, %v605
      %v1688 = vpop.permute.xlu0 %1687
      %1690 = vset.pattern.permute.xlu0 27
      %1691 = vperm.xlu0 %1690, %v606
      %v1692 = vpop.permute.xlu0 %1691
      %v1694 = vmul.f32 %v1688, %v1682
      %v1695 = vmul.f32 %v1688, %v1683
      %v1696 = vmul.f32 %v1692, %v1684
      %v1697 = vmul.f32 %v1692, %v1685
      %v1698 = vadd.f32 %v1658, %v1694
      %v1699 = vadd.f32 %v1659, %v1695
      %v1700 = vadd.f32 %v1660, %v1696
      %v1701 = vadd.f32 %v1661, %v1697
      %1702 = vrot.lane.b32.xlu0 %v601, 115
      %v1703 = vpop.permute.xlu0 %1702
      %1704 = vrot.lane.b32.xlu0 %v603, 115
      %v1705 = vpop.permute.xlu0 %1704
      %1706 = vrot.lane.b32.xlu0 %v602, 115
      %v1707 = vpop.permute.xlu0 %1706
      %1708 = vrot.lane.b32.xlu0 %v604, 115
      %v1709 = vpop.permute.xlu0 %1708
      %vm1710 = vcmp.lt.s32.totalorder %v630, 115
      %v1711 = vsel %vm1710, %v1703, %v1707
      %v1712 = vsel %vm1710, %v1705, %v1709
      %v1713 = vsel %vm1710, %v1707, %v1703
      %v1714 = vsel %vm1710, %v1709, %v1705
      %s1715 = scalar_lea.vmem %s5, 52
      %v1716 = vld [vmem:[%s1715] ss:$8 sm:$0x3]
      %v1718 = vperm.slane %v1716, 0
      %v1719 = vperm.slane %v1716, 1
      %v1722 = vmul.f32 %v1718, %v1711
      %v1723 = vmul.f32 %v1719, %v1713
      %v1724 = vmul.f32 %v1718, %v1712
      %v1725 = vmul.f32 %v1719, %v1714
      %1726 = vset.pattern.permute.xlu0 28
      %1727 = vperm.xlu0 %1726, %v605
      %v1728 = vpop.permute.xlu0 %1727
      %1730 = vset.pattern.permute.xlu0 28
      %1731 = vperm.xlu0 %1730, %v606
      %v1732 = vpop.permute.xlu0 %1731
      %v1734 = vmul.f32 %v1728, %v1722
      %v1735 = vmul.f32 %v1728, %v1723
      %v1736 = vmul.f32 %v1732, %v1724
      %v1737 = vmul.f32 %v1732, %v1725
      %v1738 = vadd.f32 %v1698, %v1734
      %v1739 = vadd.f32 %v1699, %v1735
      %v1740 = vadd.f32 %v1700, %v1736
      %v1741 = vadd.f32 %v1701, %v1737
      %1742 = vrot.lane.b32.xlu0 %v601, 114
      %v1743 = vpop.permute.xlu0 %1742
      %1744 = vrot.lane.b32.xlu0 %v603, 114
      %v1745 = vpop.permute.xlu0 %1744
      %1746 = vrot.lane.b32.xlu0 %v602, 114
      %v1747 = vpop.permute.xlu0 %1746
      %1748 = vrot.lane.b32.xlu0 %v604, 114
      %v1749 = vpop.permute.xlu0 %1748
      %vm1750 = vcmp.lt.s32.totalorder %v630, 114
      %v1751 = vsel %vm1750, %v1743, %v1747
      %v1752 = vsel %vm1750, %v1745, %v1749
      %v1753 = vsel %vm1750, %v1747, %v1743
      %v1754 = vsel %vm1750, %v1749, %v1745
      %s1755 = scalar_lea.vmem %s5, 53
      %v1756 = vld [vmem:[%s1755] ss:$8 sm:$0x3]
      %v1758 = vperm.slane %v1756, 0
      %v1759 = vperm.slane %v1756, 1
      %v1762 = vmul.f32 %v1758, %v1751
      %v1763 = vmul.f32 %v1759, %v1753
      %v1764 = vmul.f32 %v1758, %v1752
      %v1765 = vmul.f32 %v1759, %v1754
      %1766 = vset.pattern.permute.xlu0 29
      %1767 = vperm.xlu0 %1766, %v605
      %v1768 = vpop.permute.xlu0 %1767
      %1770 = vset.pattern.permute.xlu0 29
      %1771 = vperm.xlu0 %1770, %v606
      %v1772 = vpop.permute.xlu0 %1771
      %v1774 = vmul.f32 %v1768, %v1762
      %v1775 = vmul.f32 %v1768, %v1763
      %v1776 = vmul.f32 %v1772, %v1764
      %v1777 = vmul.f32 %v1772, %v1765
      %v1778 = vadd.f32 %v1738, %v1774
      %v1779 = vadd.f32 %v1739, %v1775
      %v1780 = vadd.f32 %v1740, %v1776
      %v1781 = vadd.f32 %v1741, %v1777
      %1782 = vrot.lane.b32.xlu0 %v601, 113
      %v1783 = vpop.permute.xlu0 %1782
      %1784 = vrot.lane.b32.xlu0 %v603, 113
      %v1785 = vpop.permute.xlu0 %1784
      %1786 = vrot.lane.b32.xlu0 %v602, 113
      %v1787 = vpop.permute.xlu0 %1786
      %1788 = vrot.lane.b32.xlu0 %v604, 113
      %v1789 = vpop.permute.xlu0 %1788
      %vm1790 = vcmp.lt.s32.totalorder %v630, 113
      %v1791 = vsel %vm1790, %v1783, %v1787
      %v1792 = vsel %vm1790, %v1785, %v1789
      %v1793 = vsel %vm1790, %v1787, %v1783
      %v1794 = vsel %vm1790, %v1789, %v1785
      %s1795 = scalar_lea.vmem %s5, 54
      %v1796 = vld [vmem:[%s1795] ss:$8 sm:$0x3]
      %v1798 = vperm.slane %v1796, 0
      %v1799 = vperm.slane %v1796, 1
      %v1802 = vmul.f32 %v1798, %v1791
      %v1803 = vmul.f32 %v1799, %v1793
      %v1804 = vmul.f32 %v1798, %v1792
      %v1805 = vmul.f32 %v1799, %v1794
      %1806 = vset.pattern.permute.xlu0 30
      %1807 = vperm.xlu0 %1806, %v605
      %v1808 = vpop.permute.xlu0 %1807
      %1810 = vset.pattern.permute.xlu0 30
      %1811 = vperm.xlu0 %1810, %v606
      %v1812 = vpop.permute.xlu0 %1811
      %v1814 = vmul.f32 %v1808, %v1802
      %v1815 = vmul.f32 %v1808, %v1803
      %v1816 = vmul.f32 %v1812, %v1804
      %v1817 = vmul.f32 %v1812, %v1805
      %v1818 = vadd.f32 %v1778, %v1814
      %v1819 = vadd.f32 %v1779, %v1815
      %v1820 = vadd.f32 %v1780, %v1816
      %v1821 = vadd.f32 %v1781, %v1817
      %1822 = vrot.lane.b32.xlu0 %v601, 112
      %v1823 = vpop.permute.xlu0 %1822
      %1824 = vrot.lane.b32.xlu0 %v603, 112
      %v1825 = vpop.permute.xlu0 %1824
      %1826 = vrot.lane.b32.xlu0 %v602, 112
      %v1827 = vpop.permute.xlu0 %1826
      %1828 = vrot.lane.b32.xlu0 %v604, 112
      %v1829 = vpop.permute.xlu0 %1828
      %vm1830 = vcmp.lt.s32.totalorder %v630, 112
      %v1831 = vsel %vm1830, %v1823, %v1827
      %v1832 = vsel %vm1830, %v1825, %v1829
      %v1833 = vsel %vm1830, %v1827, %v1823
      %v1834 = vsel %vm1830, %v1829, %v1825
      %s1835 = scalar_lea.vmem %s5, 55
      %v1836 = vld [vmem:[%s1835] ss:$8 sm:$0x3]
      %v1838 = vperm.slane %v1836, 0
      %v1839 = vperm.slane %v1836, 1
      %v1842 = vmul.f32 %v1838, %v1831
      %v1843 = vmul.f32 %v1839, %v1833
      %v1844 = vmul.f32 %v1838, %v1832
      %v1845 = vmul.f32 %v1839, %v1834
      %1846 = vset.pattern.permute.xlu0 31
      %1847 = vperm.xlu0 %1846, %v605
      %v1848 = vpop.permute.xlu0 %1847
      %1850 = vset.pattern.permute.xlu0 31
      %1851 = vperm.xlu0 %1850, %v606
      %v1852 = vpop.permute.xlu0 %1851
      %v1854 = vmul.f32 %v1848, %v1842
      %v1855 = vmul.f32 %v1848, %v1843
      %v1856 = vmul.f32 %v1852, %v1844
      %v1857 = vmul.f32 %v1852, %v1845
      %v1858 = vadd.f32 %v1818, %v1854
      %v1859 = vadd.f32 %v1819, %v1855
      %v1860 = vadd.f32 %v1820, %v1856
      %v1861 = vadd.f32 %v1821, %v1857
      %1862 = vrot.lane.b32.xlu0 %v601, 111
      %v1863 = vpop.permute.xlu0 %1862
      %1864 = vrot.lane.b32.xlu0 %v603, 111
      %v1865 = vpop.permute.xlu0 %1864
      %1866 = vrot.lane.b32.xlu0 %v602, 111
      %v1867 = vpop.permute.xlu0 %1866
      %1868 = vrot.lane.b32.xlu0 %v604, 111
      %v1869 = vpop.permute.xlu0 %1868
      %vm1870 = vcmp.lt.s32.totalorder %v630, 111
      %v1871 = vsel %vm1870, %v1863, %v1867
      %v1872 = vsel %vm1870, %v1865, %v1869
      %v1873 = vsel %vm1870, %v1867, %v1863
      %v1874 = vsel %vm1870, %v1869, %v1865
      %s1875 = scalar_lea.vmem %s5, 64
      %v1876 = vld [vmem:[%s1875] ss:$8 sm:$0x3]
      %v1878 = vperm.slane %v1876, 0
      %v1879 = vperm.slane %v1876, 1
      %v1882 = vmul.f32 %v1878, %v1871
      %v1883 = vmul.f32 %v1879, %v1873
      %v1884 = vmul.f32 %v1878, %v1872
      %v1885 = vmul.f32 %v1879, %v1874
      %1886 = vset.pattern.permute.xlu0 32
      %1887 = vperm.xlu0 %1886, %v605
      %v1888 = vpop.permute.xlu0 %1887
      %1890 = vset.pattern.permute.xlu0 32
      %1891 = vperm.xlu0 %1890, %v606
      %v1892 = vpop.permute.xlu0 %1891
      %v1894 = vmul.f32 %v1888, %v1882
      %v1895 = vmul.f32 %v1888, %v1883
      %v1896 = vmul.f32 %v1892, %v1884
      %v1897 = vmul.f32 %v1892, %v1885
      %v1898 = vadd.f32 %v1858, %v1894
      %v1899 = vadd.f32 %v1859, %v1895
      %v1900 = vadd.f32 %v1860, %v1896
      %v1901 = vadd.f32 %v1861, %v1897
      %1902 = vrot.lane.b32.xlu0 %v601, 110
      %v1903 = vpop.permute.xlu0 %1902
      %1904 = vrot.lane.b32.xlu0 %v603, 110
      %v1905 = vpop.permute.xlu0 %1904
      %1906 = vrot.lane.b32.xlu0 %v602, 110
      %v1907 = vpop.permute.xlu0 %1906
      %1908 = vrot.lane.b32.xlu0 %v604, 110
      %v1909 = vpop.permute.xlu0 %1908
      %vm1910 = vcmp.lt.s32.totalorder %v630, 110
      %v1911 = vsel %vm1910, %v1903, %v1907
      %v1912 = vsel %vm1910, %v1905, %v1909
      %v1913 = vsel %vm1910, %v1907, %v1903
      %v1914 = vsel %vm1910, %v1909, %v1905
      %s1915 = scalar_lea.vmem %s5, 65
      %v1916 = vld [vmem:[%s1915] ss:$8 sm:$0x3]
      %v1918 = vperm.slane %v1916, 0
      %v1919 = vperm.slane %v1916, 1
      %v1922 = vmul.f32 %v1918, %v1911
      %v1923 = vmul.f32 %v1919, %v1913
      %v1924 = vmul.f32 %v1918, %v1912
      %v1925 = vmul.f32 %v1919, %v1914
      %1926 = vset.pattern.permute.xlu0 33
      %1927 = vperm.xlu0 %1926, %v605
      %v1928 = vpop.permute.xlu0 %1927
      %1930 = vset.pattern.permute.xlu0 33
      %1931 = vperm.xlu0 %1930, %v606
      %v1932 = vpop.permute.xlu0 %1931
      %v1934 = vmul.f32 %v1928, %v1922
      %v1935 = vmul.f32 %v1928, %v1923
      %v1936 = vmul.f32 %v1932, %v1924
      %v1937 = vmul.f32 %v1932, %v1925
      %v1938 = vadd.f32 %v1898, %v1934
      %v1939 = vadd.f32 %v1899, %v1935
      %v1940 = vadd.f32 %v1900, %v1936
      %v1941 = vadd.f32 %v1901, %v1937
      %1942 = vrot.lane.b32.xlu0 %v601, 109
      %v1943 = vpop.permute.xlu0 %1942
      %1944 = vrot.lane.b32.xlu0 %v603, 109
      %v1945 = vpop.permute.xlu0 %1944
      %1946 = vrot.lane.b32.xlu0 %v602, 109
      %v1947 = vpop.permute.xlu0 %1946
      %1948 = vrot.lane.b32.xlu0 %v604, 109
      %v1949 = vpop.permute.xlu0 %1948
      %vm1950 = vcmp.lt.s32.totalorder %v630, 109
      %v1951 = vsel %vm1950, %v1943, %v1947
      %v1952 = vsel %vm1950, %v1945, %v1949
      %v1953 = vsel %vm1950, %v1947, %v1943
      %v1954 = vsel %vm1950, %v1949, %v1945
      %s1955 = scalar_lea.vmem %s5, 66
      %v1956 = vld [vmem:[%s1955] ss:$8 sm:$0x3]
      %v1958 = vperm.slane %v1956, 0
      %v1959 = vperm.slane %v1956, 1
      %v1962 = vmul.f32 %v1958, %v1951
      %v1963 = vmul.f32 %v1959, %v1953
      %v1964 = vmul.f32 %v1958, %v1952
      %v1965 = vmul.f32 %v1959, %v1954
      %1966 = vset.pattern.permute.xlu0 34
      %1967 = vperm.xlu0 %1966, %v605
      %v1968 = vpop.permute.xlu0 %1967
      %1970 = vset.pattern.permute.xlu0 34
      %1971 = vperm.xlu0 %1970, %v606
      %v1972 = vpop.permute.xlu0 %1971
      %v1974 = vmul.f32 %v1968, %v1962
      %v1975 = vmul.f32 %v1968, %v1963
      %v1976 = vmul.f32 %v1972, %v1964
      %v1977 = vmul.f32 %v1972, %v1965
      %v1978 = vadd.f32 %v1938, %v1974
      %v1979 = vadd.f32 %v1939, %v1975
      %v1980 = vadd.f32 %v1940, %v1976
      %v1981 = vadd.f32 %v1941, %v1977
      %1982 = vrot.lane.b32.xlu0 %v601, 99
      %v1983 = vpop.permute.xlu0 %1982
      %1984 = vrot.lane.b32.xlu0 %v603, 99
      %v1985 = vpop.permute.xlu0 %1984
      %1986 = vrot.lane.b32.xlu0 %v602, 99
      %v1987 = vpop.permute.xlu0 %1986
      %1988 = vrot.lane.b32.xlu0 %v604, 99
      %v1989 = vpop.permute.xlu0 %1988
      %vm1990 = vcmp.lt.s32.totalorder %v630, 99
      %v1991 = vsel %vm1990, %v1983, %v1987
      %v1992 = vsel %vm1990, %v1985, %v1989
      %v1993 = vsel %vm1990, %v1987, %v1983
      %v1994 = vsel %vm1990, %v1989, %v1985
      %s1995 = scalar_lea.vmem %s5, 67
      %v1996 = vld [vmem:[%s1995] ss:$8 sm:$0x3]
      %v1998 = vperm.slane %v1996, 0
      %v1999 = vperm.slane %v1996, 1
      %v2002 = vmul.f32 %v1998, %v1991
      %v2003 = vmul.f32 %v1999, %v1993
      %v2004 = vmul.f32 %v1998, %v1992
      %v2005 = vmul.f32 %v1999, %v1994
      %2006 = vset.pattern.permute.xlu0 35
      %2007 = vperm.xlu0 %2006, %v605
      %v2008 = vpop.permute.xlu0 %2007
      %2010 = vset.pattern.permute.xlu0 35
      %2011 = vperm.xlu0 %2010, %v606
      %v2012 = vpop.permute.xlu0 %2011
      %v2014 = vmul.f32 %v2008, %v2002
      %v2015 = vmul.f32 %v2008, %v2003
      %v2016 = vmul.f32 %v2012, %v2004
      %v2017 = vmul.f32 %v2012, %v2005
      %v2018 = vadd.f32 %v1978, %v2014
      %v2019 = vadd.f32 %v1979, %v2015
      %v2020 = vadd.f32 %v1980, %v2016
      %v2021 = vadd.f32 %v1981, %v2017
      %2022 = vrot.lane.b32.xlu0 %v601, 98
      %v2023 = vpop.permute.xlu0 %2022
      %2024 = vrot.lane.b32.xlu0 %v603, 98
      %v2025 = vpop.permute.xlu0 %2024
      %2026 = vrot.lane.b32.xlu0 %v602, 98
      %v2027 = vpop.permute.xlu0 %2026
      %2028 = vrot.lane.b32.xlu0 %v604, 98
      %v2029 = vpop.permute.xlu0 %2028
      %vm2030 = vcmp.lt.s32.totalorder %v630, 98
      %v2031 = vsel %vm2030, %v2023, %v2027
      %v2032 = vsel %vm2030, %v2025, %v2029
      %v2033 = vsel %vm2030, %v2027, %v2023
      %v2034 = vsel %vm2030, %v2029, %v2025
      %s2035 = scalar_lea.vmem %s5, 68
      %v2036 = vld [vmem:[%s2035] ss:$8 sm:$0x3]
      %v2038 = vperm.slane %v2036, 0
      %v2039 = vperm.slane %v2036, 1
      %v2042 = vmul.f32 %v2038, %v2031
      %v2043 = vmul.f32 %v2039, %v2033
      %v2044 = vmul.f32 %v2038, %v2032
      %v2045 = vmul.f32 %v2039, %v2034
      %2046 = vset.pattern.permute.xlu0 36
      %2047 = vperm.xlu0 %2046, %v605
      %v2048 = vpop.permute.xlu0 %2047
      %2050 = vset.pattern.permute.xlu0 36
      %2051 = vperm.xlu0 %2050, %v606
      %v2052 = vpop.permute.xlu0 %2051
      %v2054 = vmul.f32 %v2048, %v2042
      %v2055 = vmul.f32 %v2048, %v2043
      %v2056 = vmul.f32 %v2052, %v2044
      %v2057 = vmul.f32 %v2052, %v2045
      %v2058 = vadd.f32 %v2018, %v2054
      %v2059 = vadd.f32 %v2019, %v2055
      %v2060 = vadd.f32 %v2020, %v2056
      %v2061 = vadd.f32 %v2021, %v2057
      %2062 = vrot.lane.b32.xlu0 %v601, 97
      %v2063 = vpop.permute.xlu0 %2062
      %2064 = vrot.lane.b32.xlu0 %v603, 97
      %v2065 = vpop.permute.xlu0 %2064
      %2066 = vrot.lane.b32.xlu0 %v602, 97
      %v2067 = vpop.permute.xlu0 %2066
      %2068 = vrot.lane.b32.xlu0 %v604, 97
      %v2069 = vpop.permute.xlu0 %2068
      %vm2070 = vcmp.lt.s32.totalorder %v630, 97
      %v2071 = vsel %vm2070, %v2063, %v2067
      %v2072 = vsel %vm2070, %v2065, %v2069
      %v2073 = vsel %vm2070, %v2067, %v2063
      %v2074 = vsel %vm2070, %v2069, %v2065
      %s2075 = scalar_lea.vmem %s5, 69
      %v2076 = vld [vmem:[%s2075] ss:$8 sm:$0x3]
      %v2078 = vperm.slane %v2076, 0
      %v2079 = vperm.slane %v2076, 1
      %v2082 = vmul.f32 %v2078, %v2071
      %v2083 = vmul.f32 %v2079, %v2073
      %v2084 = vmul.f32 %v2078, %v2072
      %v2085 = vmul.f32 %v2079, %v2074
      %2086 = vset.pattern.permute.xlu0 37
      %2087 = vperm.xlu0 %2086, %v605
      %v2088 = vpop.permute.xlu0 %2087
      %2090 = vset.pattern.permute.xlu0 37
      %2091 = vperm.xlu0 %2090, %v606
      %v2092 = vpop.permute.xlu0 %2091
      %v2094 = vmul.f32 %v2088, %v2082
      %v2095 = vmul.f32 %v2088, %v2083
      %v2096 = vmul.f32 %v2092, %v2084
      %v2097 = vmul.f32 %v2092, %v2085
      %v2098 = vadd.f32 %v2058, %v2094
      %v2099 = vadd.f32 %v2059, %v2095
      %v2100 = vadd.f32 %v2060, %v2096
      %v2101 = vadd.f32 %v2061, %v2097
      %2102 = vrot.lane.b32.xlu0 %v601, 96
      %v2103 = vpop.permute.xlu0 %2102
      %2104 = vrot.lane.b32.xlu0 %v603, 96
      %v2105 = vpop.permute.xlu0 %2104
      %2106 = vrot.lane.b32.xlu0 %v602, 96
      %v2107 = vpop.permute.xlu0 %2106
      %2108 = vrot.lane.b32.xlu0 %v604, 96
      %v2109 = vpop.permute.xlu0 %2108
      %vm2110 = vcmp.lt.s32.totalorder %v630, 96
      %v2111 = vsel %vm2110, %v2103, %v2107
      %v2112 = vsel %vm2110, %v2105, %v2109
      %v2113 = vsel %vm2110, %v2107, %v2103
      %v2114 = vsel %vm2110, %v2109, %v2105
      %s2115 = scalar_lea.vmem %s5, 70
      %v2116 = vld [vmem:[%s2115] ss:$8 sm:$0x3]
      %v2118 = vperm.slane %v2116, 0
      %v2119 = vperm.slane %v2116, 1
      %v2122 = vmul.f32 %v2118, %v2111
      %v2123 = vmul.f32 %v2119, %v2113
      %v2124 = vmul.f32 %v2118, %v2112
      %v2125 = vmul.f32 %v2119, %v2114
      %2126 = vset.pattern.permute.xlu0 38
      %2127 = vperm.xlu0 %2126, %v605
      %v2128 = vpop.permute.xlu0 %2127
      %2130 = vset.pattern.permute.xlu0 38
      %2131 = vperm.xlu0 %2130, %v606
      %v2132 = vpop.permute.xlu0 %2131
      %v2134 = vmul.f32 %v2128, %v2122
      %v2135 = vmul.f32 %v2128, %v2123
      %v2136 = vmul.f32 %v2132, %v2124
      %v2137 = vmul.f32 %v2132, %v2125
      %v2138 = vadd.f32 %v2098, %v2134
      %v2139 = vadd.f32 %v2099, %v2135
      %v2140 = vadd.f32 %v2100, %v2136
      %v2141 = vadd.f32 %v2101, %v2137
      %2142 = vrot.lane.b32.xlu0 %v601, 95
      %v2143 = vpop.permute.xlu0 %2142
      %2144 = vrot.lane.b32.xlu0 %v603, 95
      %v2145 = vpop.permute.xlu0 %2144
      %2146 = vrot.lane.b32.xlu0 %v602, 95
      %v2147 = vpop.permute.xlu0 %2146
      %2148 = vrot.lane.b32.xlu0 %v604, 95
      %v2149 = vpop.permute.xlu0 %2148
      %vm2150 = vcmp.lt.s32.totalorder %v630, 95
      %v2151 = vsel %vm2150, %v2143, %v2147
      %v2152 = vsel %vm2150, %v2145, %v2149
      %v2153 = vsel %vm2150, %v2147, %v2143
      %v2154 = vsel %vm2150, %v2149, %v2145
      %s2155 = scalar_lea.vmem %s5, 71
      %v2156 = vld [vmem:[%s2155] ss:$8 sm:$0x3]
      %v2158 = vperm.slane %v2156, 0
      %v2159 = vperm.slane %v2156, 1
      %v2162 = vmul.f32 %v2158, %v2151
      %v2163 = vmul.f32 %v2159, %v2153
      %v2164 = vmul.f32 %v2158, %v2152
      %v2165 = vmul.f32 %v2159, %v2154
      %2166 = vset.pattern.permute.xlu0 39
      %2167 = vperm.xlu0 %2166, %v605
      %v2168 = vpop.permute.xlu0 %2167
      %2170 = vset.pattern.permute.xlu0 39
      %2171 = vperm.xlu0 %2170, %v606
      %v2172 = vpop.permute.xlu0 %2171
      %v2174 = vmul.f32 %v2168, %v2162
      %v2175 = vmul.f32 %v2168, %v2163
      %v2176 = vmul.f32 %v2172, %v2164
      %v2177 = vmul.f32 %v2172, %v2165
      %v2178 = vadd.f32 %v2138, %v2174
      %v2179 = vadd.f32 %v2139, %v2175
      %v2180 = vadd.f32 %v2140, %v2176
      %v2181 = vadd.f32 %v2141, %v2177
      %2182 = vrot.lane.b32.xlu0 %v601, 94
      %v2183 = vpop.permute.xlu0 %2182
      %2184 = vrot.lane.b32.xlu0 %v603, 94
      %v2185 = vpop.permute.xlu0 %2184
      %2186 = vrot.lane.b32.xlu0 %v602, 94
      %v2187 = vpop.permute.xlu0 %2186
      %2188 = vrot.lane.b32.xlu0 %v604, 94
      %v2189 = vpop.permute.xlu0 %2188
      %vm2190 = vcmp.lt.s32.totalorder %v630, 94
      %v2191 = vsel %vm2190, %v2183, %v2187
      %v2192 = vsel %vm2190, %v2185, %v2189
      %v2193 = vsel %vm2190, %v2187, %v2183
      %v2194 = vsel %vm2190, %v2189, %v2185
      %s2195 = scalar_lea.vmem %s5, 80
      %v2196 = vld [vmem:[%s2195] ss:$8 sm:$0x3]
      %v2198 = vperm.slane %v2196, 0
      %v2199 = vperm.slane %v2196, 1
      %v2202 = vmul.f32 %v2198, %v2191
      %v2203 = vmul.f32 %v2199, %v2193
      %v2204 = vmul.f32 %v2198, %v2192
      %v2205 = vmul.f32 %v2199, %v2194
      %2206 = vset.pattern.permute.xlu0 40
      %2207 = vperm.xlu0 %2206, %v605
      %v2208 = vpop.permute.xlu0 %2207
      %2210 = vset.pattern.permute.xlu0 40
      %2211 = vperm.xlu0 %2210, %v606
      %v2212 = vpop.permute.xlu0 %2211
      %v2214 = vmul.f32 %v2208, %v2202
      %v2215 = vmul.f32 %v2208, %v2203
      %v2216 = vmul.f32 %v2212, %v2204
      %v2217 = vmul.f32 %v2212, %v2205
      %v2218 = vadd.f32 %v2178, %v2214
      %v2219 = vadd.f32 %v2179, %v2215
      %v2220 = vadd.f32 %v2180, %v2216
      %v2221 = vadd.f32 %v2181, %v2217
      %2222 = vrot.lane.b32.xlu0 %v601, 93
      %v2223 = vpop.permute.xlu0 %2222
      %2224 = vrot.lane.b32.xlu0 %v603, 93
      %v2225 = vpop.permute.xlu0 %2224
      %2226 = vrot.lane.b32.xlu0 %v602, 93
      %v2227 = vpop.permute.xlu0 %2226
      %2228 = vrot.lane.b32.xlu0 %v604, 93
      %v2229 = vpop.permute.xlu0 %2228
      %vm2230 = vcmp.lt.s32.totalorder %v630, 93
      %v2231 = vsel %vm2230, %v2223, %v2227
      %v2232 = vsel %vm2230, %v2225, %v2229
      %v2233 = vsel %vm2230, %v2227, %v2223
      %v2234 = vsel %vm2230, %v2229, %v2225
      %s2235 = scalar_lea.vmem %s5, 81
      %v2236 = vld [vmem:[%s2235] ss:$8 sm:$0x3]
      %v2238 = vperm.slane %v2236, 0
      %v2239 = vperm.slane %v2236, 1
      %v2242 = vmul.f32 %v2238, %v2231
      %v2243 = vmul.f32 %v2239, %v2233
      %v2244 = vmul.f32 %v2238, %v2232
      %v2245 = vmul.f32 %v2239, %v2234
      %2246 = vset.pattern.permute.xlu0 41
      %2247 = vperm.xlu0 %2246, %v605
      %v2248 = vpop.permute.xlu0 %2247
      %2250 = vset.pattern.permute.xlu0 41
      %2251 = vperm.xlu0 %2250, %v606
      %v2252 = vpop.permute.xlu0 %2251
      %v2254 = vmul.f32 %v2248, %v2242
      %v2255 = vmul.f32 %v2248, %v2243
      %v2256 = vmul.f32 %v2252, %v2244
      %v2257 = vmul.f32 %v2252, %v2245
      %v2258 = vadd.f32 %v2218, %v2254
      %v2259 = vadd.f32 %v2219, %v2255
      %v2260 = vadd.f32 %v2220, %v2256
      %v2261 = vadd.f32 %v2221, %v2257
      %2262 = vrot.lane.b32.xlu0 %v601, 83
      %v2263 = vpop.permute.xlu0 %2262
      %2264 = vrot.lane.b32.xlu0 %v603, 83
      %v2265 = vpop.permute.xlu0 %2264
      %2266 = vrot.lane.b32.xlu0 %v602, 83
      %v2267 = vpop.permute.xlu0 %2266
      %2268 = vrot.lane.b32.xlu0 %v604, 83
      %v2269 = vpop.permute.xlu0 %2268
      %vm2270 = vcmp.lt.s32.totalorder %v630, 83
      %v2271 = vsel %vm2270, %v2263, %v2267
      %v2272 = vsel %vm2270, %v2265, %v2269
      %v2273 = vsel %vm2270, %v2267, %v2263
      %v2274 = vsel %vm2270, %v2269, %v2265
      %s2275 = scalar_lea.vmem %s5, 82
      %v2276 = vld [vmem:[%s2275] ss:$8 sm:$0x3]
      %v2278 = vperm.slane %v2276, 0
      %v2279 = vperm.slane %v2276, 1
      %v2282 = vmul.f32 %v2278, %v2271
      %v2283 = vmul.f32 %v2279, %v2273
      %v2284 = vmul.f32 %v2278, %v2272
      %v2285 = vmul.f32 %v2279, %v2274
      %2286 = vset.pattern.permute.xlu0 42
      %2287 = vperm.xlu0 %2286, %v605
      %v2288 = vpop.permute.xlu0 %2287
      %2290 = vset.pattern.permute.xlu0 42
      %2291 = vperm.xlu0 %2290, %v606
      %v2292 = vpop.permute.xlu0 %2291
      %v2294 = vmul.f32 %v2288, %v2282
      %v2295 = vmul.f32 %v2288, %v2283
      %v2296 = vmul.f32 %v2292, %v2284
      %v2297 = vmul.f32 %v2292, %v2285
      %v2298 = vadd.f32 %v2258, %v2294
      %v2299 = vadd.f32 %v2259, %v2295
      %v2300 = vadd.f32 %v2260, %v2296
      %v2301 = vadd.f32 %v2261, %v2297
      %2302 = vrot.lane.b32.xlu0 %v601, 82
      %v2303 = vpop.permute.xlu0 %2302
      %2304 = vrot.lane.b32.xlu0 %v603, 82
      %v2305 = vpop.permute.xlu0 %2304
      %2306 = vrot.lane.b32.xlu0 %v602, 82
      %v2307 = vpop.permute.xlu0 %2306
      %2308 = vrot.lane.b32.xlu0 %v604, 82
      %v2309 = vpop.permute.xlu0 %2308
      %vm2310 = vcmp.lt.s32.totalorder %v630, 82
      %v2311 = vsel %vm2310, %v2303, %v2307
      %v2312 = vsel %vm2310, %v2305, %v2309
      %v2313 = vsel %vm2310, %v2307, %v2303
      %v2314 = vsel %vm2310, %v2309, %v2305
      %s2315 = scalar_lea.vmem %s5, 83
      %v2316 = vld [vmem:[%s2315] ss:$8 sm:$0x3]
      %v2318 = vperm.slane %v2316, 0
      %v2319 = vperm.slane %v2316, 1
      %v2322 = vmul.f32 %v2318, %v2311
      %v2323 = vmul.f32 %v2319, %v2313
      %v2324 = vmul.f32 %v2318, %v2312
      %v2325 = vmul.f32 %v2319, %v2314
      %2326 = vset.pattern.permute.xlu0 43
      %2327 = vperm.xlu0 %2326, %v605
      %v2328 = vpop.permute.xlu0 %2327
      %2330 = vset.pattern.permute.xlu0 43
      %2331 = vperm.xlu0 %2330, %v606
      %v2332 = vpop.permute.xlu0 %2331
      %v2334 = vmul.f32 %v2328, %v2322
      %v2335 = vmul.f32 %v2328, %v2323
      %v2336 = vmul.f32 %v2332, %v2324
      %v2337 = vmul.f32 %v2332, %v2325
      %v2338 = vadd.f32 %v2298, %v2334
      %v2339 = vadd.f32 %v2299, %v2335
      %v2340 = vadd.f32 %v2300, %v2336
      %v2341 = vadd.f32 %v2301, %v2337
      %2342 = vrot.lane.b32.xlu0 %v601, 81
      %v2343 = vpop.permute.xlu0 %2342
      %2344 = vrot.lane.b32.xlu0 %v603, 81
      %v2345 = vpop.permute.xlu0 %2344
      %2346 = vrot.lane.b32.xlu0 %v602, 81
      %v2347 = vpop.permute.xlu0 %2346
      %2348 = vrot.lane.b32.xlu0 %v604, 81
      %v2349 = vpop.permute.xlu0 %2348
      %vm2350 = vcmp.lt.s32.totalorder %v630, 81
      %v2351 = vsel %vm2350, %v2343, %v2347
      %v2352 = vsel %vm2350, %v2345, %v2349
      %v2353 = vsel %vm2350, %v2347, %v2343
      %v2354 = vsel %vm2350, %v2349, %v2345
      %s2355 = scalar_lea.vmem %s5, 84
      %v2356 = vld [vmem:[%s2355] ss:$8 sm:$0x3]
      %v2358 = vperm.slane %v2356, 0
      %v2359 = vperm.slane %v2356, 1
      %v2362 = vmul.f32 %v2358, %v2351
      %v2363 = vmul.f32 %v2359, %v2353
      %v2364 = vmul.f32 %v2358, %v2352
      %v2365 = vmul.f32 %v2359, %v2354
      %2366 = vset.pattern.permute.xlu0 44
      %2367 = vperm.xlu0 %2366, %v605
      %v2368 = vpop.permute.xlu0 %2367
      %2370 = vset.pattern.permute.xlu0 44
      %2371 = vperm.xlu0 %2370, %v606
      %v2372 = vpop.permute.xlu0 %2371
      %v2374 = vmul.f32 %v2368, %v2362
      %v2375 = vmul.f32 %v2368, %v2363
      %v2376 = vmul.f32 %v2372, %v2364
      %v2377 = vmul.f32 %v2372, %v2365
      %v2378 = vadd.f32 %v2338, %v2374
      %v2379 = vadd.f32 %v2339, %v2375
      %v2380 = vadd.f32 %v2340, %v2376
      %v2381 = vadd.f32 %v2341, %v2377
      %2382 = vrot.lane.b32.xlu0 %v601, 80
      %v2383 = vpop.permute.xlu0 %2382
      %2384 = vrot.lane.b32.xlu0 %v603, 80
      %v2385 = vpop.permute.xlu0 %2384
      %2386 = vrot.lane.b32.xlu0 %v602, 80
      %v2387 = vpop.permute.xlu0 %2386
      %2388 = vrot.lane.b32.xlu0 %v604, 80
      %v2389 = vpop.permute.xlu0 %2388
      %vm2390 = vcmp.lt.s32.totalorder %v630, 80
      %v2391 = vsel %vm2390, %v2383, %v2387
      %v2392 = vsel %vm2390, %v2385, %v2389
      %v2393 = vsel %vm2390, %v2387, %v2383
      %v2394 = vsel %vm2390, %v2389, %v2385
      %s2395 = scalar_lea.vmem %s5, 85
      %v2396 = vld [vmem:[%s2395] ss:$8 sm:$0x3]
      %v2398 = vperm.slane %v2396, 0
      %v2399 = vperm.slane %v2396, 1
      %v2402 = vmul.f32 %v2398, %v2391
      %v2403 = vmul.f32 %v2399, %v2393
      %v2404 = vmul.f32 %v2398, %v2392
      %v2405 = vmul.f32 %v2399, %v2394
      %2406 = vset.pattern.permute.xlu0 45
      %2407 = vperm.xlu0 %2406, %v605
      %v2408 = vpop.permute.xlu0 %2407
      %2410 = vset.pattern.permute.xlu0 45
      %2411 = vperm.xlu0 %2410, %v606
      %v2412 = vpop.permute.xlu0 %2411
      %v2414 = vmul.f32 %v2408, %v2402
      %v2415 = vmul.f32 %v2408, %v2403
      %v2416 = vmul.f32 %v2412, %v2404
      %v2417 = vmul.f32 %v2412, %v2405
      %v2418 = vadd.f32 %v2378, %v2414
      %v2419 = vadd.f32 %v2379, %v2415
      %v2420 = vadd.f32 %v2380, %v2416
      %v2421 = vadd.f32 %v2381, %v2417
      %2422 = vrot.lane.b32.xlu0 %v601, 79
      %v2423 = vpop.permute.xlu0 %2422
      %2424 = vrot.lane.b32.xlu0 %v603, 79
      %v2425 = vpop.permute.xlu0 %2424
      %2426 = vrot.lane.b32.xlu0 %v602, 79
      %v2427 = vpop.permute.xlu0 %2426
      %2428 = vrot.lane.b32.xlu0 %v604, 79
      %v2429 = vpop.permute.xlu0 %2428
      %vm2430 = vcmp.lt.s32.totalorder %v630, 79
      %v2431 = vsel %vm2430, %v2423, %v2427
      %v2432 = vsel %vm2430, %v2425, %v2429
      %v2433 = vsel %vm2430, %v2427, %v2423
      %v2434 = vsel %vm2430, %v2429, %v2425
      %s2435 = scalar_lea.vmem %s5, 86
      %v2436 = vld [vmem:[%s2435] ss:$8 sm:$0x3]
      %v2438 = vperm.slane %v2436, 0
      %v2439 = vperm.slane %v2436, 1
      %v2442 = vmul.f32 %v2438, %v2431
      %v2443 = vmul.f32 %v2439, %v2433
      %v2444 = vmul.f32 %v2438, %v2432
      %v2445 = vmul.f32 %v2439, %v2434
      %2446 = vset.pattern.permute.xlu0 46
      %2447 = vperm.xlu0 %2446, %v605
      %v2448 = vpop.permute.xlu0 %2447
      %2450 = vset.pattern.permute.xlu0 46
      %2451 = vperm.xlu0 %2450, %v606
      %v2452 = vpop.permute.xlu0 %2451
      %v2454 = vmul.f32 %v2448, %v2442
      %v2455 = vmul.f32 %v2448, %v2443
      %v2456 = vmul.f32 %v2452, %v2444
      %v2457 = vmul.f32 %v2452, %v2445
      %v2458 = vadd.f32 %v2418, %v2454
      %v2459 = vadd.f32 %v2419, %v2455
      %v2460 = vadd.f32 %v2420, %v2456
      %v2461 = vadd.f32 %v2421, %v2457
      %2462 = vrot.lane.b32.xlu0 %v601, 78
      %v2463 = vpop.permute.xlu0 %2462
      %2464 = vrot.lane.b32.xlu0 %v603, 78
      %v2465 = vpop.permute.xlu0 %2464
      %2466 = vrot.lane.b32.xlu0 %v602, 78
      %v2467 = vpop.permute.xlu0 %2466
      %2468 = vrot.lane.b32.xlu0 %v604, 78
      %v2469 = vpop.permute.xlu0 %2468
      %vm2470 = vcmp.lt.s32.totalorder %v630, 78
      %v2471 = vsel %vm2470, %v2463, %v2467
      %v2472 = vsel %vm2470, %v2465, %v2469
      %v2473 = vsel %vm2470, %v2467, %v2463
      %v2474 = vsel %vm2470, %v2469, %v2465
      %s2475 = scalar_lea.vmem %s5, 87
      %v2476 = vld [vmem:[%s2475] ss:$8 sm:$0x3]
      %v2478 = vperm.slane %v2476, 0
      %v2479 = vperm.slane %v2476, 1
      %v2482 = vmul.f32 %v2478, %v2471
      %v2483 = vmul.f32 %v2479, %v2473
      %v2484 = vmul.f32 %v2478, %v2472
      %v2485 = vmul.f32 %v2479, %v2474
      %2486 = vset.pattern.permute.xlu0 47
      %2487 = vperm.xlu0 %2486, %v605
      %v2488 = vpop.permute.xlu0 %2487
      %2490 = vset.pattern.permute.xlu0 47
      %2491 = vperm.xlu0 %2490, %v606
      %v2492 = vpop.permute.xlu0 %2491
      %v2494 = vmul.f32 %v2488, %v2482
      %v2495 = vmul.f32 %v2488, %v2483
      %v2496 = vmul.f32 %v2492, %v2484
      %v2497 = vmul.f32 %v2492, %v2485
      %v2498 = vadd.f32 %v2458, %v2494
      %v2499 = vadd.f32 %v2459, %v2495
      %v2500 = vadd.f32 %v2460, %v2496
      %v2501 = vadd.f32 %v2461, %v2497
      %2502 = vrot.lane.b32.xlu0 %v601, 77
      %v2503 = vpop.permute.xlu0 %2502
      %2504 = vrot.lane.b32.xlu0 %v603, 77
      %v2505 = vpop.permute.xlu0 %2504
      %2506 = vrot.lane.b32.xlu0 %v602, 77
      %v2507 = vpop.permute.xlu0 %2506
      %2508 = vrot.lane.b32.xlu0 %v604, 77
      %v2509 = vpop.permute.xlu0 %2508
      %vm2510 = vcmp.lt.s32.totalorder %v630, 77
      %v2511 = vsel %vm2510, %v2503, %v2507
      %v2512 = vsel %vm2510, %v2505, %v2509
      %v2513 = vsel %vm2510, %v2507, %v2503
      %v2514 = vsel %vm2510, %v2509, %v2505
      %s2515 = scalar_lea.vmem %s5, 96
      %v2516 = vld [vmem:[%s2515] ss:$8 sm:$0x3]
      %v2518 = vperm.slane %v2516, 0
      %v2519 = vperm.slane %v2516, 1
      %v2522 = vmul.f32 %v2518, %v2511
      %v2523 = vmul.f32 %v2519, %v2513
      %v2524 = vmul.f32 %v2518, %v2512
      %v2525 = vmul.f32 %v2519, %v2514
      %2526 = vset.pattern.permute.xlu0 48
      %2527 = vperm.xlu0 %2526, %v605
      %v2528 = vpop.permute.xlu0 %2527
      %2530 = vset.pattern.permute.xlu0 48
      %2531 = vperm.xlu0 %2530, %v606
      %v2532 = vpop.permute.xlu0 %2531
      %v2534 = vmul.f32 %v2528, %v2522
      %v2535 = vmul.f32 %v2528, %v2523
      %v2536 = vmul.f32 %v2532, %v2524
      %v2537 = vmul.f32 %v2532, %v2525
      %v2538 = vadd.f32 %v2498, %v2534
      %v2539 = vadd.f32 %v2499, %v2535
      %v2540 = vadd.f32 %v2500, %v2536
      %v2541 = vadd.f32 %v2501, %v2537
      %2542 = vset.pattern.permute.xlu0 2
      %2543 = vperm.xlu0 %2542, %v577
      %v2544 = vpop.permute.xlu0 %2543
      %2546 = vset.pattern.permute.xlu0 2
      %2547 = vperm.xlu0 %2546, %v578
      %v2548 = vpop.permute.xlu0 %2547
      %v2550 = vadd.f32 %v2538, %v2544
      %v2551 = vadd.f32 %v2539, %v2544
      %v2552 = vadd.f32 %v2540, %v2548
      %v2553 = vadd.f32 %v2541, %v2548
      %v2554 = vadd.f32 %v2550, %v601
      %v2555 = vadd.f32 %v2551, %v602
      %v2556 = vadd.f32 %v2552, %v603
      %v2557 = vadd.f32 %v2553, %v604
      %v2558 = vmul.f32 %v2554, %v2554
      %v2559 = vmul.f32 %v2555, %v2555
      %v2560 = vmul.f32 %v2556, %v2556
      %v2561 = vmul.f32 %v2557, %v2557
      %v2562 = vmul.f32 %v2554, %v2558
      %v2563 = vmul.f32 %v2555, %v2559
      %v2564 = vmul.f32 %v2556, %v2560
      %v2565 = vmul.f32 %v2557, %v2561
      %v2566 = vmul.f32 %v2562, 0.044715
      %v2567 = vmul.f32 %v2563, 0.044715
      %v2568 = vmul.f32 %v2564, 0.044715
      %v2569 = vmul.f32 %v2565, 0.044715
      %v2570 = vadd.f32 %v2554, %v2566
      %v2571 = vadd.f32 %v2555, %v2567
      %v2572 = vadd.f32 %v2556, %v2568
      %v2573 = vadd.f32 %v2557, %v2569
      %v2574 = vmul.f32 %v2570, 0.7978846
      %v2575 = vmul.f32 %v2571, 0.7978846
      %v2576 = vmul.f32 %v2572, 0.7978846
      %v2577 = vmul.f32 %v2573, 0.7978846
      %v2578 = vtanh.pop %v2574
      %v2579 = vtanh.pop %v2575
      %v2580 = vtanh.pop %v2576
      %v2581 = vtanh.pop %v2577
      %v2582 = vadd.f32 %v2578, 1.0
      %v2583 = vadd.f32 %v2579, 1.0
      %v2584 = vadd.f32 %v2580, 1.0
      %v2585 = vadd.f32 %v2581, 1.0
      %v2586 = vmul.f32 %v2582, 0.5
      %v2587 = vmul.f32 %v2583, 0.5
      %v2588 = vmul.f32 %v2584, 0.5
      %v2589 = vmul.f32 %v2585, 0.5
      %v2590 = vmul.f32 %v2554, %v2586
      %v2591 = vmul.f32 %v2555, %v2587
      %v2592 = vmul.f32 %v2556, %v2588
      %v2593 = vmul.f32 %v2557, %v2589
      %2594 = vset.pattern.permute.xlu0 3
      %2595 = vperm.xlu0 %2594, %v577
      %v2596 = vpop.permute.xlu0 %2595
      %2598 = vset.pattern.permute.xlu0 3
      %2599 = vperm.xlu0 %2598, %v578
      %v2600 = vpop.permute.xlu0 %2599
      %v2602 = vmul.f32 %v2590, %v2596
      %v2603 = vmul.f32 %v2591, %v2596
      %v2604 = vmul.f32 %v2592, %v2600
      %v2605 = vmul.f32 %v2593, %v2600
      %2606 = vset.pattern.permute.xlu0 4
      %2607 = vperm.xlu0 %2606, %v577
      %v2608 = vpop.permute.xlu0 %2607
      %2610 = vset.pattern.permute.xlu0 4
      %2611 = vperm.xlu0 %2610, %v578
      %v2612 = vpop.permute.xlu0 %2611
      %v2614 = vadd.f32 %v2602, %v2608
      %v2615 = vadd.f32 %v2603, %v2608
      %v2616 = vadd.f32 %v2604, %v2612
      %v2617 = vadd.f32 %v2605, %v2612
      %v2618 = vld [vmem:[%s2] sm:$0xf]
      %v2619 = vld [vmem:[%s2 + $0x4] sm:$0xf]
      %v2620 = vpack.c.bf16 %v2616, %v2614
      %v2621 = vpack.c.bf16 %v2617, %v2615
      %v2624 = vunpack.c.l.b16 %v2618
      %v2625 = vunpack.c.l.b16 %v2619
      %v2626 = vpack.c.b16 %v2625, %v2624
      %v2628 = vsel %vm509, %v2626, 0
      %2630 = vmatpush.bf16.msra.mxu0 0
      %2631 = vmatpush.bf16.msra.mxu0 0
      %2632 = vmatpush.bf16.msra.mxu0 0
      %2633 = vmatpush.bf16.msra.mxu0 0
      %2634 = vmatpush.bf16.msra.mxu0 0
      %2635 = vmatpush.bf16.msra.mxu0 0
      %2636 = vmatpush.bf16.msra.mxu0 0
      %2637 = vmatpush.bf16.msra.mxu0 %v2620
      %2638 = vmatmul.bf16.gmra.mxu0 %v2628
      %v2639 = vpop.f32.mrf.mxu0
      %v2640 = vadd.f32 0.0, %v2639
      %v2641 = vpop.f32.mrf.mxu0
      %v2642 = vadd.f32 0.0, %v2641
      %2643 = vdwg.mxu0
      %2644 = vmatpush.bf16.msra.mxu0 0
      %2645 = vmatpush.bf16.msra.mxu0 0
      %2646 = vmatpush.bf16.msra.mxu0 0
      %2647 = vmatpush.bf16.msra.mxu0 0
      %2648 = vmatpush.bf16.msra.mxu0 0
      %2649 = vmatpush.bf16.msra.mxu0 0
      %2650 = vmatpush.bf16.msra.mxu0 0
      %2651 = vmatpush.bf16.msra.mxu0 %v2621
      %2652 = vmatmul.bf16.gmra.mxu0 %v2628
      %v2653 = vpop.f32.mrf.mxu0
      %v2654 = vadd.f32 0.0, %v2653
      %v2655 = vpop.f32.mrf.mxu0
      %v2656 = vadd.f32 0.0, %v2655
      %2657 = vdwg.mxu0
      %2658 = vset.pattern.permute.xlu0 5
      %2659 = vperm.xlu0 %2658, %v577
      %v2660 = vpop.permute.xlu0 %2659
      %2662 = vset.pattern.permute.xlu0 5
      %2663 = vperm.xlu0 %2662, %v578
      %v2664 = vpop.permute.xlu0 %2663
      %v2666 = vmul.f32 %v2640, %v2660
      %v2667 = vmul.f32 %v2654, %v2660
      %v2668 = vmul.f32 %v2642, %v2664
      %v2669 = vmul.f32 %v2656, %v2664
      %2670 = vset.pattern.permute.xlu0 6
      %2671 = vperm.xlu0 %2670, %v577
      %v2672 = vpop.permute.xlu0 %2671
      %2674 = vset.pattern.permute.xlu0 6
      %2675 = vperm.xlu0 %2674, %v578
      %v2676 = vpop.permute.xlu0 %2675
      %v2678 = vadd.f32 %v2666, %v2672
      %v2679 = vadd.f32 %v2667, %v2672
      %v2680 = vadd.f32 %v2668, %v2676
      %v2681 = vadd.f32 %v2669, %v2676
      %v2682 = vpack.c.bf16 %v2680, %v2678
      %v2683 = vpack.c.bf16 %v2681, %v2679
      %v2684 = vld [vmem:[%s6] sm:$0xf]
      %v2685 = vld [vmem:[%s6 + $0x4] sm:$0xf]
      %v2686 = vld [vmem:[%s6 + $0x8] sm:$0xf]
      %v2687 = vld [vmem:[%s6 + $0xc] sm:$0xf]
      %v2688 = vld [vmem:[%s6 + $0x10] sm:$0xf]
      %v2689 = vld [vmem:[%s6 + $0x14] sm:$0xf]
      %v2690 = vld [vmem:[%s6 + $0x18] sm:$0xf]
      %v2691 = vld [vmem:[%s6 + $0x1c] sm:$0xf]
      %v2692 = vld [vmem:[%s6 + $0x20] sm:$0xf]
      %v2693 = vld [vmem:[%s6 + $0x24] sm:$0xf]
      %v2694 = vld [vmem:[%s6 + $0x28] sm:$0xf]
      %v2695 = vld [vmem:[%s6 + $0x2c] sm:$0xf]
      %v2696 = vld [vmem:[%s6 + $0x30] sm:$0xf]
      %v2697 = vld [vmem:[%s6 + $0x34] sm:$0xf]
      %v2698 = vld [vmem:[%s6 + $0x38] sm:$0xf]
      %v2699 = vld [vmem:[%s6 + $0x3c] sm:$0xf]
      %v2700 = vld [vmem:[%s6 + $0x40] sm:$0xf]
      %v2701 = vld [vmem:[%s6 + $0x44] sm:$0xf]
      %v2702 = vld [vmem:[%s6 + $0x48] sm:$0xf]
      %v2703 = vld [vmem:[%s6 + $0x4c] sm:$0xf]
      %v2704 = vld [vmem:[%s6 + $0x50] sm:$0xf]
      %v2705 = vld [vmem:[%s6 + $0x54] sm:$0xf]
      %v2706 = vld [vmem:[%s6 + $0x58] sm:$0xf]
      %v2707 = vld [vmem:[%s6 + $0x5c] sm:$0xf]
      %v2708 = vld [vmem:[%s6 + $0x60] sm:$0xf]
      %v2709 = vld [vmem:[%s6 + $0x64] sm:$0xf]
      %v2710 = vld [vmem:[%s6 + $0x68] sm:$0xf]
      %v2711 = vld [vmem:[%s6 + $0x6c] sm:$0xf]
      %v2712 = vld [vmem:[%s6 + $0x70] sm:$0xf]
      %v2713 = vld [vmem:[%s6 + $0x74] sm:$0xf]
      %v2714 = vld [vmem:[%s6 + $0x78] sm:$0xf]
      %v2715 = vld [vmem:[%s6 + $0x7c] sm:$0xf]
      %v2748 = vunpack.c.l.b16 %v2684
      %v2749 = vunpack.c.l.b16 %v2685
      %v2750 = vunpack.c.l.b16 %v2686
      %v2751 = vunpack.c.l.b16 %v2687
      %v2752 = vunpack.c.l.b16 %v2688
      %v2753 = vunpack.c.l.b16 %v2689
      %v2754 = vunpack.c.l.b16 %v2690
      %v2755 = vunpack.c.l.b16 %v2691
      %v2756 = vunpack.c.l.b16 %v2692
      %v2757 = vunpack.c.l.b16 %v2693
      %v2758 = vunpack.c.l.b16 %v2694
      %v2759 = vunpack.c.l.b16 %v2695
      %v2760 = vunpack.c.l.b16 %v2696
      %v2761 = vunpack.c.l.b16 %v2697
      %v2762 = vunpack.c.l.b16 %v2698
      %v2763 = vunpack.c.l.b16 %v2699
      %v2764 = vunpack.c.l.b16 %v2700
      %v2765 = vunpack.c.l.b16 %v2701
      %v2766 = vunpack.c.l.b16 %v2702
      %v2767 = vunpack.c.l.b16 %v2703
      %v2768 = vunpack.c.l.b16 %v2704
      %v2769 = vunpack.c.l.b16 %v2705
      %v2770 = vunpack.c.l.b16 %v2706
      %v2771 = vunpack.c.l.b16 %v2707
      %v2772 = vunpack.c.l.b16 %v2708
      %v2773 = vunpack.c.l.b16 %v2709
      %v2774 = vunpack.c.l.b16 %v2710
      %v2775 = vunpack.c.l.b16 %v2711
      %v2776 = vunpack.c.l.b16 %v2712
      %v2777 = vunpack.c.l.b16 %v2713
      %v2778 = vunpack.c.l.b16 %v2714
      %v2779 = vunpack.c.l.b16 %v2715
      %v2780 = vpack.c.b16 %v2749, %v2748
      %v2781 = vpack.c.b16 %v2751, %v2750
      %v2782 = vpack.c.b16 %v2753, %v2752
      %v2783 = vpack.c.b16 %v2755, %v2754
      %v2784 = vpack.c.b16 %v2757, %v2756
      %v2785 = vpack.c.b16 %v2759, %v2758
      %v2786 = vpack.c.b16 %v2761, %v2760
      %v2787 = vpack.c.b16 %v2763, %v2762
      %v2788 = vpack.c.b16 %v2765, %v2764
      %v2789 = vpack.c.b16 %v2767, %v2766
      %v2790 = vpack.c.b16 %v2769, %v2768
      %v2791 = vpack.c.b16 %v2771, %v2770
      %v2792 = vpack.c.b16 %v2773, %v2772
      %v2793 = vpack.c.b16 %v2775, %v2774
      %v2794 = vpack.c.b16 %v2777, %v2776
      %v2795 = vpack.c.b16 %v2779, %v2778
      %2812 = vmatpush.bf16.msra.mxu0 %v2787
      %2813 = vmatpush.bf16.msra.mxu0 %v2786
      %2814 = vmatpush.bf16.msra.mxu0 %v2785
      %2815 = vmatpush.bf16.msra.mxu0 %v2784
      %2816 = vmatpush.bf16.msra.mxu0 %v2783
      %2817 = vmatpush.bf16.msra.mxu0 %v2782
      %2818 = vmatpush.bf16.msra.mxu0 %v2781
      %2819 = vmatpush.bf16.msra.mxu0 %v2780
      %2820 = vmatmul.bf16.gmra.mxu0 %v2682
      %v2821 = vpop.f32.mrf.mxu0
      %v2822 = vadd.f32 0.0, %v2821
      %v2823 = vpop.f32.mrf.mxu0
      %v2824 = vadd.f32 0.0, %v2823
      %2825 = vdwg.mxu0
      %2826 = vmatpush.bf16.msra.mxu0 %v2795
      %2827 = vmatpush.bf16.msra.mxu0 %v2794
      %2828 = vmatpush.bf16.msra.mxu0 %v2793
      %2829 = vmatpush.bf16.msra.mxu0 %v2792
      %2830 = vmatpush.bf16.msra.mxu0 %v2791
      %2831 = vmatpush.bf16.msra.mxu0 %v2790
      %2832 = vmatpush.bf16.msra.mxu0 %v2789
      %2833 = vmatpush.bf16.msra.mxu0 %v2788
      %2834 = vmatmul.bf16.gmra.mxu0 %v2683
      %v2835 = vpop.f32.mrf.mxu0
      %v2836 = vadd.f32 %v2822, %v2835
      %v2837 = vpop.f32.mrf.mxu0
      %v2838 = vadd.f32 %v2824, %v2837
      %2839 = vdwg.mxu0
      %v2840 = vld [vmem:[%s7] sm:$0x3]
      %v2841 = vpack.c.bf16 %v2838, %v2836
      %v2843 = vsel %vm509, %v2840, 0
      %2845 = vmatpush.bf16.msra.mxu0 0
      %2846 = vmatpush.bf16.msra.mxu0 0
      %2847 = vmatpush.bf16.msra.mxu0 0
      %2848 = vmatpush.bf16.msra.mxu0 0
      %2849 = vmatpush.bf16.msra.mxu0 0
      %2850 = vmatpush.bf16.msra.mxu0 0
      %2851 = vmatpush.bf16.msra.mxu0 0
      %2852 = vmatpush.bf16.msra.mxu0 %v2841
      %2853 = vmatmul.bf16.gmra.mxu0 %v2843
      %v2854 = vpop.f32.mrf.mxu0
      %v2855 = vadd.f32 0.0, %v2854
      %v2856 = vpop.f32.mrf.mxu0
      %2857 = vdwg.mxu0
      %v2858 = vld [vmem:[%s8] sm:$0xf]
      %2860 = vset.pattern.permute.xlu0 0
      %2861 = vperm.xlu0 %2860, %v2858
      %v2862 = vpop.permute.xlu0 %2861
      %v2864 = vmul.f32 %v2855, %v2862
      %2865 = vset.pattern.permute.xlu0 1
      %2866 = vperm.xlu0 %2865, %v2858
      %v2867 = vpop.permute.xlu0 %2866
      %v2869 = vadd.f32 %v2864, %v2867
      %v2870 = vmul.f32 %v2869, %v2869
      %v2871 = vmul.f32 %v2869, %v2870
      %v2872 = vmul.f32 %v2871, 0.044715
      %v2873 = vadd.f32 %v2869, %v2872
      %v2874 = vmul.f32 %v2873, 0.7978846
      %v2875 = vtanh.pop %v2874
      %v2876 = vadd.f32 %v2875, 1.0
      %v2877 = vmul.f32 %v2876, 0.5
      %v2878 = vmul.f32 %v2869, %v2877
      %v2879 = vld [vmem:[%s9] sm:$0xf]
      %v2880 = vld [vmem:[%s9 + $0x4] sm:$0xf]
      %v2881 = vld [vmem:[%s9 + $0x8] sm:$0xf]
      %v2882 = vld [vmem:[%s9 + $0xc] sm:$0xf]
      %v2883 = vpack.c.bf16 %v2878, %v2878
      %v2884 = vld [vmem:[%s10] sm:$0xff]
      %v2885 = vld [vmem:[%s10 + $0x8] sm:$0xff]
      %v2886 = vld [vmem:[%s10 + $0x10] sm:$0xff]
      %v2887 = vld [vmem:[%s10 + $0x18] sm:$0xff]
      %2889 = vset.pattern.permute.xlu0 0
      %2890 = vperm.xlu0 %2889, %v2884
      %v2891 = vpop.permute.xlu0 %2890
      %2894 = vset.pattern.permute.xlu0 0
      %2895 = vperm.xlu0 %2894, %v2885
      %v2896 = vpop.permute.xlu0 %2895
      %2899 = vset.pattern.permute.xlu0 0
      %2900 = vperm.xlu0 %2899, %v2886
      %v2901 = vpop.permute.xlu0 %2900
      %2904 = vset.pattern.permute.xlu0 0
      %2905 = vperm.xlu0 %2904, %v2887
      %v2906 = vpop.permute.xlu0 %2905
      %v2912 = vunpack.c.l.b16 %v2879
      %v2913 = vunpack.c.l.b16 %v2880
      %v2914 = vunpack.c.l.b16 %v2881
      %v2915 = vunpack.c.l.b16 %v2882
      %v2916 = vpack.c.b16 %v2913, %v2912
      %v2917 = vpack.c.b16 %v2915, %v2914
      %vm2918 = vcmask 31744
      %v2920 = vsel %vm2918, %v2916, 0
      %v2923 = vsel %vm2918, %v2917, 0
      %vm2925 = vcmask 1041408
      %v2927 = vsel %vm2925, %v2883, 0
      %2929 = vmatpush.bf16.msra.mxu0 0
      %2930 = vmatpush.bf16.msra.mxu0 0
      %2931 = vmatpush.bf16.msra.mxu0 0
      %2932 = vmatpush.bf16.msra.mxu0 0
      %2933 = vmatpush.bf16.msra.mxu0 0
      %2934 = vmatpush.bf16.msra.mxu0 0
      %2935 = vmatpush.bf16.msra.mxu0 0
      %2936 = vmatpush.bf16.msra.mxu0 %v2927
      %2937 = vmatmul.bf16.gmra.mxu0 %v2920
      %v2938 = vpop.f32.mrf.mxu0
      %v2939 = vadd.f32 %v2891, %v2938
      %v2940 = vpop.f32.mrf.mxu0
      %v2941 = vadd.f32 %v2896, %v2940
      %2942 = vmatmul.bf16.gmra.mxu0 %v2923
      %v2943 = vpop.f32.mrf.mxu0
      %v2944 = vadd.f32 %v2901, %v2943
      %v2945 = vpop.f32.mrf.mxu0
      %v2946 = vadd.f32 %v2906, %v2945
      %2947 = vdwg.mxu0
      %v2948 = vmax.f32 %v2939, %v2944
      %v2949 = vmax.f32 %v2941, %v2946
      %v2950 = vsub.f32 %v2939, %v2948
      %v2951 = vsub.f32 %v2941, %v2949
      %v2952 = vmul.f32 %v2950, 1.442695
      %v2953 = vpow.pop %v2952
      %v2954 = vmul.f32 %v2951, 1.442695
      %v2955 = vpow.pop %v2954
      %v2956 = vsub.f32 %v2944, %v2948
      %v2957 = vsub.f32 %v2946, %v2949
      %v2958 = vmul.f32 %v2956, 1.442695
      %v2959 = vpow.pop %v2958
      %v2960 = vmul.f32 %v2957, 1.442695
      %v2961 = vpow.pop %v2960
      %v2962 = vadd.f32 %v2953, %v2959
      %v2963 = vadd.f32 %v2955, %v2961
      %v2964 = vrcp.pop %v2962
      %v2965 = vrcp.pop %v2963
      %v2966 = vld [vmem:[%s11] sm:$0xff]
      %v2967 = vld [vmem:[%s11 + $0x8] sm:$0xff]
      %v2968 = vld [vmem:[%s11 + $0x10] sm:$0xff]
      %v2969 = vld [vmem:[%s11 + $0x18] sm:$0xff]
      %v2970 = vmul.f32 %v2953, %v2966
      %v2971 = vmul.f32 %v2955, %v2967
      %v2972 = vmul.f32 %v2959, %v2968
      %v2973 = vmul.f32 %v2961, %v2969
      %v2974 = vadd.f32 %v2970, %v2972
      %v2975 = vadd.f32 %v2971, %v2973
      %v2976 = vmul.f32 %v2974, %v2964
      %v2977 = vmul.f32 %v2975, %v2965
      %2979 = vset.pattern.permute.xlu0 4
      %2980 = vperm.xlu0 %2979, %v2976
      %v2981 = vpop.permute.xlu0 %2980
      %2984 = vset.pattern.permute.xlu0 4
      %2985 = vperm.xlu0 %2984, %v2977
      %v2986 = vpop.permute.xlu0 %2985
      %v2988 = vmul.f32 %v2981, %v2678
      %v2989 = vmul.f32 %v2981, %v2679
      %v2990 = vmul.f32 %v2986, %v2680
      %v2991 = vmul.f32 %v2986, %v2681
      %2992 = vrot.lane.b32.xlu0 %v2678, 17
      %v2993 = vpop.permute.xlu0 %2992
      %2994 = vrot.lane.b32.xlu0 %v2680, 17
      %v2995 = vpop.permute.xlu0 %2994
      %2996 = vrot.lane.b32.xlu0 %v2679, 17
      %v2997 = vpop.permute.xlu0 %2996
      %2998 = vrot.lane.b32.xlu0 %v2681, 17
      %v2999 = vpop.permute.xlu0 %2998
      %v3000 = vsel %vm1270, %v2993, %v2997
      %v3001 = vsel %vm1270, %v2995, %v2999
      %v3002 = vsel %vm1270, %v2997, %v2993
      %v3003 = vsel %vm1270, %v2999, %v2995
      %v3004 = vld [vmem:[%s12] ss:$8 sm:$0x3]
      %v3006 = vperm.slane %v3004, 0
      %v3007 = vperm.slane %v3004, 1
      %v3010 = vmul.f32 %v3006, %v3002
      %v3011 = vmul.f32 %v3007, %v3000
      %v3012 = vmul.f32 %v3006, %v3003
      %v3013 = vmul.f32 %v3007, %v3001
      %3014 = vset.pattern.permute.xlu0 0
      %3015 = vperm.xlu0 %3014, %v2976
      %v3016 = vpop.permute.xlu0 %3015
      %3018 = vset.pattern.permute.xlu0 0
      %3019 = vperm.xlu0 %3018, %v2977
      %v3020 = vpop.permute.xlu0 %3019
      %v3022 = vmul.f32 %v3016, %v3010
      %v3023 = vmul.f32 %v3016, %v3011
      %v3024 = vmul.f32 %v3020, %v3012
      %v3025 = vmul.f32 %v3020, %v3013
      %v3026 = vadd.f32 %v2988, %v3022
      %v3027 = vadd.f32 %v2989, %v3023
      %v3028 = vadd.f32 %v2990, %v3024
      %v3029 = vadd.f32 %v2991, %v3025
      %3030 = vrot.lane.b32.xlu0 %v2678, 16
      %v3031 = vpop.permute.xlu0 %3030
      %3032 = vrot.lane.b32.xlu0 %v2680, 16
      %v3033 = vpop.permute.xlu0 %3032
      %3034 = vrot.lane.b32.xlu0 %v2679, 16
      %v3035 = vpop.permute.xlu0 %3034
      %3036 = vrot.lane.b32.xlu0 %v2681, 16
      %v3037 = vpop.permute.xlu0 %3036
      %v3038 = vsel %vm1310, %v3031, %v3035
      %v3039 = vsel %vm1310, %v3033, %v3037
      %v3040 = vsel %vm1310, %v3035, %v3031
      %v3041 = vsel %vm1310, %v3037, %v3033
      %s3042 = scalar_lea.vmem %s12, 1
      %v3043 = vld [vmem:[%s3042] ss:$8 sm:$0x3]
      %v3045 = vperm.slane %v3043, 0
      %v3046 = vperm.slane %v3043, 1
      %v3049 = vmul.f32 %v3045, %v3040
      %v3050 = vmul.f32 %v3046, %v3038
      %v3051 = vmul.f32 %v3045, %v3041
      %v3052 = vmul.f32 %v3046, %v3039
      %3053 = vset.pattern.permute.xlu0 1
      %3054 = vperm.xlu0 %3053, %v2976
      %v3055 = vpop.permute.xlu0 %3054
      %3057 = vset.pattern.permute.xlu0 1
      %3058 = vperm.xlu0 %3057, %v2977
      %v3059 = vpop.permute.xlu0 %3058
      %v3061 = vmul.f32 %v3055, %v3049
      %v3062 = vmul.f32 %v3055, %v3050
      %v3063 = vmul.f32 %v3059, %v3051
      %v3064 = vmul.f32 %v3059, %v3052
      %v3065 = vadd.f32 %v3026, %v3061
      %v3066 = vadd.f32 %v3027, %v3062
      %v3067 = vadd.f32 %v3028, %v3063
      %v3068 = vadd.f32 %v3029, %v3064
      %3069 = vrot.lane.b32.xlu0 %v2678, 15
      %v3070 = vpop.permute.xlu0 %3069
      %3071 = vrot.lane.b32.xlu0 %v2680, 15
      %v3072 = vpop.permute.xlu0 %3071
      %3073 = vrot.lane.b32.xlu0 %v2679, 15
      %v3074 = vpop.permute.xlu0 %3073
      %3075 = vrot.lane.b32.xlu0 %v2681, 15
      %v3076 = vpop.permute.xlu0 %3075
      %v3077 = vsel %vm1350, %v3070, %v3074
      %v3078 = vsel %vm1350, %v3072, %v3076
      %v3079 = vsel %vm1350, %v3074, %v3070
      %v3080 = vsel %vm1350, %v3076, %v3072
      %s3081 = scalar_lea.vmem %s12, 2
      %v3082 = vld [vmem:[%s3081] ss:$8 sm:$0x3]
      %v3084 = vperm.slane %v3082, 0
      %v3085 = vperm.slane %v3082, 1
      %v3088 = vmul.f32 %v3084, %v3079
      %v3089 = vmul.f32 %v3085, %v3077
      %v3090 = vmul.f32 %v3084, %v3080
      %v3091 = vmul.f32 %v3085, %v3078
      %3092 = vset.pattern.permute.xlu0 2
      %3093 = vperm.xlu0 %3092, %v2976
      %v3094 = vpop.permute.xlu0 %3093
      %3096 = vset.pattern.permute.xlu0 2
      %3097 = vperm.xlu0 %3096, %v2977
      %v3098 = vpop.permute.xlu0 %3097
      %v3100 = vmul.f32 %v3094, %v3088
      %v3101 = vmul.f32 %v3094, %v3089
      %v3102 = vmul.f32 %v3098, %v3090
      %v3103 = vmul.f32 %v3098, %v3091
      %v3104 = vadd.f32 %v3065, %v3100
      %v3105 = vadd.f32 %v3066, %v3101
      %v3106 = vadd.f32 %v3067, %v3102
      %v3107 = vadd.f32 %v3068, %v3103
      %3108 = vrot.lane.b32.xlu0 %v2678, 1
      %v3109 = vpop.permute.xlu0 %3108
      %3110 = vrot.lane.b32.xlu0 %v2680, 1
      %v3111 = vpop.permute.xlu0 %3110
      %3112 = vrot.lane.b32.xlu0 %v2679, 1
      %v3113 = vpop.permute.xlu0 %3112
      %3114 = vrot.lane.b32.xlu0 %v2681, 1
      %v3115 = vpop.permute.xlu0 %3114
      %v3116 = vsel %vm1550, %v3109, %v3113
      %v3117 = vsel %vm1550, %v3111, %v3115
      %v3118 = vsel %vm1550, %v3113, %v3109
      %v3119 = vsel %vm1550, %v3115, %v3111
      %s3120 = scalar_lea.vmem %s12, 3
      %v3121 = vld [vmem:[%s3120] ss:$8 sm:$0x3]
      %v3123 = vperm.slane %v3121, 0
      %v3124 = vperm.slane %v3121, 1
      %v3127 = vmul.f32 %v3123, %v3118
      %v3128 = vmul.f32 %v3124, %v3116
      %v3129 = vmul.f32 %v3123, %v3119
      %v3130 = vmul.f32 %v3124, %v3117
      %3131 = vset.pattern.permute.xlu0 3
      %3132 = vperm.xlu0 %3131, %v2976
      %v3133 = vpop.permute.xlu0 %3132
      %3135 = vset.pattern.permute.xlu0 3
      %3136 = vperm.xlu0 %3135, %v2977
      %v3137 = vpop.permute.xlu0 %3136
      %v3139 = vmul.f32 %v3133, %v3127
      %v3140 = vmul.f32 %v3133, %v3128
      %v3141 = vmul.f32 %v3137, %v3129
      %v3142 = vmul.f32 %v3137, %v3130
      %v3143 = vadd.f32 %v3104, %v3139
      %v3144 = vadd.f32 %v3105, %v3140
      %v3145 = vadd.f32 %v3106, %v3141
      %v3146 = vadd.f32 %v3107, %v3142
      %3147 = vrot.lane.b32.xlu0 %v2678, 127
      %v3148 = vpop.permute.xlu0 %3147
      %3149 = vrot.lane.b32.xlu0 %v2680, 127
      %v3150 = vpop.permute.xlu0 %3149
      %3151 = vrot.lane.b32.xlu0 %v2679, 127
      %v3152 = vpop.permute.xlu0 %3151
      %3153 = vrot.lane.b32.xlu0 %v2681, 127
      %v3154 = vpop.permute.xlu0 %3153
      %v3155 = vsel %vm1590, %v3148, %v3152
      %v3156 = vsel %vm1590, %v3150, %v3154
      %v3157 = vsel %vm1590, %v3152, %v3148
      %v3158 = vsel %vm1590, %v3154, %v3150
      %s3159 = scalar_lea.vmem %s12, 5
      %v3160 = vld [vmem:[%s3159] ss:$8 sm:$0x3]
      %v3162 = vperm.slane %v3160, 0
      %v3163 = vperm.slane %v3160, 1
      %v3166 = vmul.f32 %v3162, %v3155
      %v3167 = vmul.f32 %v3163, %v3157
      %v3168 = vmul.f32 %v3162, %v3156
      %v3169 = vmul.f32 %v3163, %v3158
      %3170 = vset.pattern.permute.xlu0 5
      %3171 = vperm.xlu0 %3170, %v2976
      %v3172 = vpop.permute.xlu0 %3171
      %3174 = vset.pattern.permute.xlu0 5
      %3175 = vperm.xlu0 %3174, %v2977
      %v3176 = vpop.permute.xlu0 %3175
      %v3178 = vmul.f32 %v3172, %v3166
      %v3179 = vmul.f32 %v3172, %v3167
      %v3180 = vmul.f32 %v3176, %v3168
      %v3181 = vmul.f32 %v3176, %v3169
      %v3182 = vadd.f32 %v3143, %v3178
      %v3183 = vadd.f32 %v3144, %v3179
      %v3184 = vadd.f32 %v3145, %v3180
      %v3185 = vadd.f32 %v3146, %v3181
      %3186 = vrot.lane.b32.xlu0 %v2678, 113
      %v3187 = vpop.permute.xlu0 %3186
      %3188 = vrot.lane.b32.xlu0 %v2680, 113
      %v3189 = vpop.permute.xlu0 %3188
      %3190 = vrot.lane.b32.xlu0 %v2679, 113
      %v3191 = vpop.permute.xlu0 %3190
      %3192 = vrot.lane.b32.xlu0 %v2681, 113
      %v3193 = vpop.permute.xlu0 %3192
      %v3194 = vsel %vm1790, %v3187, %v3191
      %v3195 = vsel %vm1790, %v3189, %v3193
      %v3196 = vsel %vm1790, %v3191, %v3187
      %v3197 = vsel %vm1790, %v3193, %v3189
      %s3198 = scalar_lea.vmem %s12, 6
      %v3199 = vld [vmem:[%s3198] ss:$8 sm:$0x3]
      %v3201 = vperm.slane %v3199, 0
      %v3202 = vperm.slane %v3199, 1
      %v3205 = vmul.f32 %v3201, %v3194
      %v3206 = vmul.f32 %v3202, %v3196
      %v3207 = vmul.f32 %v3201, %v3195
      %v3208 = vmul.f32 %v3202, %v3197
      %3209 = vset.pattern.permute.xlu0 6
      %3210 = vperm.xlu0 %3209, %v2976
      %v3211 = vpop.permute.xlu0 %3210
      %3213 = vset.pattern.permute.xlu0 6
      %3214 = vperm.xlu0 %3213, %v2977
      %v3215 = vpop.permute.xlu0 %3214
      %v3217 = vmul.f32 %v3211, %v3205
      %v3218 = vmul.f32 %v3211, %v3206
      %v3219 = vmul.f32 %v3215, %v3207
      %v3220 = vmul.f32 %v3215, %v3208
      %v3221 = vadd.f32 %v3182, %v3217
      %v3222 = vadd.f32 %v3183, %v3218
      %v3223 = vadd.f32 %v3184, %v3219
      %v3224 = vadd.f32 %v3185, %v3220
      %3225 = vrot.lane.b32.xlu0 %v2678, 112
      %v3226 = vpop.permute.xlu0 %3225
      %3227 = vrot.lane.b32.xlu0 %v2680, 112
      %v3228 = vpop.permute.xlu0 %3227
      %3229 = vrot.lane.b32.xlu0 %v2679, 112
      %v3230 = vpop.permute.xlu0 %3229
      %3231 = vrot.lane.b32.xlu0 %v2681, 112
      %v3232 = vpop.permute.xlu0 %3231
      %v3233 = vsel %vm1830, %v3226, %v3230
      %v3234 = vsel %vm1830, %v3228, %v3232
      %v3235 = vsel %vm1830, %v3230, %v3226
      %v3236 = vsel %vm1830, %v3232, %v3228
      %s3237 = scalar_lea.vmem %s12, 7
      %v3238 = vld [vmem:[%s3237] ss:$8 sm:$0x3]
      %v3240 = vperm.slane %v3238, 0
      %v3241 = vperm.slane %v3238, 1
      %v3244 = vmul.f32 %v3240, %v3233
      %v3245 = vmul.f32 %v3241, %v3235
      %v3246 = vmul.f32 %v3240, %v3234
      %v3247 = vmul.f32 %v3241, %v3236
      %3248 = vset.pattern.permute.xlu0 7
      %3249 = vperm.xlu0 %3248, %v2976
      %v3250 = vpop.permute.xlu0 %3249
      %3252 = vset.pattern.permute.xlu0 7
      %3253 = vperm.xlu0 %3252, %v2977
      %v3254 = vpop.permute.xlu0 %3253
      %v3256 = vmul.f32 %v3250, %v3244
      %v3257 = vmul.f32 %v3250, %v3245
      %v3258 = vmul.f32 %v3254, %v3246
      %v3259 = vmul.f32 %v3254, %v3247
      %v3260 = vadd.f32 %v3221, %v3256
      %v3261 = vadd.f32 %v3222, %v3257
      %v3262 = vadd.f32 %v3223, %v3258
      %v3263 = vadd.f32 %v3224, %v3259
      %3264 = vrot.lane.b32.xlu0 %v2678, 111
      %v3265 = vpop.permute.xlu0 %3264
      %3266 = vrot.lane.b32.xlu0 %v2680, 111
      %v3267 = vpop.permute.xlu0 %3266
      %3268 = vrot.lane.b32.xlu0 %v2679, 111
      %v3269 = vpop.permute.xlu0 %3268
      %3270 = vrot.lane.b32.xlu0 %v2681, 111
      %v3271 = vpop.permute.xlu0 %3270
      %v3272 = vsel %vm1870, %v3265, %v3269
      %v3273 = vsel %vm1870, %v3267, %v3271
      %v3274 = vsel %vm1870, %v3269, %v3265
      %v3275 = vsel %vm1870, %v3271, %v3267
      %s3276 = scalar_lea.vmem %s12, 16
      %v3277 = vld [vmem:[%s3276] ss:$8 sm:$0x3]
      %v3279 = vperm.slane %v3277, 0
      %v3280 = vperm.slane %v3277, 1
      %v3283 = vmul.f32 %v3279, %v3272
      %v3284 = vmul.f32 %v3280, %v3274
      %v3285 = vmul.f32 %v3279, %v3273
      %v3286 = vmul.f32 %v3280, %v3275
      %3287 = vset.pattern.permute.xlu0 8
      %3288 = vperm.xlu0 %3287, %v2976
      %v3289 = vpop.permute.xlu0 %3288
      %3291 = vset.pattern.permute.xlu0 8
      %3292 = vperm.xlu0 %3291, %v2977
      %v3293 = vpop.permute.xlu0 %3292
      %v3295 = vmul.f32 %v3289, %v3283
      %v3296 = vmul.f32 %v3289, %v3284
      %v3297 = vmul.f32 %v3293, %v3285
      %v3298 = vmul.f32 %v3293, %v3286
      %v3299 = vadd.f32 %v3260, %v3295
      %v3300 = vadd.f32 %v3261, %v3296
      %v3301 = vadd.f32 %v3262, %v3297
      %v3302 = vadd.f32 %v3263, %v3298
      %3303 = vset.pattern.permute.xlu0 9
      %3304 = vperm.xlu0 %3303, %v2976
      %v3305 = vpop.permute.xlu0 %3304
      %3307 = vset.pattern.permute.xlu0 9
      %3308 = vperm.xlu0 %3307, %v2977
      %v3309 = vpop.permute.xlu0 %3308
      %v3311 = vadd.f32 %v3299, %v3305
      %v3312 = vadd.f32 %v3300, %v3305
      %v3313 = vadd.f32 %v3301, %v3309
      %v3314 = vadd.f32 %v3302, %v3309
      %v3315 = vadd.f32 %v3311, %v3312
      %3316 = vadd.xlane.f32.xlu0 %v3315
      %v3317 = vpop.xlane.xlu0 %3316
      %v3318 = vadd.f32 %v3313, %v3314
      %3319 = vadd.xlane.f32.xlu0 %v3318
      %v3320 = vpop.xlane.xlu0 %3319
      %v3321 = vmul.f32 %v3317, 0.00390625
      %v3322 = vmul.f32 %v3320, 0.00390625
      %v3323 = vld [vmem:[%s13] sm:$0xff]
      %v3324 = vld [vmem:[%s13 + $0x8] sm:$0xff]
      %v3325 = vmul.f32 %v3323, %v3321
      %v3326 = vmul.f32 %v3324, %v3322
      %vm3327 = vcmask 15360
      %v3328 = vsel %vm3327, %v3325, 0.0
      %v3329 = vsel %vm3327, %v3326, 0.0
      %v3330 = vadd.f32 %v3328, %v3329
      %v3331 = vrot.slane %v3330, 4
      %v3332 = vadd.f32 %v3330, %v3331
      %v3333 = vrot.slane %v3332, 2
      %v3334 = vadd.f32 %v3332, %v3333
      %v3335 = vrot.slane %v3334, 1
      %v3336 = vadd.f32 %v3334, %v3335
      %v3337 = vmax.f32 %v3336, 0.0
      %v3338 = vld [vmem:[%s14] sm:$0xff]
      %v3339 = vld [vmem:[%s14 + $0x8] sm:$0xff]
      %v3340 = vmul.f32 %v3338, %v3337
      %v3341 = vmul.f32 %v3339, %v3337
      %v3342 = vsel %vm3327, %v3340, 0.0
      %3343 = vadd.xlane.f32.xlu0 %v3342
      %v3344 = vpop.xlane.xlu0 %3343
      %v3345 = vsel %vm3327, %v3341, 0.0
      %3346 = vadd.xlane.f32.xlu0 %v3345
      %v3347 = vpop.xlane.xlu0 %3346
      %v3348 = vxor.u32 %v3344, 2147483648
      %v3349 = vxor.u32 %v3347, 2147483648
      %v3350 = vmul.f32 %v3348, 1.442695
      %v3351 = vpow.pop %v3350
      %v3352 = vmul.f32 %v3349, 1.442695
      %v3353 = vpow.pop %v3352
      %v3354 = vadd.f32 %v3351, 1.0
      %v3355 = vadd.f32 %v3353, 1.0
      %v3356 = vrcp.pop %v3354
      %v3357 = vmul.f32 %v3354, %v3356
      %v3358 = vsub.f32 1.0, %v3357
      %v3359 = vmul.f32 %v3356, %v3358
      %v3360 = vadd.f32 %v3356, %v3359
      %vm3361 = vweird.f32 %v3354
      %vm3362 = vweird.f32 %v3356
      %vm3363 = vmor %vm3361, %vm3362
      %v3364 = vsel %vm3363, %v3356, %v3360
      %v3365 = vand.u32 2147483647, %v3354
      %vm3366 = vcmp.eq.f32.partialorder %v3365, 8.507059e+37
      %v3367 = vand.u32 %v3354, 2147483648
      %v3368 = vor.u32 1.1754944e-38, %v3367
      %v3369 = vsel %vm3366, %v3368, %v3364
      %v3370 = vmul.f32 1.0, %v3369
      %v3371 = vrcp.pop %v3355
      %v3372 = vmul.f32 %v3355, %v3371
      %v3373 = vsub.f32 1.0, %v3372
      %v3374 = vmul.f32 %v3371, %v3373
      %v3375 = vadd.f32 %v3371, %v3374
      %vm3376 = vweird.f32 %v3355
      %vm3377 = vweird.f32 %v3371
      %vm3378 = vmor %vm3376, %vm3377
      %v3379 = vsel %vm3378, %v3371, %v3375
      %v3380 = vand.u32 2147483647, %v3355
      %vm3381 = vcmp.eq.f32.partialorder %v3380, 8.507059e+37
      %v3382 = vand.u32 %v3355, 2147483648
      %v3383 = vor.u32 1.1754944e-38, %v3382
      %v3384 = vsel %vm3381, %v3383, %v3379
      %v3385 = vmul.f32 1.0, %v3384
      %v3386 = vmul.f32 %v3311, %v3370
      %v3387 = vmul.f32 %v3312, %v3370
      %v3388 = vmul.f32 %v3313, %v3385
      %v3389 = vmul.f32 %v3314, %v3385
      %v3390 = vxor.u32 %v3386, 2147483648
      %v3391 = vxor.u32 %v3387, 2147483648
      %v3392 = vxor.u32 %v3388, 2147483648
      %v3393 = vxor.u32 %v3389, 2147483648
      %v3394 = vmul.f32 %v3390, 1.442695
      %v3395 = vpow.pop %v3394
      %v3396 = vmul.f32 %v3391, 1.442695
      %v3397 = vpow.pop %v3396
      %v3398 = vmul.f32 %v3392, 1.442695
      %v3399 = vpow.pop %v3398
      %v3400 = vmul.f32 %v3393, 1.442695
      %v3401 = vpow.pop %v3400
      %v3402 = vadd.f32 %v3395, 1.0
      %v3403 = vadd.f32 %v3397, 1.0
      %v3404 = vadd.f32 %v3399, 1.0
      %v3405 = vadd.f32 %v3401, 1.0
      %v3406 = vrcp.pop %v3402
      %v3407 = vmul.f32 %v3402, %v3406
      %v3408 = vsub.f32 1.0, %v3407
      %v3409 = vmul.f32 %v3406, %v3408
      %v3410 = vadd.f32 %v3406, %v3409
      %vm3411 = vweird.f32 %v3402
      %vm3412 = vweird.f32 %v3406
      %vm3413 = vmor %vm3411, %vm3412
      %v3414 = vsel %vm3413, %v3406, %v3410
      %v3415 = vand.u32 2147483647, %v3402
      %vm3416 = vcmp.eq.f32.partialorder %v3415, 8.507059e+37
      %v3417 = vand.u32 %v3402, 2147483648
      %v3418 = vor.u32 1.1754944e-38, %v3417
      %v3419 = vsel %vm3416, %v3418, %v3414
      %v3420 = vmul.f32 1.0, %v3419
      %v3421 = vrcp.pop %v3403
      %v3422 = vmul.f32 %v3403, %v3421
      %v3423 = vsub.f32 1.0, %v3422
      %v3424 = vmul.f32 %v3421, %v3423
      %v3425 = vadd.f32 %v3421, %v3424
      %vm3426 = vweird.f32 %v3403
      %vm3427 = vweird.f32 %v3421
      %vm3428 = vmor %vm3426, %vm3427
      %v3429 = vsel %vm3428, %v3421, %v3425
      %v3430 = vand.u32 2147483647, %v3403
      %vm3431 = vcmp.eq.f32.partialorder %v3430, 8.507059e+37
      %v3432 = vand.u32 %v3403, 2147483648
      %v3433 = vor.u32 1.1754944e-38, %v3432
      %v3434 = vsel %vm3431, %v3433, %v3429
      %v3435 = vmul.f32 1.0, %v3434
      %v3436 = vrcp.pop %v3404
      %v3437 = vmul.f32 %v3404, %v3436
      %v3438 = vsub.f32 1.0, %v3437
      %v3439 = vmul.f32 %v3436, %v3438
      %v3440 = vadd.f32 %v3436, %v3439
      %vm3441 = vweird.f32 %v3404
      %vm3442 = vweird.f32 %v3436
      %vm3443 = vmor %vm3441, %vm3442
      %v3444 = vsel %vm3443, %v3436, %v3440
      %v3445 = vand.u32 2147483647, %v3404
      %vm3446 = vcmp.eq.f32.partialorder %v3445, 8.507059e+37
      %v3447 = vand.u32 %v3404, 2147483648
      %v3448 = vor.u32 1.1754944e-38, %v3447
      %v3449 = vsel %vm3446, %v3448, %v3444
      %v3450 = vmul.f32 1.0, %v3449
      %v3451 = vrcp.pop %v3405
      %v3452 = vmul.f32 %v3405, %v3451
      %v3453 = vsub.f32 1.0, %v3452
      %v3454 = vmul.f32 %v3451, %v3453
      %v3455 = vadd.f32 %v3451, %v3454
      %vm3456 = vweird.f32 %v3405
      %vm3457 = vweird.f32 %v3451
      %vm3458 = vmor %vm3456, %vm3457
      %v3459 = vsel %vm3458, %v3451, %v3455
      %v3460 = vand.u32 2147483647, %v3405
      %vm3461 = vcmp.eq.f32.partialorder %v3460, 8.507059e+37
      %v3462 = vand.u32 %v3405, 2147483648
      %v3463 = vor.u32 1.1754944e-38, %v3462
      %v3464 = vsel %vm3461, %v3463, %v3459
      %v3465 = vmul.f32 1.0, %v3464
      %v3466 = vadd.f32 %v496, %v3420
      %v3467 = vadd.f32 %v497, %v3435
      %v3468 = vadd.f32 %v498, %v3450
      %v3469 = vadd.f32 %v499, %v3465
      %3470 = vst [vmem:[%s494] sm:$0xff] %v3466
      %3471 = vst [vmem:[%s494 + $0x8] sm:$0xff] %v3467
      %3472 = vst [vmem:[%s494 + $0x10] sm:$0xff] %v3468
      %3473 = vst [vmem:[%s494 + $0x18] sm:$0xff] %v3469
      %p3474 = scmp.lt.s32.totalorder %s26, 1
      %s3475 = scalar_select %p3474, %s26, 1
      %s3476 = smul.addr %s3475, 4
      %s3477 = smul.addr %s3476, 8
      %s3478 = scalar_lea.vmem %s15, %s3477
      // Predicated region
      $region81: #{luky_forward.1} parent=79 // pred_check
        %p3479 = pneg %p364
      $region82: #{luky_forward.1} parent=79 // pred_check_branch
        %3481 = sbr.rel (%p3479) target = $region84
      $region83: #{luky_forward.1} parent=79 // pred_region
        _
      $region84: #{luky_forward.1} parent=79 // pred_fallthru
        _
    $region80: #{luky_forward.1} parent=5 // pred_fallthru
      _
    %p3482 = scmp.le.s32.totalorder 2, %s21
    // Predicated region
    $region85: #{luky_forward.1} parent=5 // pred_check
      %p3483 = pneg %p3482
    $region86: #{luky_forward.1} parent=5 // pred_check_branch
      %3485 = sbr.rel (%p3483) target = $region88
    $region87: #{luky_forward.1} parent=5 // pred_region
      %s3486 = ssub.s32 %s21, 2
      // Predicated region
      $region89: #{luky_forward.1} parent=87 // pred_check
        %p3487 = pneg %p370
      $region90: #{luky_forward.1} parent=87 // pred_check_branch
        %3489 = sbr.rel (%p3487) target = $region92
      $region91: #{luky_forward.1} parent=87 // pred_region
        %p3490 = scmp.lt.s32.totalorder %s27, 1
        %s3491 = scalar_select %p3490, %s27, 1
        %s3492 = smul.addr %s3491, 4
        %s3493 = smul.addr %s3492, 8
        %s3494 = scalar_lea.vmem %s15, %s3493
      $region92: #{luky_forward.1} parent=87 // pred_fallthru
        _
    $region88: #{luky_forward.1} parent=5 // pred_fallthru
      _
  $region6: #{luky_forward.1} parent=0 // loop_footer
    %s25 = sadd.s32 1, %s21
  $region7: #{luky_forward.1} parent=0 // loop_footer_branch
    %20 = sbr.rel target = $region3
  $region8: #{luky_forward.1} parent=0 // loop_exit
    _

</llo_original>
